<compile_context>
chip_gen: v5e
topology: v5e:2x2
jax: 0.10.0
libtpu: 0.0.40
codegen_flags: <defaults>
</compile_context>

<pallas_src>
import functools

import jax
import jax.numpy as jnp
import numpy as np
from jax import lax
from jax.experimental import pallas as pl
from jax.experimental.pallas import tpu as pltpu

_LANE = 128


def _round_up(x, m):
    return (x + m - 1) // m * m


def _downsample_kernel(x_ref, w1_ref, b1_ref, w2_ref, b2_ref,
                       conv_ref, pool_ref, *, H, W, C_in_p, C_out_p):
    # x_ref: (1, H+2, W+2, C_in_p) zero-padded NHWC tile (compute dtype).
    cdt = x_ref.dtype

    # ---- conv1 (3x3, padding=1) + ReLU: single im2col MXU matmul ----
    # Patch column order (dy major, dx minor, channel fastest) matches the
    # wrapper's reshape of the HWIO weights to (9*C_in_p, C_out_p).
    cols1 = [x_ref[0, dy:dy + H, dx:dx + W, :].reshape(H * W, C_in_p)
             for dy in range(3) for dx in range(3)]
    patches1 = jnp.concatenate(cols1, axis=1)                # (H*W, 9*C_in_p)
    h1 = jnp.dot(patches1, w1_ref[...],
                 preferred_element_type=jnp.float32)         # (H*W, C_out_p)
    h1 = jnp.maximum(h1 + b1_ref[...], 0.0)                  # f32 bias + ReLU

    # ---- SAME padding for conv2, built in registers (no scratch) ----
    h1c = h1.astype(cdt).reshape(H, W, C_out_p)
    zrow = jnp.zeros((1, W + 2, C_out_p), cdt)
    zcol = jnp.zeros((H, 1, C_out_p), cdt)
    h1p = jnp.concatenate(
        [zrow, jnp.concatenate([zcol, h1c, zcol], axis=1), zrow],
        axis=0)                                              # (H+2, W+2, C)

    # ---- conv2 (3x3, padding=1) + ReLU: single im2col MXU matmul ----
    cols2 = [h1p[dy:dy + H, dx:dx + W, :].reshape(H * W, C_out_p)
             for dy in range(3) for dx in range(3)]
    patches2 = jnp.concatenate(cols2, axis=1)                # (H*W, 9*C_out_p)
    h2 = jnp.dot(patches2, w2_ref[...],
                 preferred_element_type=jnp.float32)         # (H*W, C_out_p)
    h2 = jnp.maximum(h2 + b2_ref[...], 0.0)

    # Lane-dense (last dim = C_out_p = multiple of 128) unmasked block store.
    conv_ref[0] = h2.reshape(H, W, C_out_p).astype(conv_ref.dtype)

    # ---- 2x2 max pool, stride 2 ----
    # H-pairs: free leading-dim split + elementwise max.
    hmax = jnp.max(h2.reshape(H // 2, 2, W, C_out_p), axis=1)   # (H/2, W, C)
    # W-pairs: static contiguous 2-wide slices reduced in registers, assembled
    # once, then written with a single lane-dense block store.
    wcols = [jnp.max(hmax[:, 2 * j:2 * j + 2, :], axis=1, keepdims=True)
             for j in range(W // 2)]
    pool_ref[0] = jnp.concatenate(wcols, axis=1).astype(pool_ref.dtype)


def downsample_forward(x_nchw, w1, b1, w2, b2, *, compute_dtype=jnp.float32):
    """Pallas implementation of Downsample.forward.  NCHW in / NCHW out.

    compute_dtype controls the MXU input dtype (f32 or bf16); accumulation,
    bias and ReLU are always f32.
    """
    B, C_in, H, W = x_nchw.shape
    C_out = w1.shape[-1]
    assert H % 2 == 0 and W % 2 == 0

    C_in_p = _round_up(C_in, _LANE)
    C_out_p = _round_up(C_out, _LANE)

    # NHWC, spatial halo pad, channel pad to a lane-dense multiple of 128.
    x = jnp.transpose(x_nchw, (0, 2, 3, 1)).astype(jnp.float32)
    x = jnp.pad(x, ((0, 0), (1, 1), (1, 1), (0, C_in_p - C_in)))
    x = x.astype(compute_dtype)

    # HWIO weights -> channel-padded im2col matrices (9*Cin_p, Cout_p).
    w1_p = jnp.zeros((3, 3, C_in_p, C_out_p), jnp.float32)
    w1_p = w1_p.at[:, :, :C_in, :C_out].set(w1.astype(jnp.float32))
    w2_p = jnp.zeros((3, 3, C_out_p, C_out_p), jnp.float32)
    w2_p = w2_p.at[:, :, :C_out, :C_out].set(w2.astype(jnp.float32))
    w1_mat = w1_p.reshape(9 * C_in_p, C_out_p).astype(compute_dtype)
    w2_mat = w2_p.reshape(9 * C_out_p, C_out_p).astype(compute_dtype)

    b1_p = jnp.zeros((1, C_out_p), jnp.float32).at[0, :C_out].set(
        b1.astype(jnp.float32))
    b2_p = jnp.zeros((1, C_out_p), jnp.float32).at[0, :C_out].set(
        b2.astype(jnp.float32))

    kernel = functools.partial(_downsample_kernel,
                               H=H, W=W, C_in_p=C_in_p, C_out_p=C_out_p)

    conv_nhwc, pool_nhwc = pl.pallas_call(
        kernel,
        out_shape=(
            jax.ShapeDtypeStruct((B, H, W, C_out_p), jnp.float32),
            jax.ShapeDtypeStruct((B, H // 2, W // 2, C_out_p), jnp.float32),
        ),
        grid_spec=pltpu.PrefetchScalarGridSpec(
            num_scalar_prefetch=0,
            grid=(B,),
            in_specs=[
                pl.BlockSpec((1, H + 2, W + 2, C_in_p), lambda b: (b, 0, 0, 0)),
                pl.BlockSpec((9 * C_in_p, C_out_p), lambda b: (0, 0)),
                pl.BlockSpec((1, C_out_p), lambda b: (0, 0)),
                pl.BlockSpec((9 * C_out_p, C_out_p), lambda b: (0, 0)),
                pl.BlockSpec((1, C_out_p), lambda b: (0, 0)),
            ],
            out_specs=[
                pl.BlockSpec((1, H, W, C_out_p), lambda b: (b, 0, 0, 0)),
                pl.BlockSpec((1, H // 2, W // 2, C_out_p),
                             lambda b: (b, 0, 0, 0)),
            ],
        ),
        compiler_params=pltpu.CompilerParams(
            dimension_semantics=("parallel",),
            vmem_limit_bytes=32 * 1024 * 1024),
    )(x, w1_mat, b1_p, w2_mat, b2_p)

    # Drop channel padding, back to NCHW.
    conv = jnp.transpose(conv_nhwc[..., :C_out], (0, 3, 1, 2))
    pool = jnp.transpose(pool_nhwc[..., :C_out], (0, 3, 1, 2))
    return conv, pool


def _reference_forward(x_nchw, w1, b1, w2, b2):
    """Pure-JAX reference (NHWC convs + reduce_window), returns NCHW."""
    x = jnp.transpose(x_nchw, (0, 2, 3, 1))
    dn = ("NHWC", "HWIO", "NHWC")
    y = lax.conv_general_dilated(x, w1, (1, 1), "SAME", dimension_numbers=dn,
                                 precision=lax.Precision.HIGHEST) + b1
    y = jnp.maximum(y, 0.0)
    y = lax.conv_general_dilated(y, w2, (1, 1), "SAME", dimension_numbers=dn,
                                 precision=lax.Precision.HIGHEST) + b2
    y = jnp.maximum(y, 0.0)
    p = lax.reduce_window(y, -jnp.inf, lax.max, (1, 2, 2, 1), (1, 2, 2, 1),
                          "VALID")
    return jnp.transpose(y, (0, 3, 1, 2)), jnp.transpose(p, (0, 3, 1, 2))


if __name__ == "__main__":
    B, C_in, C_out, H, W = 2, 4, 8, 16, 16

    key = jax.random.PRNGKey(0)
    kx, k1, k2, k3, k4 = jax.random.split(key, 5)

    x = jax.random.normal(kx, (B, C_in, H, W), dtype=jnp.float32)
    # Deterministic synthetic parameters (HWIO layout for conv weights).
    w1 = 0.1 * jax.random.normal(k1, (3, 3, C_in, C_out), dtype=jnp.float32)
    b1 = 0.1 * jax.random.normal(k2, (C_out,), dtype=jnp.float32)
    w2 = 0.1 * jax.random.normal(k3, (3, 3, C_out, C_out), dtype=jnp.float32)
    b2 = 0.1 * jax.random.normal(k4, (C_out,), dtype=jnp.float32)

    conv_gold, pool_gold = _reference_forward(x, w1, b1, w2, b2)

    # --- f32-fed MXU path ---
    conv, pool = downsample_forward(x, w1, b1, w2, b2,
                                    compute_dtype=jnp.float32)
    jax.block_until_ready(conv)
    jax.block_until_ready(pool)
    np.testing.assert_allclose(np.asarray(conv), np.asarray(conv_gold),
                               rtol=1e-2, atol=1e-2)
    np.testing.assert_allclose(np.asarray(pool), np.asarray(pool_gold),
                               rtol=1e-2, atol=1e-2)

    # --- bf16-fed MXU path (f32 accumulation): halves HBM DMA at scale ---
    conv_bf, pool_bf = downsample_forward(x, w1, b1, w2, b2,
                                          compute_dtype=jnp.bfloat16)
    jax.block_until_ready(conv_bf)
    jax.block_until_ready(pool_bf)
    np.testing.assert_allclose(np.asarray(conv_bf), np.asarray(conv_gold),
                               rtol=5e-2, atol=5e-2)
    np.testing.assert_allclose(np.asarray(pool_bf), np.asarray(pool_gold),
                               rtol=5e-2, atol=5e-2)

    print("KERNEL_OK")
</pallas_src>

<mosaic_0001>
module attributes {stable_mosaic.version = 11 : i64} {
  func.func @_downsample_kernel(%arg0: i32, %arg1: memref<1x18x18x128xf32, #tpu.memory_space<vmem>>, %arg2: memref<1152x128xf32, #tpu.memory_space<vmem>>, %arg3: memref<1x128xf32, #tpu.memory_space<vmem>>, %arg4: memref<1152x128xf32, #tpu.memory_space<vmem>>, %arg5: memref<1x128xf32, #tpu.memory_space<vmem>>, %arg6: memref<1x16x16x128xf32, #tpu.memory_space<vmem>>, %arg7: memref<1x8x8x128xf32, #tpu.memory_space<vmem>>) attributes {dimension_semantics = [#tpu.dimension_semantics<parallel>], iteration_bounds = array<i64: 2>, scalar_prefetch = 0 : i64, scratch_operands = 0 : i64, tpu.core_type = #tpu.core_type<tc>, window_params = [{transform_indices = @transform_0, window_bounds = array<i64: 1, 18, 18, 128>}, {pipeline_mode = #tpu.pipeline_mode<synchronous>, transform_indices = @transform_1, window_bounds = array<i64: 1152, 128>}, {pipeline_mode = #tpu.pipeline_mode<synchronous>, transform_indices = @transform_2, window_bounds = array<i64: 1, 128>}, {pipeline_mode = #tpu.pipeline_mode<synchronous>, transform_indices = @transform_3, window_bounds = array<i64: 1152, 128>}, {pipeline_mode = #tpu.pipeline_mode<synchronous>, transform_indices = @transform_4, window_bounds = array<i64: 1, 128>}, {transform_indices = @transform_5, window_bounds = array<i64: 1, 16, 16, 128>}, {transform_indices = @transform_6, window_bounds = array<i64: 1, 8, 8, 128>}]} {
    %c0 = arith.constant 0 : index
    %c0_0 = arith.constant 0 : index
    %c0_1 = arith.constant 0 : index
    %c0_2 = arith.constant 0 : index
    %0 = vector.load %arg1[%c0, %c0_0, %c0_1, %c0_2] : memref<1x18x18x128xf32, #tpu.memory_space<vmem>>, vector<1x16x16x128xf32>
    %1 = vector.shape_cast %0 : vector<1x16x16x128xf32> to vector<16x16x128xf32>
    %2 = vector.shape_cast %1 : vector<16x16x128xf32> to vector<256x128xf32>
    %c0_3 = arith.constant 0 : index
    %c0_4 = arith.constant 0 : index
    %c1 = arith.constant 1 : index
    %c0_5 = arith.constant 0 : index
    %3 = vector.load %arg1[%c0_3, %c0_4, %c1, %c0_5] : memref<1x18x18x128xf32, #tpu.memory_space<vmem>>, vector<1x16x16x128xf32>
    %4 = vector.shape_cast %3 : vector<1x16x16x128xf32> to vector<16x16x128xf32>
    %5 = vector.shape_cast %4 : vector<16x16x128xf32> to vector<256x128xf32>
    %c0_6 = arith.constant 0 : index
    %c0_7 = arith.constant 0 : index
    %c2 = arith.constant 2 : index
    %c0_8 = arith.constant 0 : index
    %6 = vector.load %arg1[%c0_6, %c0_7, %c2, %c0_8] : memref<1x18x18x128xf32, #tpu.memory_space<vmem>>, vector<1x16x16x128xf32>
    %7 = vector.shape_cast %6 : vector<1x16x16x128xf32> to vector<16x16x128xf32>
    %8 = vector.shape_cast %7 : vector<16x16x128xf32> to vector<256x128xf32>
    %c0_9 = arith.constant 0 : index
    %c1_10 = arith.constant 1 : index
    %c0_11 = arith.constant 0 : index
    %c0_12 = arith.constant 0 : index
    %9 = vector.load %arg1[%c0_9, %c1_10, %c0_11, %c0_12] : memref<1x18x18x128xf32, #tpu.memory_space<vmem>>, vector<1x16x16x128xf32>
    %10 = vector.shape_cast %9 : vector<1x16x16x128xf32> to vector<16x16x128xf32>
    %11 = vector.shape_cast %10 : vector<16x16x128xf32> to vector<256x128xf32>
    %c0_13 = arith.constant 0 : index
    %c1_14 = arith.constant 1 : index
    %c1_15 = arith.constant 1 : index
    %c0_16 = arith.constant 0 : index
    %12 = vector.load %arg1[%c0_13, %c1_14, %c1_15, %c0_16] : memref<1x18x18x128xf32, #tpu.memory_space<vmem>>, vector<1x16x16x128xf32>
    %13 = vector.shape_cast %12 : vector<1x16x16x128xf32> to vector<16x16x128xf32>
    %14 = vector.shape_cast %13 : vector<16x16x128xf32> to vector<256x128xf32>
    %c0_17 = arith.constant 0 : index
    %c1_18 = arith.constant 1 : index
    %c2_19 = arith.constant 2 : index
    %c0_20 = arith.constant 0 : index
    %15 = vector.load %arg1[%c0_17, %c1_18, %c2_19, %c0_20] : memref<1x18x18x128xf32, #tpu.memory_space<vmem>>, vector<1x16x16x128xf32>
    %16 = vector.shape_cast %15 : vector<1x16x16x128xf32> to vector<16x16x128xf32>
    %17 = vector.shape_cast %16 : vector<16x16x128xf32> to vector<256x128xf32>
    %c0_21 = arith.constant 0 : index
    %c2_22 = arith.constant 2 : index
    %c0_23 = arith.constant 0 : index
    %c0_24 = arith.constant 0 : index
    %18 = vector.load %arg1[%c0_21, %c2_22, %c0_23, %c0_24] : memref<1x18x18x128xf32, #tpu.memory_space<vmem>>, vector<1x16x16x128xf32>
    %19 = vector.shape_cast %18 : vector<1x16x16x128xf32> to vector<16x16x128xf32>
    %20 = vector.shape_cast %19 : vector<16x16x128xf32> to vector<256x128xf32>
    %c0_25 = arith.constant 0 : index
    %c2_26 = arith.constant 2 : index
    %c1_27 = arith.constant 1 : index
    %c0_28 = arith.constant 0 : index
    %21 = vector.load %arg1[%c0_25, %c2_26, %c1_27, %c0_28] : memref<1x18x18x128xf32, #tpu.memory_space<vmem>>, vector<1x16x16x128xf32>
    %22 = vector.shape_cast %21 : vector<1x16x16x128xf32> to vector<16x16x128xf32>
    %23 = vector.shape_cast %22 : vector<16x16x128xf32> to vector<256x128xf32>
    %c0_29 = arith.constant 0 : index
    %c2_30 = arith.constant 2 : index
    %c2_31 = arith.constant 2 : index
    %c0_32 = arith.constant 0 : index
    %24 = vector.load %arg1[%c0_29, %c2_30, %c2_31, %c0_32] : memref<1x18x18x128xf32, #tpu.memory_space<vmem>>, vector<1x16x16x128xf32>
    %25 = vector.shape_cast %24 : vector<1x16x16x128xf32> to vector<16x16x128xf32>
    %26 = vector.shape_cast %25 : vector<16x16x128xf32> to vector<256x128xf32>
    %27 = tpu.concatenate %2, %5, %8, %11, %14, %17, %20, %23, %26 in 1 : vector<256x128xf32>, vector<256x128xf32>, vector<256x128xf32>, vector<256x128xf32>, vector<256x128xf32>, vector<256x128xf32>, vector<256x128xf32>, vector<256x128xf32>, vector<256x128xf32> -> vector<256x1152xf32>
    %c0_33 = arith.constant 0 : index
    %c0_34 = arith.constant 0 : index
    %28 = vector.load %arg2[%c0_33, %c0_34] : memref<1152x128xf32, #tpu.memory_space<vmem>>, vector<1152x128xf32>
    %cst = arith.constant dense<0.000000e+00> : vector<256x128xf32>
    %29 = tpu.matmul %27, %28, %cst {dimension_numbers = #tpu.dot_dimension_numbers<[1], [0], [0], [1], [0, 0, 1, 1], [], []>} : vector<256x1152xf32>, vector<1152x128xf32>, vector<256x128xf32> -> vector<256x128xf32>
    %c0_35 = arith.constant 0 : index
    %c0_36 = arith.constant 0 : index
    %30 = vector.load %arg3[%c0_35, %c0_36] : memref<1x128xf32, #tpu.memory_space<vmem>>, vector<1x128xf32>
    %31 = vector.broadcast %30 : vector<1x128xf32> to vector<256x128xf32>
    %32 = arith.addf %29, %31 : vector<256x128xf32>
    %cst_37 = arith.constant 0.000000e+00 : f32
    %33 = vector.broadcast %cst_37 : f32 to vector<256x128xf32>
    %34 = arith.maximumf %32, %33 : vector<256x128xf32>
    %35 = vector.shape_cast %34 : vector<256x128xf32> to vector<16x16x128xf32>
    %cst_38 = arith.constant 0.000000e+00 : f32
    %36 = vector.broadcast %cst_38 : f32 to vector<1x18x128xf32>
    %cst_39 = arith.constant 0.000000e+00 : f32
    %37 = vector.broadcast %cst_39 : f32 to vector<16x1x128xf32>
    %38 = tpu.concatenate %37, %35, %37 in 1 : vector<16x1x128xf32>, vector<16x16x128xf32>, vector<16x1x128xf32> -> vector<16x18x128xf32>
    %39 = tpu.concatenate %36, %38, %36 in 0 : vector<1x18x128xf32>, vector<16x18x128xf32>, vector<1x18x128xf32> -> vector<18x18x128xf32>
    %40 = vector.extract_strided_slice %39 {offsets = [0, 0, 0], sizes = [16, 16, 128], strides = [1, 1, 1]} : vector<18x18x128xf32> to vector<16x16x128xf32>
    %41 = vector.shape_cast %40 : vector<16x16x128xf32> to vector<256x128xf32>
    %42 = vector.extract_strided_slice %39 {offsets = [0, 1, 0], sizes = [16, 16, 128], strides = [1, 1, 1]} : vector<18x18x128xf32> to vector<16x16x128xf32>
    %43 = vector.shape_cast %42 : vector<16x16x128xf32> to vector<256x128xf32>
    %44 = vector.extract_strided_slice %39 {offsets = [0, 2, 0], sizes = [16, 16, 128], strides = [1, 1, 1]} : vector<18x18x128xf32> to vector<16x16x128xf32>
    %45 = vector.shape_cast %44 : vector<16x16x128xf32> to vector<256x128xf32>
    %46 = vector.extract_strided_slice %39 {offsets = [1, 0, 0], sizes = [16, 16, 128], strides = [1, 1, 1]} : vector<18x18x128xf32> to vector<16x16x128xf32>
    %47 = vector.shape_cast %46 : vector<16x16x128xf32> to vector<256x128xf32>
    %48 = vector.extract_strided_slice %39 {offsets = [1, 1, 0], sizes = [16, 16, 128], strides = [1, 1, 1]} : vector<18x18x128xf32> to vector<16x16x128xf32>
    %49 = vector.shape_cast %48 : vector<16x16x128xf32> to vector<256x128xf32>
    %50 = vector.extract_strided_slice %39 {offsets = [1, 2, 0], sizes = [16, 16, 128], strides = [1, 1, 1]} : vector<18x18x128xf32> to vector<16x16x128xf32>
    %51 = vector.shape_cast %50 : vector<16x16x128xf32> to vector<256x128xf32>
    %52 = vector.extract_strided_slice %39 {offsets = [2, 0, 0], sizes = [16, 16, 128], strides = [1, 1, 1]} : vector<18x18x128xf32> to vector<16x16x128xf32>
    %53 = vector.shape_cast %52 : vector<16x16x128xf32> to vector<256x128xf32>
    %54 = vector.extract_strided_slice %39 {offsets = [2, 1, 0], sizes = [16, 16, 128], strides = [1, 1, 1]} : vector<18x18x128xf32> to vector<16x16x128xf32>
    %55 = vector.shape_cast %54 : vector<16x16x128xf32> to vector<256x128xf32>
    %56 = vector.extract_strided_slice %39 {offsets = [2, 2, 0], sizes = [16, 16, 128], strides = [1, 1, 1]} : vector<18x18x128xf32> to vector<16x16x128xf32>
    %57 = vector.shape_cast %56 : vector<16x16x128xf32> to vector<256x128xf32>
    %58 = tpu.concatenate %41, %43, %45, %47, %49, %51, %53, %55, %57 in 1 : vector<256x128xf32>, vector<256x128xf32>, vector<256x128xf32>, vector<256x128xf32>, vector<256x128xf32>, vector<256x128xf32>, vector<256x128xf32>, vector<256x128xf32>, vector<256x128xf32> -> vector<256x1152xf32>
    %c0_40 = arith.constant 0 : index
    %c0_41 = arith.constant 0 : index
    %59 = vector.load %arg4[%c0_40, %c0_41] : memref<1152x128xf32, #tpu.memory_space<vmem>>, vector<1152x128xf32>
    %cst_42 = arith.constant dense<0.000000e+00> : vector<256x128xf32>
    %60 = tpu.matmul %58, %59, %cst_42 {dimension_numbers = #tpu.dot_dimension_numbers<[1], [0], [0], [1], [0, 0, 1, 1], [], []>} : vector<256x1152xf32>, vector<1152x128xf32>, vector<256x128xf32> -> vector<256x128xf32>
    %c0_43 = arith.constant 0 : index
    %c0_44 = arith.constant 0 : index
    %61 = vector.load %arg5[%c0_43, %c0_44] : memref<1x128xf32, #tpu.memory_space<vmem>>, vector<1x128xf32>
    %62 = vector.broadcast %61 : vector<1x128xf32> to vector<256x128xf32>
    %63 = arith.addf %60, %62 : vector<256x128xf32>
    %cst_45 = arith.constant 0.000000e+00 : f32
    %64 = vector.broadcast %cst_45 : f32 to vector<256x128xf32>
    %65 = arith.maximumf %63, %64 : vector<256x128xf32>
    %66 = vector.shape_cast %65 : vector<256x128xf32> to vector<16x16x128xf32>
    %c0_46 = arith.constant 0 : index
    %c0_47 = arith.constant 0 : index
    %c0_48 = arith.constant 0 : index
    %c0_49 = arith.constant 0 : index
    %67 = vector.load %arg6[%c0_46, %c0_47, %c0_48, %c0_49] : memref<1x16x16x128xf32, #tpu.memory_space<vmem>>, vector<1x16x16x128xf32>
    %68 = vector.shape_cast %67 : vector<1x16x16x128xf32> to vector<16x16x128xf32>
    %69 = vector.shape_cast %66 : vector<16x16x128xf32> to vector<1x16x16x128xf32>
    tpu.vector_store %arg6[%c0_46, %c0_47, %c0_48, %c0_49], %69 {strides = array<i32>} : memref<1x16x16x128xf32, #tpu.memory_space<vmem>>, vector<1x16x16x128xf32>,
    %70 = vector.shape_cast %65 : vector<256x128xf32> to vector<8x2x16x128xf32>
    %cst_50 = arith.constant dense<0xFF800000> : vector<8x16x128xf32>
    %71 = vector.multi_reduction <maximumf>, %70, %cst_50 [1] : vector<8x2x16x128xf32> to vector<8x16x128xf32>
    %72 = vector.extract_strided_slice %71 {offsets = [0, 0, 0], sizes = [8, 2, 128], strides = [1, 1, 1]} : vector<8x16x128xf32> to vector<8x2x128xf32>
    %cst_51 = arith.constant dense<0xFF800000> : vector<8x128xf32>
    %73 = vector.multi_reduction <maximumf>, %72, %cst_51 [1] : vector<8x2x128xf32> to vector<8x128xf32>
    %74 = vector.shape_cast %73 : vector<8x128xf32> to vector<8x1x128xf32>
    %75 = vector.extract_strided_slice %71 {offsets = [0, 2, 0], sizes = [8, 2, 128], strides = [1, 1, 1]} : vector<8x16x128xf32> to vector<8x2x128xf32>
    %cst_52 = arith.constant dense<0xFF800000> : vector<8x128xf32>
    %76 = vector.multi_reduction <maximumf>, %75, %cst_52 [1] : vector<8x2x128xf32> to vector<8x128xf32>
    %77 = vector.shape_cast %76 : vector<8x128xf32> to vector<8x1x128xf32>
    %78 = vector.extract_strided_slice %71 {offsets = [0, 4, 0], sizes = [8, 2, 128], strides = [1, 1, 1]} : vector<8x16x128xf32> to vector<8x2x128xf32>
    %cst_53 = arith.constant dense<0xFF800000> : vector<8x128xf32>
    %79 = vector.multi_reduction <maximumf>, %78, %cst_53 [1] : vector<8x2x128xf32> to vector<8x128xf32>
    %80 = vector.shape_cast %79 : vector<8x128xf32> to vector<8x1x128xf32>
    %81 = vector.extract_strided_slice %71 {offsets = [0, 6, 0], sizes = [8, 2, 128], strides = [1, 1, 1]} : vector<8x16x128xf32> to vector<8x2x128xf32>
    %cst_54 = arith.constant dense<0xFF800000> : vector<8x128xf32>
    %82 = vector.multi_reduction <maximumf>, %81, %cst_54 [1] : vector<8x2x128xf32> to vector<8x128xf32>
    %83 = vector.shape_cast %82 : vector<8x128xf32> to vector<8x1x128xf32>
    %84 = vector.extract_strided_slice %71 {offsets = [0, 8, 0], sizes = [8, 2, 128], strides = [1, 1, 1]} : vector<8x16x128xf32> to vector<8x2x128xf32>
    %cst_55 = arith.constant dense<0xFF800000> : vector<8x128xf32>
    %85 = vector.multi_reduction <maximumf>, %84, %cst_55 [1] : vector<8x2x128xf32> to vector<8x128xf32>
    %86 = vector.shape_cast %85 : vector<8x128xf32> to vector<8x1x128xf32>
    %87 = vector.extract_strided_slice %71 {offsets = [0, 10, 0], sizes = [8, 2, 128], strides = [1, 1, 1]} : vector<8x16x128xf32> to vector<8x2x128xf32>
    %cst_56 = arith.constant dense<0xFF800000> : vector<8x128xf32>
    %88 = vector.multi_reduction <maximumf>, %87, %cst_56 [1] : vector<8x2x128xf32> to vector<8x128xf32>
    %89 = vector.shape_cast %88 : vector<8x128xf32> to vector<8x1x128xf32>
    %90 = vector.extract_strided_slice %71 {offsets = [0, 12, 0], sizes = [8, 2, 128], strides = [1, 1, 1]} : vector<8x16x128xf32> to vector<8x2x128xf32>
    %cst_57 = arith.constant dense<0xFF800000> : vector<8x128xf32>
    %91 = vector.multi_reduction <maximumf>, %90, %cst_57 [1] : vector<8x2x128xf32> to vector<8x128xf32>
    %92 = vector.shape_cast %91 : vector<8x128xf32> to vector<8x1x128xf32>
    %93 = vector.extract_strided_slice %71 {offsets = [0, 14, 0], sizes = [8, 2, 128], strides = [1, 1, 1]} : vector<8x16x128xf32> to vector<8x2x128xf32>
    %cst_58 = arith.constant dense<0xFF800000> : vector<8x128xf32>
    %94 = vector.multi_reduction <maximumf>, %93, %cst_58 [1] : vector<8x2x128xf32> to vector<8x128xf32>
    %95 = vector.shape_cast %94 : vector<8x128xf32> to vector<8x1x128xf32>
    %96 = tpu.concatenate %74, %77, %80, %83, %86, %89, %92, %95 in 1 : vector<8x1x128xf32>, vector<8x1x128xf32>, vector<8x1x128xf32>, vector<8x1x128xf32>, vector<8x1x128xf32>, vector<8x1x128xf32>, vector<8x1x128xf32>, vector<8x1x128xf32> -> vector<8x8x128xf32>
    %c0_59 = arith.constant 0 : index
    %c0_60 = arith.constant 0 : index
    %c0_61 = arith.constant 0 : index
    %c0_62 = arith.constant 0 : index
    %97 = vector.load %arg7[%c0_59, %c0_60, %c0_61, %c0_62] : memref<1x8x8x128xf32, #tpu.memory_space<vmem>>, vector<1x8x8x128xf32>
    %98 = vector.shape_cast %97 : vector<1x8x8x128xf32> to vector<8x8x128xf32>
    %99 = vector.shape_cast %96 : vector<8x8x128xf32> to vector<1x8x8x128xf32>
    tpu.vector_store %arg7[%c0_59, %c0_60, %c0_61, %c0_62], %99 {strides = array<i32>} : memref<1x8x8x128xf32, #tpu.memory_space<vmem>>, vector<1x8x8x128xf32>,
    return
  }
  func.func @transform_0(%arg0: i32) -> (i32, i32, i32, i32) {
    %c0_i32 = arith.constant 0 : i32
    %c0_i32_0 = arith.constant 0 : i32
    %c0_i32_1 = arith.constant 0 : i32
    %c0_i32_2 = arith.constant 0 : i32
    return %arg0, %c0_i32, %c0_i32_0, %c0_i32_1 : i32, i32, i32, i32
  }
  func.func @transform_1(%arg0: i32) -> (i32, i32) {
    %c0_i32 = arith.constant 0 : i32
    %c0_i32_0 = arith.constant 0 : i32
    %c0_i32_1 = arith.constant 0 : i32
    return %c0_i32, %c0_i32_0 : i32, i32
  }
  func.func @transform_2(%arg0: i32) -> (i32, i32) {
    %c0_i32 = arith.constant 0 : i32
    %c0_i32_0 = arith.constant 0 : i32
    %c0_i32_1 = arith.constant 0 : i32
    return %c0_i32, %c0_i32_0 : i32, i32
  }
  func.func @transform_3(%arg0: i32) -> (i32, i32) {
    %c0_i32 = arith.constant 0 : i32
    %c0_i32_0 = arith.constant 0 : i32
    %c0_i32_1 = arith.constant 0 : i32
    return %c0_i32, %c0_i32_0 : i32, i32
  }
  func.func @transform_4(%arg0: i32) -> (i32, i32) {
    %c0_i32 = arith.constant 0 : i32
    %c0_i32_0 = arith.constant 0 : i32
    %c0_i32_1 = arith.constant 0 : i32
    return %c0_i32, %c0_i32_0 : i32, i32
  }
  func.func @transform_5(%arg0: i32) -> (i32, i32, i32, i32) {
    %c0_i32 = arith.constant 0 : i32
    %c0_i32_0 = arith.constant 0 : i32
    %c0_i32_1 = arith.constant 0 : i32
    %c0_i32_2 = arith.constant 0 : i32
    return %arg0, %c0_i32, %c0_i32_0, %c0_i32_1 : i32, i32, i32, i32
  }
  func.func @transform_6(%arg0: i32) -> (i32, i32, i32, i32) {
    %c0_i32 = arith.constant 0 : i32
    %c0_i32_0 = arith.constant 0 : i32
    %c0_i32_1 = arith.constant 0 : i32
    %c0_i32_2 = arith.constant 0 : i32
    return %arg0, %c0_i32, %c0_i32_0, %c0_i32_1 : i32, i32, i32, i32
  }
}

</mosaic_0001>

<llo_original>
// kernel: tpu_custom_call.1
$region0: #{tpu_custom_call.1}
  #allocation0 [shape = 'u32[]', space=smem, size = 0x4, offset = 0x4, fixed_abs, tag = 'smem constant byte address 0x4 - core index']
  #allocation1 [shape = 'u32[72,128]{1,0:T(1,128)}', space=vmem, size = 0x9000, scoped, tag = 'internal scratch']
  %s0 = inlined_call_operand.vmem [shape: f32[2,18,18,128], index: 0, kind: input, shape index: {}]
  %s1 = inlined_call_operand.vmem [shape: f32[1152,128], index: 1, kind: input, shape index: {}]
  %s2 = inlined_call_operand.vmem [shape: f32[1,128], index: 2, kind: input, shape index: {}]
  %s3 = inlined_call_operand.hbm [shape: f32[1152,128], index: 3, kind: input, shape index: {}]
  %s4 = inlined_call_operand.vmem [shape: f32[1,128], index: 4, kind: input, shape index: {}]
  %s5 = inlined_call_operand.hbm [shape: f32[2,16,16,128], index: 5, kind: output, shape index: {0}]
  %s6 = inlined_call_operand.hbm [shape: f32[2,8,8,128], index: 6, kind: output, shape index: {1}]
  %7 = xla_tuple %s5, %s6
  %s8 = sld [smem:[#allocation0]]
  $region65: #{tpu_custom_call.1} parent=0
    _
  %s10 = ssub.s32 1, %s8
  %s11 = scalar_select 0, %s10, %s8
  $region1: #{tpu_custom_call.1} parent=0
    #allocation2 [shape = 'u8[589824]{0}', space=vmem, size = 0x90000, scoped, tag = 'input window, operand 3, single buffered']
    #allocation3 [shape = 's32[2]{0}', space=sflag, size = 0x8, scoped, tag = 'scoped memory for tpu_custom_call.1']
    #allocation4 [shape = 's32[2]{0}', space=sflag, size = 0x8, scoped, tag = 'scoped memory for tpu_custom_call.1']
    #allocation5 [shape = 'u8[262144]{0}', space=vmem, size = 0x40000, scoped, tag = 'output window, operand 0']
    #allocation6 [shape = 'u8[65536]{0}', space=vmem, size = 0x10000, scoped, tag = 'output window, operand 1']
    #allocation7 [shape = 's32[2]{0}', space=sflag, size = 0x8, scoped, tag = 'scoped memory for tpu_custom_call.1']
    %12 = vsyncpa [#allocation3], 0
    %13 = vsyncpa [#allocation4], 0
    %s14 = scalar_lea.sflag [#allocation4], 1
    %15 = vsyncpa %s14, 0
    %16 = vsyncpa [#allocation7], 0
    %s17 = scalar_lea.sflag [#allocation7], 1
    %18 = vsyncpa %s17, 0
    loop: start=0, step=1, limit=4
    $region2: #{tpu_custom_call.1} parent=1 // loop_pre_header
      _
    $region3: #{tpu_custom_call.1} parent=1 // loop_header
      %s20 = sphi 0, %s24
      %p21 = scmp.ge.s32.totalorder %s20, 4
      %s30 = sphi 0, %s32
      %s33 = sphi 0, %s30
      %s34 = sphi 0, %s33
      %s50 = sphi 0, %s34
      %s54 = sphi 0, %s54
      %s56 = sphi 0, %s54
      %s57 = sphi 0, %s56
      %s71 = sphi 0, %s57
      %s75 = sphi 0, %s75
      %s77 = sphi 0, %s75
      %s78 = sphi 0, %s77
      %s92 = sphi 0, %s78
      %s96 = sphi 0, %s96
      %s98 = sphi 0, %s96
      %s99 = sphi 0, %s98
      %s113 = sphi 0, %s99
      %s117 = sphi 0, %s117
      %s119 = sphi 0, %s117
      %s120 = sphi 0, %s119
      %s134 = sphi 0, %s120
      %s140 = sphi 0, %s142
      %s143 = sphi 0, %s140
      %s144 = sphi 0, %s143
      %s160 = sphi 0, %s144
      %s166 = sphi 0, %s168
      %s169 = sphi 0, %s166
      %s170 = sphi 0, %s169
      %s186 = sphi 0, %s170
    $region4: #{tpu_custom_call.1} parent=1 // loop_header_branch
      %23 = sbr.rel (%p21) target = $region8
    $region5: #{tpu_custom_call.1} parent=1 // loop_body
      %s25 = ssub.s32 %s20, 1
      %s26 = ssub.s32 %s20, 2
      %s27 = sadd.s32 %s20, 1
      %s28 = ssub.s32 %s20, %s27
      %p29 = scmp.eq.s32.totalorder %s28, 0
      %s31 = sadd.s32 %s30, 1
      %s32 = scalar_select %p29, %s30, %s31
      %p35 = pneg %p29
      %p36 = scmp.eq.s32.totalorder %s20, 1
      %p37 = por %p35, %p36
      %p38 = scmp.ne.s32.totalorder %s30, %s33
      %p39 = scmp.eq.s32.totalorder %s20, 0
      %p40 = por %p38, %p39
      %p41 = scmp.ne.s32.totalorder %s30, %s33
      %p42 = scmp.eq.s32.totalorder %s25, 1
      %p43 = por %p41, %p42
      %p44 = scmp.ne.s32.totalorder %s33, %s34
      %p45 = scmp.eq.s32.totalorder %s25, 0
      %p46 = por %p44, %p45
      %p47 = scmp.ne.s32.totalorder %s33, %s34
      %p48 = scmp.eq.s32.totalorder %s26, 1
      %p49 = por %p47, %p48
      %p51 = scmp.ne.s32.totalorder %s34, %s50
      %p52 = scmp.eq.s32.totalorder %s26, 0
      %p53 = por %p51, %p52
      %s55 = sadd.s32 %s54, 1
      %p58 = scmp.eq.s32.totalorder %s20, 1
      %p59 = scmp.ne.s32.totalorder %s54, %s56
      %p60 = scmp.eq.s32.totalorder %s20, 0
      %p61 = por %p59, %p60
      %p62 = scmp.ne.s32.totalorder %s54, %s56
      %p63 = scmp.eq.s32.totalorder %s25, 1
      %p64 = por %p62, %p63
      %p65 = scmp.ne.s32.totalorder %s56, %s57
      %p66 = scmp.eq.s32.totalorder %s25, 0
      %p67 = por %p65, %p66
      %p68 = scmp.ne.s32.totalorder %s56, %s57
      %p69 = scmp.eq.s32.totalorder %s26, 1
      %p70 = por %p68, %p69
      %p72 = scmp.ne.s32.totalorder %s57, %s71
      %p73 = scmp.eq.s32.totalorder %s26, 0
      %p74 = por %p72, %p73
      %s76 = sadd.s32 %s75, 1
      %p79 = scmp.eq.s32.totalorder %s20, 1
      %p80 = scmp.ne.s32.totalorder %s75, %s77
      %p81 = scmp.eq.s32.totalorder %s20, 0
      %p82 = por %p80, %p81
      %p83 = scmp.ne.s32.totalorder %s75, %s77
      %p84 = scmp.eq.s32.totalorder %s25, 1
      %p85 = por %p83, %p84
      %p86 = scmp.ne.s32.totalorder %s77, %s78
      %p87 = scmp.eq.s32.totalorder %s25, 0
      %p88 = por %p86, %p87
      %p89 = scmp.ne.s32.totalorder %s77, %s78
      %p90 = scmp.eq.s32.totalorder %s26, 1
      %p91 = por %p89, %p90
      %p93 = scmp.ne.s32.totalorder %s78, %s92
      %p94 = scmp.eq.s32.totalorder %s26, 0
      %p95 = por %p93, %p94
      %s97 = sadd.s32 %s96, 1
      %p100 = scmp.eq.s32.totalorder %s20, 1
      %p101 = scmp.ne.s32.totalorder %s96, %s98
      %p102 = scmp.eq.s32.totalorder %s20, 0
      %p103 = por %p101, %p102
      %p104 = scmp.ne.s32.totalorder %s96, %s98
      %p105 = scmp.eq.s32.totalorder %s25, 1
      %p106 = por %p104, %p105
      %p107 = scmp.ne.s32.totalorder %s98, %s99
      %p108 = scmp.eq.s32.totalorder %s25, 0
      %p109 = por %p107, %p108
      %p110 = scmp.ne.s32.totalorder %s98, %s99
      %p111 = scmp.eq.s32.totalorder %s26, 1
      %p112 = por %p110, %p111
      %p114 = scmp.ne.s32.totalorder %s99, %s113
      %p115 = scmp.eq.s32.totalorder %s26, 0
      %p116 = por %p114, %p115
      %s118 = sadd.s32 %s117, 1
      %p121 = scmp.eq.s32.totalorder %s20, 1
      %p122 = scmp.ne.s32.totalorder %s117, %s119
      %p123 = scmp.eq.s32.totalorder %s20, 0
      %p124 = por %p122, %p123
      %p125 = scmp.ne.s32.totalorder %s117, %s119
      %p126 = scmp.eq.s32.totalorder %s25, 1
      %p127 = por %p125, %p126
      %p128 = scmp.ne.s32.totalorder %s119, %s120
      %p129 = scmp.eq.s32.totalorder %s25, 0
      %p130 = por %p128, %p129
      %p131 = scmp.ne.s32.totalorder %s119, %s120
      %p132 = scmp.eq.s32.totalorder %s26, 1
      %p133 = por %p131, %p132
      %p135 = scmp.ne.s32.totalorder %s120, %s134
      %p136 = scmp.eq.s32.totalorder %s26, 0
      %p137 = por %p135, %p136
      %s138 = ssub.s32 %s20, %s27
      %p139 = scmp.eq.s32.totalorder %s138, 0
      %s141 = sadd.s32 %s140, 1
      %s142 = scalar_select %p139, %s140, %s141
      %p145 = pneg %p139
      %p146 = scmp.eq.s32.totalorder %s20, 1
      %p147 = por %p145, %p146
      %p148 = scmp.ne.s32.totalorder %s140, %s143
      %p149 = scmp.eq.s32.totalorder %s20, 0
      %p150 = por %p148, %p149
      %p151 = scmp.ne.s32.totalorder %s140, %s143
      %p152 = scmp.eq.s32.totalorder %s25, 1
      %p153 = por %p151, %p152
      %p154 = scmp.ne.s32.totalorder %s143, %s144
      %p155 = scmp.eq.s32.totalorder %s25, 0
      %p156 = por %p154, %p155
      %p157 = scmp.ne.s32.totalorder %s143, %s144
      %p158 = scmp.eq.s32.totalorder %s26, 1
      %p159 = por %p157, %p158
      %p161 = scmp.ne.s32.totalorder %s144, %s160
      %p162 = scmp.eq.s32.totalorder %s26, 0
      %p163 = por %p161, %p162
      %s164 = ssub.s32 %s20, %s27
      %p165 = scmp.eq.s32.totalorder %s164, 0
      %s167 = sadd.s32 %s166, 1
      %s168 = scalar_select %p165, %s166, %s167
      %p171 = pneg %p165
      %p172 = scmp.eq.s32.totalorder %s20, 1
      %p173 = por %p171, %p172
      %p174 = scmp.ne.s32.totalorder %s166, %s169
      %p175 = scmp.eq.s32.totalorder %s20, 0
      %p176 = por %p174, %p175
      %p177 = scmp.ne.s32.totalorder %s166, %s169
      %p178 = scmp.eq.s32.totalorder %s25, 1
      %p179 = por %p177, %p178
      %p180 = scmp.ne.s32.totalorder %s169, %s170
      %p181 = scmp.eq.s32.totalorder %s25, 0
      %p182 = por %p180, %p181
      %p183 = scmp.ne.s32.totalorder %s169, %s170
      %p184 = scmp.eq.s32.totalorder %s26, 1
      %p185 = por %p183, %p184
      %p187 = scmp.ne.s32.totalorder %s170, %s186
      %p188 = scmp.eq.s32.totalorder %s26, 0
      %p189 = por %p187, %p188
      %p190 = scmp.le.s32.totalorder 1, %s20
      %p191 = scmp.lt.s32.totalorder %s20, 3
      %p192 = pnand %p190, %p191
      %p193 = pneg %p192
      // Predicated region
      $region9: #{tpu_custom_call.1} parent=5 // pred_check
        _
      $region10: #{tpu_custom_call.1} parent=5 // pred_check_branch
        %195 = sbr.rel (%p192) target = $region12
      $region11: #{tpu_custom_call.1} parent=5 // pred_region
        %s196 = ssub.s32 %s20, 1
        // Predicated region
        $region13: #{tpu_custom_call.1} parent=11 // pred_check
          %p197 = pneg %p67
        $region14: #{tpu_custom_call.1} parent=11 // pred_check_branch
          %199 = sbr.rel (%p197) target = $region16
        $region15: #{tpu_custom_call.1} parent=11 // pred_region
          _
        $region16: #{tpu_custom_call.1} parent=11 // pred_fallthru
          _
        // Predicated region
        $region17: #{tpu_custom_call.1} parent=11 // pred_check
          %p200 = pneg %p88
        $region18: #{tpu_custom_call.1} parent=11 // pred_check_branch
          %202 = sbr.rel (%p200) target = $region20
        $region19: #{tpu_custom_call.1} parent=11 // pred_region
          _
        $region20: #{tpu_custom_call.1} parent=11 // pred_fallthru
          _
        // Predicated region
        $region21: #{tpu_custom_call.1} parent=11 // pred_check
          %p203 = pneg %p109
        $region22: #{tpu_custom_call.1} parent=11 // pred_check_branch
          %205 = sbr.rel (%p203) target = $region24
        $region23: #{tpu_custom_call.1} parent=11 // pred_region
          %207 = vsyncadd [#allocation3], 0
          %s208 = sshll.u32 %s3, 4
          %s209 = int_to_ptr.hbm [resolvable:$true] %s208
          %s210 = sshll.u32 [#allocation2], 4
          %s211 = int_to_ptr.vmem [resolvable:$true] %s210
          %216 = dma.hbm_to_vmem [thread:$0]  %s209, 18432, %s211, [#allocation3], 128, 128, 8
        $region24: #{tpu_custom_call.1} parent=11 // pred_fallthru
          _
        // Predicated region
        $region25: #{tpu_custom_call.1} parent=11 // pred_check
          %p217 = pneg %p130
        $region26: #{tpu_custom_call.1} parent=11 // pred_check_branch
          %219 = sbr.rel (%p217) target = $region28
        $region27: #{tpu_custom_call.1} parent=11 // pred_region
          _
        $region28: #{tpu_custom_call.1} parent=11 // pred_fallthru
          _
      $region12: #{tpu_custom_call.1} parent=5 // pred_fallthru
        _
      %p220 = scmp.lt.s32.totalorder %s20, 2
      // Predicated region
      $region29: #{tpu_custom_call.1} parent=5 // pred_check
        %p221 = pneg %p220
      $region30: #{tpu_custom_call.1} parent=5 // pred_check_branch
        %223 = sbr.rel (%p221) target = $region32
      $region31: #{tpu_custom_call.1} parent=5 // pred_region
        // Predicated region
        $region33: #{tpu_custom_call.1} parent=31 // pred_check
          %p224 = pneg %p40
        $region34: #{tpu_custom_call.1} parent=31 // pred_check_branch
          %226 = sbr.rel (%p224) target = $region36
        $region35: #{tpu_custom_call.1} parent=31 // pred_region
          %p227 = scmp.lt.s32.totalorder %s20, 1
          %s228 = scalar_select %p227, %s20, 1
          %s229 = smul.addr %s228, 54
          %s230 = smul.addr %s229, 8
          %s231 = scalar_lea.vmem %s0, %s230
        $region36: #{tpu_custom_call.1} parent=31 // pred_fallthru
          _
      $region32: #{tpu_custom_call.1} parent=5 // pred_fallthru
        _
      %p232 = scmp.le.s32.totalorder 1, %s20
      %p233 = scmp.lt.s32.totalorder %s20, 3
      %p234 = pnand %p232, %p233
      %p235 = pneg %p234
      // Predicated region
      $region37: #{tpu_custom_call.1} parent=5 // pred_check
        _
      $region38: #{tpu_custom_call.1} parent=5 // pred_check_branch
        %237 = sbr.rel (%p234) target = $region40
      $region39: #{tpu_custom_call.1} parent=5 // pred_region
        %s238 = ssub.s32 %s20, 1
        // Predicated region
        $region41: #{tpu_custom_call.1} parent=39 // pred_check
          %p239 = pneg %p109
        $region42: #{tpu_custom_call.1} parent=39 // pred_check_branch
          %241 = sbr.rel (%p239) target = $region44
        $region43: #{tpu_custom_call.1} parent=39 // pred_region
          %243 = dma.done [#allocation3], 18432
        $region44: #{tpu_custom_call.1} parent=39 // pred_fallthru
          _
        %p244 = scmp.lt.s32.totalorder %s25, 1
        %s245 = scalar_select %p244, %s25, 1
        %s246 = smul.addr %s245, 54
        %s247 = smul.addr %s246, 8
        %s248 = scalar_lea.vmem %s0, %s247
        %p249 = pneg %p46
        %p250 = pneg %p43
        %p251 = pneg %p67
        %p252 = pneg %p64
        %p253 = pneg %p88
        %p254 = pneg %p85
        %p255 = pneg %p109
        %p256 = pneg %p106
        %p257 = pneg %p130
        %p258 = pneg %p127
        %p259 = pneg %p156
        %p260 = pneg %p153
        %s261 = sand.u32 %s143, 1
        %s262 = scalar_lea.sflag [#allocation4], %s261
        %s263 = sand.u32 %s143, 1
        %s264 = smul.addr %s263, 256
        %s265 = scalar_lea.vmem [#allocation5], %s264
        %p266 = pneg %p182
        %p267 = pneg %p179
        %s268 = sand.u32 %s169, 1
        %s269 = scalar_lea.sflag [#allocation7], %s268
        %s270 = sand.u32 %s169, 1
        %s271 = smul.addr %s270, 64
        %s272 = scalar_lea.vmem [#allocation6], %s271
        %p273 = scmp.lt.s32.totalorder %s25, 1
        %s274 = scalar_select %p273, %s25, 1
        %s275 = smul.addr %s274, 54
        %s276 = smul.addr %s275, 8
        %s277 = scalar_lea.vmem %s0, %s276
        %v278 = vld [vmem:[%s277] sm:$0xff]
        %v279 = vld [vmem:[%s277 + $0x8] sm:$0xff]
        %v280 = vld [vmem:[%s277 + $0x18] sm:$0xff]
        %v281 = vld [vmem:[%s277 + $0x20] sm:$0xff]
        %v282 = vld [vmem:[%s277 + $0x30] sm:$0xff]
        %v283 = vld [vmem:[%s277 + $0x38] sm:$0xff]
        %v284 = vld [vmem:[%s277 + $0x48] sm:$0xff]
        %v285 = vld [vmem:[%s277 + $0x50] sm:$0xff]
        %v286 = vld [vmem:[%s277 + $0x60] sm:$0xff]
        %v287 = vld [vmem:[%s277 + $0x68] sm:$0xff]
        %v288 = vld [vmem:[%s277 + $0x78] sm:$0xff]
        %v289 = vld [vmem:[%s277 + $0x80] sm:$0xff]
        %v290 = vld [vmem:[%s277 + $0x90] sm:$0xff]
        %v291 = vld [vmem:[%s277 + $0x98] sm:$0xff]
        %v292 = vld [vmem:[%s277 + $0xa8] sm:$0xff]
        %v293 = vld [vmem:[%s277 + $0xb0] sm:$0xff]
        %v294 = vld [vmem:[%s277 + $0xc0] sm:$0xff]
        %v295 = vld [vmem:[%s277 + $0xc8] sm:$0xff]
        %v296 = vld [vmem:[%s277 + $0xd8] sm:$0xff]
        %v297 = vld [vmem:[%s277 + $0xe0] sm:$0xff]
        %v298 = vld [vmem:[%s277 + $0xf0] sm:$0xff]
        %v299 = vld [vmem:[%s277 + $0xf8] sm:$0xff]
        %v300 = vld [vmem:[%s277 + $0x108] sm:$0xff]
        %v301 = vld [vmem:[%s277 + $0x110] sm:$0xff]
        %v302 = vld [vmem:[%s277 + $0x120] sm:$0xff]
        %v303 = vld [vmem:[%s277 + $0x128] sm:$0xff]
        %v304 = vld [vmem:[%s277 + $0x138] sm:$0xff]
        %v305 = vld [vmem:[%s277 + $0x140] sm:$0xff]
        %v306 = vld [vmem:[%s277 + $0x150] sm:$0xff]
        %v307 = vld [vmem:[%s277 + $0x158] sm:$0xff]
        %v308 = vld [vmem:[%s277 + $0x168] sm:$0xff]
        %v309 = vld [vmem:[%s277 + $0x170] sm:$0xff]
        %v310 = vld [vmem:[%s277 + $0x1] sm:$0xff]
        %v311 = vld [vmem:[%s277 + $0x9] sm:$0xff]
        %v312 = vld [vmem:[%s277 + $0x19] sm:$0xff]
        %v313 = vld [vmem:[%s277 + $0x21] sm:$0xff]
        %v314 = vld [vmem:[%s277 + $0x31] sm:$0xff]
        %v315 = vld [vmem:[%s277 + $0x39] sm:$0xff]
        %v316 = vld [vmem:[%s277 + $0x49] sm:$0xff]
        %v317 = vld [vmem:[%s277 + $0x51] sm:$0xff]
        %v318 = vld [vmem:[%s277 + $0x61] sm:$0xff]
        %v319 = vld [vmem:[%s277 + $0x69] sm:$0xff]
        %v320 = vld [vmem:[%s277 + $0x79] sm:$0xff]
        %v321 = vld [vmem:[%s277 + $0x81] sm:$0xff]
        %v322 = vld [vmem:[%s277 + $0x91] sm:$0xff]
        %v323 = vld [vmem:[%s277 + $0x99] sm:$0xff]
        %v324 = vld [vmem:[%s277 + $0xa9] sm:$0xff]
        %v325 = vld [vmem:[%s277 + $0xb1] sm:$0xff]
        %v326 = vld [vmem:[%s277 + $0xc1] sm:$0xff]
        %v327 = vld [vmem:[%s277 + $0xc9] sm:$0xff]
        %v328 = vld [vmem:[%s277 + $0xd9] sm:$0xff]
        %v329 = vld [vmem:[%s277 + $0xe1] sm:$0xff]
        %v330 = vld [vmem:[%s277 + $0xf1] sm:$0xff]
        %v331 = vld [vmem:[%s277 + $0xf9] sm:$0xff]
        %v332 = vld [vmem:[%s277 + $0x109] sm:$0xff]
        %v333 = vld [vmem:[%s277 + $0x111] sm:$0xff]
        %v334 = vld [vmem:[%s277 + $0x121] sm:$0xff]
        %v335 = vld [vmem:[%s277 + $0x129] sm:$0xff]
        %v336 = vld [vmem:[%s277 + $0x139] sm:$0xff]
        %v337 = vld [vmem:[%s277 + $0x141] sm:$0xff]
        %v338 = vld [vmem:[%s277 + $0x151] sm:$0xff]
        %v339 = vld [vmem:[%s277 + $0x159] sm:$0xff]
        %v340 = vld [vmem:[%s277 + $0x169] sm:$0xff]
        %v341 = vld [vmem:[%s277 + $0x171] sm:$0xff]
        %v342 = vld [vmem:[%s277 + $0x2] sm:$0xff]
        %v343 = vld [vmem:[%s277 + $0xa] sm:$0xff]
        %v344 = vld [vmem:[%s277 + $0x1a] sm:$0xff]
        %v345 = vld [vmem:[%s277 + $0x22] sm:$0xff]
        %v346 = vld [vmem:[%s277 + $0x32] sm:$0xff]
        %v347 = vld [vmem:[%s277 + $0x3a] sm:$0xff]
        %v348 = vld [vmem:[%s277 + $0x4a] sm:$0xff]
        %v349 = vld [vmem:[%s277 + $0x52] sm:$0xff]
        %v350 = vld [vmem:[%s277 + $0x62] sm:$0xff]
        %v351 = vld [vmem:[%s277 + $0x6a] sm:$0xff]
        %v352 = vld [vmem:[%s277 + $0x7a] sm:$0xff]
        %v353 = vld [vmem:[%s277 + $0x82] sm:$0xff]
        %v354 = vld [vmem:[%s277 + $0x92] sm:$0xff]
        %v355 = vld [vmem:[%s277 + $0x9a] sm:$0xff]
        %v356 = vld [vmem:[%s277 + $0xaa] sm:$0xff]
        %v357 = vld [vmem:[%s277 + $0xb2] sm:$0xff]
        %v358 = vld [vmem:[%s277 + $0xc2] sm:$0xff]
        %v359 = vld [vmem:[%s277 + $0xca] sm:$0xff]
        %v360 = vld [vmem:[%s277 + $0xda] sm:$0xff]
        %v361 = vld [vmem:[%s277 + $0xe2] sm:$0xff]
        %v362 = vld [vmem:[%s277 + $0xf2] sm:$0xff]
        %v363 = vld [vmem:[%s277 + $0xfa] sm:$0xff]
        %v364 = vld [vmem:[%s277 + $0x10a] sm:$0xff]
        %v365 = vld [vmem:[%s277 + $0x112] sm:$0xff]
        %v366 = vld [vmem:[%s277 + $0x122] sm:$0xff]
        %v367 = vld [vmem:[%s277 + $0x12a] sm:$0xff]
        %v368 = vld [vmem:[%s277 + $0x13a] sm:$0xff]
        %v369 = vld [vmem:[%s277 + $0x142] sm:$0xff]
        %v370 = vld [vmem:[%s277 + $0x152] sm:$0xff]
        %v371 = vld [vmem:[%s277 + $0x15a] sm:$0xff]
        %v372 = vld [vmem:[%s277 + $0x16a] sm:$0xff]
        %v373 = vld [vmem:[%s277 + $0x172] sm:$0xff]
        %s374 = scalar_lea.vmem %s277, 24
        %v375 = vld [vmem:[%s374] sm:$0xff]
        %v376 = vld [vmem:[%s374 + $0x8] sm:$0xff]
        %v377 = vld [vmem:[%s374 + $0x18] sm:$0xff]
        %v378 = vld [vmem:[%s374 + $0x20] sm:$0xff]
        %v379 = vld [vmem:[%s374 + $0x30] sm:$0xff]
        %v380 = vld [vmem:[%s374 + $0x38] sm:$0xff]
        %v381 = vld [vmem:[%s374 + $0x48] sm:$0xff]
        %v382 = vld [vmem:[%s374 + $0x50] sm:$0xff]
        %v383 = vld [vmem:[%s374 + $0x60] sm:$0xff]
        %v384 = vld [vmem:[%s374 + $0x68] sm:$0xff]
        %v385 = vld [vmem:[%s374 + $0x78] sm:$0xff]
        %v386 = vld [vmem:[%s374 + $0x80] sm:$0xff]
        %v387 = vld [vmem:[%s374 + $0x90] sm:$0xff]
        %v388 = vld [vmem:[%s374 + $0x98] sm:$0xff]
        %v389 = vld [vmem:[%s374 + $0xa8] sm:$0xff]
        %v390 = vld [vmem:[%s374 + $0xb0] sm:$0xff]
        %v391 = vld [vmem:[%s374 + $0xc0] sm:$0xff]
        %v392 = vld [vmem:[%s374 + $0xc8] sm:$0xff]
        %v393 = vld [vmem:[%s374 + $0xd8] sm:$0xff]
        %v394 = vld [vmem:[%s374 + $0xe0] sm:$0xff]
        %v395 = vld [vmem:[%s374 + $0xf0] sm:$0xff]
        %v396 = vld [vmem:[%s374 + $0xf8] sm:$0xff]
        %v397 = vld [vmem:[%s374 + $0x108] sm:$0xff]
        %v398 = vld [vmem:[%s374 + $0x110] sm:$0xff]
        %v399 = vld [vmem:[%s374 + $0x120] sm:$0xff]
        %v400 = vld [vmem:[%s374 + $0x128] sm:$0xff]
        %v401 = vld [vmem:[%s374 + $0x138] sm:$0xff]
        %v402 = vld [vmem:[%s374 + $0x140] sm:$0xff]
        %v403 = vld [vmem:[%s374 + $0x150] sm:$0xff]
        %v404 = vld [vmem:[%s374 + $0x158] sm:$0xff]
        %v405 = vld [vmem:[%s374 + $0x168] sm:$0xff]
        %v406 = vld [vmem:[%s374 + $0x170] sm:$0xff]
        %v407 = vld [vmem:[%s374 + $0x1] sm:$0xff]
        %v408 = vld [vmem:[%s374 + $0x9] sm:$0xff]
        %v409 = vld [vmem:[%s374 + $0x19] sm:$0xff]
        %v410 = vld [vmem:[%s374 + $0x21] sm:$0xff]
        %v411 = vld [vmem:[%s374 + $0x31] sm:$0xff]
        %v412 = vld [vmem:[%s374 + $0x39] sm:$0xff]
        %v413 = vld [vmem:[%s374 + $0x49] sm:$0xff]
        %v414 = vld [vmem:[%s374 + $0x51] sm:$0xff]
        %v415 = vld [vmem:[%s374 + $0x61] sm:$0xff]
        %v416 = vld [vmem:[%s374 + $0x69] sm:$0xff]
        %v417 = vld [vmem:[%s374 + $0x79] sm:$0xff]
        %v418 = vld [vmem:[%s374 + $0x81] sm:$0xff]
        %v419 = vld [vmem:[%s374 + $0x91] sm:$0xff]
        %v420 = vld [vmem:[%s374 + $0x99] sm:$0xff]
        %v421 = vld [vmem:[%s374 + $0xa9] sm:$0xff]
        %v422 = vld [vmem:[%s374 + $0xb1] sm:$0xff]
        %v423 = vld [vmem:[%s374 + $0xc1] sm:$0xff]
        %v424 = vld [vmem:[%s374 + $0xc9] sm:$0xff]
        %v425 = vld [vmem:[%s374 + $0xd9] sm:$0xff]
        %v426 = vld [vmem:[%s374 + $0xe1] sm:$0xff]
        %v427 = vld [vmem:[%s374 + $0xf1] sm:$0xff]
        %v428 = vld [vmem:[%s374 + $0xf9] sm:$0xff]
        %v429 = vld [vmem:[%s374 + $0x109] sm:$0xff]
        %v430 = vld [vmem:[%s374 + $0x111] sm:$0xff]
        %v431 = vld [vmem:[%s374 + $0x121] sm:$0xff]
        %v432 = vld [vmem:[%s374 + $0x129] sm:$0xff]
        %v433 = vld [vmem:[%s374 + $0x139] sm:$0xff]
        %v434 = vld [vmem:[%s374 + $0x141] sm:$0xff]
        %v435 = vld [vmem:[%s374 + $0x151] sm:$0xff]
        %v436 = vld [vmem:[%s374 + $0x159] sm:$0xff]
        %v437 = vld [vmem:[%s374 + $0x169] sm:$0xff]
        %v438 = vld [vmem:[%s374 + $0x171] sm:$0xff]
        %v439 = vld [vmem:[%s374 + $0x2] sm:$0xff]
        %v440 = vld [vmem:[%s374 + $0xa] sm:$0xff]
        %v441 = vld [vmem:[%s374 + $0x1a] sm:$0xff]
        %v442 = vld [vmem:[%s374 + $0x22] sm:$0xff]
        %v443 = vld [vmem:[%s374 + $0x32] sm:$0xff]
        %v444 = vld [vmem:[%s374 + $0x3a] sm:$0xff]
        %v445 = vld [vmem:[%s374 + $0x4a] sm:$0xff]
        %v446 = vld [vmem:[%s374 + $0x52] sm:$0xff]
        %v447 = vld [vmem:[%s374 + $0x62] sm:$0xff]
        %v448 = vld [vmem:[%s374 + $0x6a] sm:$0xff]
        %v449 = vld [vmem:[%s374 + $0x7a] sm:$0xff]
        %v450 = vld [vmem:[%s374 + $0x82] sm:$0xff]
        %v451 = vld [vmem:[%s374 + $0x92] sm:$0xff]
        %v452 = vld [vmem:[%s374 + $0x9a] sm:$0xff]
        %v453 = vld [vmem:[%s374 + $0xaa] sm:$0xff]
        %v454 = vld [vmem:[%s374 + $0xb2] sm:$0xff]
        %v455 = vld [vmem:[%s374 + $0xc2] sm:$0xff]
        %v456 = vld [vmem:[%s374 + $0xca] sm:$0xff]
        %v457 = vld [vmem:[%s374 + $0xda] sm:$0xff]
        %v458 = vld [vmem:[%s374 + $0xe2] sm:$0xff]
        %v459 = vld [vmem:[%s374 + $0xf2] sm:$0xff]
        %v460 = vld [vmem:[%s374 + $0xfa] sm:$0xff]
        %v461 = vld [vmem:[%s374 + $0x10a] sm:$0xff]
        %v462 = vld [vmem:[%s374 + $0x112] sm:$0xff]
        %v463 = vld [vmem:[%s374 + $0x122] sm:$0xff]
        %v464 = vld [vmem:[%s374 + $0x12a] sm:$0xff]
        %v465 = vld [vmem:[%s374 + $0x13a] sm:$0xff]
        %v466 = vld [vmem:[%s374 + $0x142] sm:$0xff]
        %v467 = vld [vmem:[%s374 + $0x152] sm:$0xff]
        %v468 = vld [vmem:[%s374 + $0x15a] sm:$0xff]
        %v469 = vld [vmem:[%s374 + $0x16a] sm:$0xff]
        %v470 = vld [vmem:[%s374 + $0x172] sm:$0xff]
        %s471 = scalar_lea.vmem %s277, 48
        %v472 = vld [vmem:[%s471] sm:$0xff]
        %v473 = vld [vmem:[%s471 + $0x8] sm:$0xff]
        %v474 = vld [vmem:[%s471 + $0x18] sm:$0xff]
        %v475 = vld [vmem:[%s471 + $0x20] sm:$0xff]
        %v476 = vld [vmem:[%s471 + $0x30] sm:$0xff]
        %v477 = vld [vmem:[%s471 + $0x38] sm:$0xff]
        %v478 = vld [vmem:[%s471 + $0x48] sm:$0xff]
        %v479 = vld [vmem:[%s471 + $0x50] sm:$0xff]
        %v480 = vld [vmem:[%s471 + $0x60] sm:$0xff]
        %v481 = vld [vmem:[%s471 + $0x68] sm:$0xff]
        %v482 = vld [vmem:[%s471 + $0x78] sm:$0xff]
        %v483 = vld [vmem:[%s471 + $0x80] sm:$0xff]
        %v484 = vld [vmem:[%s471 + $0x90] sm:$0xff]
        %v485 = vld [vmem:[%s471 + $0x98] sm:$0xff]
        %v486 = vld [vmem:[%s471 + $0xa8] sm:$0xff]
        %v487 = vld [vmem:[%s471 + $0xb0] sm:$0xff]
        %v488 = vld [vmem:[%s471 + $0xc0] sm:$0xff]
        %v489 = vld [vmem:[%s471 + $0xc8] sm:$0xff]
        %v490 = vld [vmem:[%s471 + $0xd8] sm:$0xff]
        %v491 = vld [vmem:[%s471 + $0xe0] sm:$0xff]
        %v492 = vld [vmem:[%s471 + $0xf0] sm:$0xff]
        %v493 = vld [vmem:[%s471 + $0xf8] sm:$0xff]
        %v494 = vld [vmem:[%s471 + $0x108] sm:$0xff]
        %v495 = vld [vmem:[%s471 + $0x110] sm:$0xff]
        %v496 = vld [vmem:[%s471 + $0x120] sm:$0xff]
        %v497 = vld [vmem:[%s471 + $0x128] sm:$0xff]
        %v498 = vld [vmem:[%s471 + $0x138] sm:$0xff]
        %v499 = vld [vmem:[%s471 + $0x140] sm:$0xff]
        %v500 = vld [vmem:[%s471 + $0x150] sm:$0xff]
        %v501 = vld [vmem:[%s471 + $0x158] sm:$0xff]
        %v502 = vld [vmem:[%s471 + $0x168] sm:$0xff]
        %v503 = vld [vmem:[%s471 + $0x170] sm:$0xff]
        %v504 = vld [vmem:[%s471 + $0x1] sm:$0xff]
        %v505 = vld [vmem:[%s471 + $0x9] sm:$0xff]
        %v506 = vld [vmem:[%s471 + $0x19] sm:$0xff]
        %v507 = vld [vmem:[%s471 + $0x21] sm:$0xff]
        %v508 = vld [vmem:[%s471 + $0x31] sm:$0xff]
        %v509 = vld [vmem:[%s471 + $0x39] sm:$0xff]
        %v510 = vld [vmem:[%s471 + $0x49] sm:$0xff]
        %v511 = vld [vmem:[%s471 + $0x51] sm:$0xff]
        %v512 = vld [vmem:[%s471 + $0x61] sm:$0xff]
        %v513 = vld [vmem:[%s471 + $0x69] sm:$0xff]
        %v514 = vld [vmem:[%s471 + $0x79] sm:$0xff]
        %v515 = vld [vmem:[%s471 + $0x81] sm:$0xff]
        %v516 = vld [vmem:[%s471 + $0x91] sm:$0xff]
        %v517 = vld [vmem:[%s471 + $0x99] sm:$0xff]
        %v518 = vld [vmem:[%s471 + $0xa9] sm:$0xff]
        %v519 = vld [vmem:[%s471 + $0xb1] sm:$0xff]
        %v520 = vld [vmem:[%s471 + $0xc1] sm:$0xff]
        %v521 = vld [vmem:[%s471 + $0xc9] sm:$0xff]
        %v522 = vld [vmem:[%s471 + $0xd9] sm:$0xff]
        %v523 = vld [vmem:[%s471 + $0xe1] sm:$0xff]
        %v524 = vld [vmem:[%s471 + $0xf1] sm:$0xff]
        %v525 = vld [vmem:[%s471 + $0xf9] sm:$0xff]
        %v526 = vld [vmem:[%s471 + $0x109] sm:$0xff]
        %v527 = vld [vmem:[%s471 + $0x111] sm:$0xff]
        %v528 = vld [vmem:[%s471 + $0x121] sm:$0xff]
        %v529 = vld [vmem:[%s471 + $0x129] sm:$0xff]
        %v530 = vld [vmem:[%s471 + $0x139] sm:$0xff]
        %v531 = vld [vmem:[%s471 + $0x141] sm:$0xff]
        %v532 = vld [vmem:[%s471 + $0x151] sm:$0xff]
        %v533 = vld [vmem:[%s471 + $0x159] sm:$0xff]
        %v534 = vld [vmem:[%s471 + $0x169] sm:$0xff]
        %v535 = vld [vmem:[%s471 + $0x171] sm:$0xff]
        %v536 = vld [vmem:[%s471 + $0x2] sm:$0xff]
        %v537 = vld [vmem:[%s471 + $0xa] sm:$0xff]
        %v538 = vld [vmem:[%s471 + $0x1a] sm:$0xff]
        %v539 = vld [vmem:[%s471 + $0x22] sm:$0xff]
        %v540 = vld [vmem:[%s471 + $0x32] sm:$0xff]
        %v541 = vld [vmem:[%s471 + $0x3a] sm:$0xff]
        %v542 = vld [vmem:[%s471 + $0x4a] sm:$0xff]
        %v543 = vld [vmem:[%s471 + $0x52] sm:$0xff]
        %v544 = vld [vmem:[%s471 + $0x62] sm:$0xff]
        %v545 = vld [vmem:[%s471 + $0x6a] sm:$0xff]
        %v546 = vld [vmem:[%s471 + $0x7a] sm:$0xff]
        %v547 = vld [vmem:[%s471 + $0x82] sm:$0xff]
        %v548 = vld [vmem:[%s471 + $0x92] sm:$0xff]
        %v549 = vld [vmem:[%s471 + $0x9a] sm:$0xff]
        %v550 = vld [vmem:[%s471 + $0xaa] sm:$0xff]
        %v551 = vld [vmem:[%s471 + $0xb2] sm:$0xff]
        %v552 = vld [vmem:[%s471 + $0xc2] sm:$0xff]
        %v553 = vld [vmem:[%s471 + $0xca] sm:$0xff]
        %v554 = vld [vmem:[%s471 + $0xda] sm:$0xff]
        %v555 = vld [vmem:[%s471 + $0xe2] sm:$0xff]
        %v556 = vld [vmem:[%s471 + $0xf2] sm:$0xff]
        %v557 = vld [vmem:[%s471 + $0xfa] sm:$0xff]
        %v558 = vld [vmem:[%s471 + $0x10a] sm:$0xff]
        %v559 = vld [vmem:[%s471 + $0x112] sm:$0xff]
        %v560 = vld [vmem:[%s471 + $0x122] sm:$0xff]
        %v561 = vld [vmem:[%s471 + $0x12a] sm:$0xff]
        %v562 = vld [vmem:[%s471 + $0x13a] sm:$0xff]
        %v563 = vld [vmem:[%s471 + $0x142] sm:$0xff]
        %v564 = vld [vmem:[%s471 + $0x152] sm:$0xff]
        %v565 = vld [vmem:[%s471 + $0x15a] sm:$0xff]
        %v566 = vld [vmem:[%s471 + $0x16a] sm:$0xff]
        %v567 = vld [vmem:[%s471 + $0x172] sm:$0xff]
        %v568 = vld [vmem:[%s1] sm:$0xff]
        %v569 = vld [vmem:[%s1 + $0x8] sm:$0xff]
        %v570 = vld [vmem:[%s1 + $0x10] sm:$0xff]
        %v571 = vld [vmem:[%s1 + $0x18] sm:$0xff]
        %v572 = vld [vmem:[%s1 + $0x20] sm:$0xff]
        %v573 = vld [vmem:[%s1 + $0x28] sm:$0xff]
        %v574 = vld [vmem:[%s1 + $0x30] sm:$0xff]
        %v575 = vld [vmem:[%s1 + $0x38] sm:$0xff]
        %v576 = vld [vmem:[%s1 + $0x40] sm:$0xff]
        %v577 = vld [vmem:[%s1 + $0x48] sm:$0xff]
        %v578 = vld [vmem:[%s1 + $0x50] sm:$0xff]
        %v579 = vld [vmem:[%s1 + $0x58] sm:$0xff]
        %v580 = vld [vmem:[%s1 + $0x60] sm:$0xff]
        %v581 = vld [vmem:[%s1 + $0x68] sm:$0xff]
        %v582 = vld [vmem:[%s1 + $0x70] sm:$0xff]
        %v583 = vld [vmem:[%s1 + $0x78] sm:$0xff]
        %v584 = vld [vmem:[%s1 + $0x80] sm:$0xff]
        %v585 = vld [vmem:[%s1 + $0x88] sm:$0xff]
        %v586 = vld [vmem:[%s1 + $0x90] sm:$0xff]
        %v587 = vld [vmem:[%s1 + $0x98] sm:$0xff]
        %v588 = vld [vmem:[%s1 + $0xa0] sm:$0xff]
        %v589 = vld [vmem:[%s1 + $0xa8] sm:$0xff]
        %v590 = vld [vmem:[%s1 + $0xb0] sm:$0xff]
        %v591 = vld [vmem:[%s1 + $0xb8] sm:$0xff]
        %v592 = vld [vmem:[%s1 + $0xc0] sm:$0xff]
        %v593 = vld [vmem:[%s1 + $0xc8] sm:$0xff]
        %v594 = vld [vmem:[%s1 + $0xd0] sm:$0xff]
        %v595 = vld [vmem:[%s1 + $0xd8] sm:$0xff]
        %v596 = vld [vmem:[%s1 + $0xe0] sm:$0xff]
        %v597 = vld [vmem:[%s1 + $0xe8] sm:$0xff]
        %v598 = vld [vmem:[%s1 + $0xf0] sm:$0xff]
        %v599 = vld [vmem:[%s1 + $0xf8] sm:$0xff]
        %v600 = vld [vmem:[%s1 + $0x100] sm:$0xff]
        %v601 = vld [vmem:[%s1 + $0x108] sm:$0xff]
        %v602 = vld [vmem:[%s1 + $0x110] sm:$0xff]
        %v603 = vld [vmem:[%s1 + $0x118] sm:$0xff]
        %v604 = vld [vmem:[%s1 + $0x120] sm:$0xff]
        %v605 = vld [vmem:[%s1 + $0x128] sm:$0xff]
        %v606 = vld [vmem:[%s1 + $0x130] sm:$0xff]
        %v607 = vld [vmem:[%s1 + $0x138] sm:$0xff]
        %v608 = vld [vmem:[%s1 + $0x140] sm:$0xff]
        %v609 = vld [vmem:[%s1 + $0x148] sm:$0xff]
        %v610 = vld [vmem:[%s1 + $0x150] sm:$0xff]
        %v611 = vld [vmem:[%s1 + $0x158] sm:$0xff]
        %v612 = vld [vmem:[%s1 + $0x160] sm:$0xff]
        %v613 = vld [vmem:[%s1 + $0x168] sm:$0xff]
        %v614 = vld [vmem:[%s1 + $0x170] sm:$0xff]
        %v615 = vld [vmem:[%s1 + $0x178] sm:$0xff]
        %v616 = vld [vmem:[%s1 + $0x180] sm:$0xff]
        %v617 = vld [vmem:[%s1 + $0x188] sm:$0xff]
        %v618 = vld [vmem:[%s1 + $0x190] sm:$0xff]
        %v619 = vld [vmem:[%s1 + $0x198] sm:$0xff]
        %v620 = vld [vmem:[%s1 + $0x1a0] sm:$0xff]
        %v621 = vld [vmem:[%s1 + $0x1a8] sm:$0xff]
        %v622 = vld [vmem:[%s1 + $0x1b0] sm:$0xff]
        %v623 = vld [vmem:[%s1 + $0x1b8] sm:$0xff]
        %v624 = vld [vmem:[%s1 + $0x1c0] sm:$0xff]
        %v625 = vld [vmem:[%s1 + $0x1c8] sm:$0xff]
        %v626 = vld [vmem:[%s1 + $0x1d0] sm:$0xff]
        %v627 = vld [vmem:[%s1 + $0x1d8] sm:$0xff]
        %v628 = vld [vmem:[%s1 + $0x1e0] sm:$0xff]
        %v629 = vld [vmem:[%s1 + $0x1e8] sm:$0xff]
        %v630 = vld [vmem:[%s1 + $0x1f0] sm:$0xff]
        %v631 = vld [vmem:[%s1 + $0x1f8] sm:$0xff]
        %v632 = vld [vmem:[%s1 + $0x200] sm:$0xff]
        %v633 = vld [vmem:[%s1 + $0x208] sm:$0xff]
        %v634 = vld [vmem:[%s1 + $0x210] sm:$0xff]
        %v635 = vld [vmem:[%s1 + $0x218] sm:$0xff]
        %v636 = vld [vmem:[%s1 + $0x220] sm:$0xff]
        %v637 = vld [vmem:[%s1 + $0x228] sm:$0xff]
        %v638 = vld [vmem:[%s1 + $0x230] sm:$0xff]
        %v639 = vld [vmem:[%s1 + $0x238] sm:$0xff]
        %v640 = vld [vmem:[%s1 + $0x240] sm:$0xff]
        %v641 = vld [vmem:[%s1 + $0x248] sm:$0xff]
        %v642 = vld [vmem:[%s1 + $0x250] sm:$0xff]
        %v643 = vld [vmem:[%s1 + $0x258] sm:$0xff]
        %v644 = vld [vmem:[%s1 + $0x260] sm:$0xff]
        %v645 = vld [vmem:[%s1 + $0x268] sm:$0xff]
        %v646 = vld [vmem:[%s1 + $0x270] sm:$0xff]
        %v647 = vld [vmem:[%s1 + $0x278] sm:$0xff]
        %v648 = vld [vmem:[%s1 + $0x280] sm:$0xff]
        %v649 = vld [vmem:[%s1 + $0x288] sm:$0xff]
        %v650 = vld [vmem:[%s1 + $0x290] sm:$0xff]
        %v651 = vld [vmem:[%s1 + $0x298] sm:$0xff]
        %v652 = vld [vmem:[%s1 + $0x2a0] sm:$0xff]
        %v653 = vld [vmem:[%s1 + $0x2a8] sm:$0xff]
        %v654 = vld [vmem:[%s1 + $0x2b0] sm:$0xff]
        %v655 = vld [vmem:[%s1 + $0x2b8] sm:$0xff]
        %v656 = vld [vmem:[%s1 + $0x2c0] sm:$0xff]
        %v657 = vld [vmem:[%s1 + $0x2c8] sm:$0xff]
        %v658 = vld [vmem:[%s1 + $0x2d0] sm:$0xff]
        %v659 = vld [vmem:[%s1 + $0x2d8] sm:$0xff]
        %v660 = vld [vmem:[%s1 + $0x2e0] sm:$0xff]
        %v661 = vld [vmem:[%s1 + $0x2e8] sm:$0xff]
        %v662 = vld [vmem:[%s1 + $0x2f0] sm:$0xff]
        %v663 = vld [vmem:[%s1 + $0x2f8] sm:$0xff]
        %v664 = vld [vmem:[%s1 + $0x300] sm:$0xff]
        %v665 = vld [vmem:[%s1 + $0x308] sm:$0xff]
        %v666 = vld [vmem:[%s1 + $0x310] sm:$0xff]
        %v667 = vld [vmem:[%s1 + $0x318] sm:$0xff]
        %v668 = vld [vmem:[%s1 + $0x320] sm:$0xff]
        %v669 = vld [vmem:[%s1 + $0x328] sm:$0xff]
        %v670 = vld [vmem:[%s1 + $0x330] sm:$0xff]
        %v671 = vld [vmem:[%s1 + $0x338] sm:$0xff]
        %v672 = vld [vmem:[%s1 + $0x340] sm:$0xff]
        %v673 = vld [vmem:[%s1 + $0x348] sm:$0xff]
        %v674 = vld [vmem:[%s1 + $0x350] sm:$0xff]
        %v675 = vld [vmem:[%s1 + $0x358] sm:$0xff]
        %v676 = vld [vmem:[%s1 + $0x360] sm:$0xff]
        %v677 = vld [vmem:[%s1 + $0x368] sm:$0xff]
        %v678 = vld [vmem:[%s1 + $0x370] sm:$0xff]
        %v679 = vld [vmem:[%s1 + $0x378] sm:$0xff]
        %v680 = vld [vmem:[%s1 + $0x380] sm:$0xff]
        %v681 = vld [vmem:[%s1 + $0x388] sm:$0xff]
        %v682 = vld [vmem:[%s1 + $0x390] sm:$0xff]
        %v683 = vld [vmem:[%s1 + $0x398] sm:$0xff]
        %v684 = vld [vmem:[%s1 + $0x3a0] sm:$0xff]
        %v685 = vld [vmem:[%s1 + $0x3a8] sm:$0xff]
        %v686 = vld [vmem:[%s1 + $0x3b0] sm:$0xff]
        %v687 = vld [vmem:[%s1 + $0x3b8] sm:$0xff]
        %v688 = vld [vmem:[%s1 + $0x3c0] sm:$0xff]
        %v689 = vld [vmem:[%s1 + $0x3c8] sm:$0xff]
        %v690 = vld [vmem:[%s1 + $0x3d0] sm:$0xff]
        %v691 = vld [vmem:[%s1 + $0x3d8] sm:$0xff]
        %v692 = vld [vmem:[%s1 + $0x3e0] sm:$0xff]
        %v693 = vld [vmem:[%s1 + $0x3e8] sm:$0xff]
        %v694 = vld [vmem:[%s1 + $0x3f0] sm:$0xff]
        %v695 = vld [vmem:[%s1 + $0x3f8] sm:$0xff]
        %v696 = vld [vmem:[%s1 + $0x400] sm:$0xff]
        %v697 = vld [vmem:[%s1 + $0x408] sm:$0xff]
        %v698 = vld [vmem:[%s1 + $0x410] sm:$0xff]
        %v699 = vld [vmem:[%s1 + $0x418] sm:$0xff]
        %v700 = vld [vmem:[%s1 + $0x420] sm:$0xff]
        %v701 = vld [vmem:[%s1 + $0x428] sm:$0xff]
        %v702 = vld [vmem:[%s1 + $0x430] sm:$0xff]
        %v703 = vld [vmem:[%s1 + $0x438] sm:$0xff]
        %v704 = vld [vmem:[%s1 + $0x440] sm:$0xff]
        %v705 = vld [vmem:[%s1 + $0x448] sm:$0xff]
        %v706 = vld [vmem:[%s1 + $0x450] sm:$0xff]
        %v707 = vld [vmem:[%s1 + $0x458] sm:$0xff]
        %v708 = vld [vmem:[%s1 + $0x460] sm:$0xff]
        %v709 = vld [vmem:[%s1 + $0x468] sm:$0xff]
        %v710 = vld [vmem:[%s1 + $0x470] sm:$0xff]
        %v711 = vld [vmem:[%s1 + $0x478] sm:$0xff]
        %v712 = vld [vmem:[%s2] sm:$0x1]
        %v714 = vperm.slane %v712, 0
        %716 = vmatpush.msra.mxu0 %v583
        %717 = vmatpush.msra.mxu0 %v582
        %718 = vmatpush.msra.mxu0 %v581
        %719 = vmatpush.msra.mxu0 %v580
        %720 = vmatpush.msra.mxu0 %v579
        %721 = vmatpush.msra.mxu0 %v578
        %722 = vmatpush.msra.mxu0 %v577
        %723 = vmatpush.msra.mxu0 %v576
        %724 = vmatpush.msra.mxu0 %v575
        %725 = vmatpush.msra.mxu0 %v574
        %726 = vmatpush.msra.mxu0 %v573
        %727 = vmatpush.msra.mxu0 %v572
        %728 = vmatpush.msra.mxu0 %v571
        %729 = vmatpush.msra.mxu0 %v570
        %730 = vmatpush.msra.mxu0 %v569
        %731 = vmatpush.msra.mxu0 %v568
        %732 = vmatmul.f32.gmra.mxu0 %v278
        %v733 = vpop.f32.mrf.mxu0
        %v734 = vadd.f32 %v714, %v733
        %735 = vmatmul.f32.gmra.mxu0 %v279
        %v736 = vpop.f32.mrf.mxu0
        %v737 = vadd.f32 %v714, %v736
        %738 = vmatmul.f32.gmra.mxu0 %v280
        %v739 = vpop.f32.mrf.mxu0
        %v740 = vadd.f32 %v714, %v739
        %741 = vmatmul.f32.gmra.mxu0 %v281
        %v742 = vpop.f32.mrf.mxu0
        %v743 = vadd.f32 %v714, %v742
        %744 = vmatmul.f32.gmra.mxu0 %v282
        %v745 = vpop.f32.mrf.mxu0
        %v746 = vadd.f32 %v714, %v745
        %747 = vmatmul.f32.gmra.mxu0 %v283
        %v748 = vpop.f32.mrf.mxu0
        %v749 = vadd.f32 %v714, %v748
        %750 = vmatmul.f32.gmra.mxu0 %v284
        %v751 = vpop.f32.mrf.mxu0
        %v752 = vadd.f32 %v714, %v751
        %753 = vmatmul.f32.gmra.mxu0 %v285
        %v754 = vpop.f32.mrf.mxu0
        %v755 = vadd.f32 %v714, %v754
        %756 = vmatmul.f32.gmra.mxu0 %v286
        %v757 = vpop.f32.mrf.mxu0
        %v758 = vadd.f32 %v714, %v757
        %759 = vmatmul.f32.gmra.mxu0 %v287
        %v760 = vpop.f32.mrf.mxu0
        %v761 = vadd.f32 %v714, %v760
        %762 = vmatmul.f32.gmra.mxu0 %v288
        %v763 = vpop.f32.mrf.mxu0
        %v764 = vadd.f32 %v714, %v763
        %765 = vmatmul.f32.gmra.mxu0 %v289
        %v766 = vpop.f32.mrf.mxu0
        %v767 = vadd.f32 %v714, %v766
        %768 = vmatmul.f32.gmra.mxu0 %v290
        %v769 = vpop.f32.mrf.mxu0
        %v770 = vadd.f32 %v714, %v769
        %771 = vmatmul.f32.gmra.mxu0 %v291
        %v772 = vpop.f32.mrf.mxu0
        %v773 = vadd.f32 %v714, %v772
        %774 = vmatmul.f32.gmra.mxu0 %v292
        %v775 = vpop.f32.mrf.mxu0
        %v776 = vadd.f32 %v714, %v775
        %777 = vmatmul.f32.gmra.mxu0 %v293
        %v778 = vpop.f32.mrf.mxu0
        %v779 = vadd.f32 %v714, %v778
        %780 = vmatmul.f32.gmra.mxu0 %v294
        %v781 = vpop.f32.mrf.mxu0
        %v782 = vadd.f32 %v714, %v781
        %783 = vmatmul.f32.gmra.mxu0 %v295
        %v784 = vpop.f32.mrf.mxu0
        %v785 = vadd.f32 %v714, %v784
        %786 = vmatmul.f32.gmra.mxu0 %v296
        %v787 = vpop.f32.mrf.mxu0
        %v788 = vadd.f32 %v714, %v787
        %789 = vmatmul.f32.gmra.mxu0 %v297
        %v790 = vpop.f32.mrf.mxu0
        %v791 = vadd.f32 %v714, %v790
        %792 = vmatmul.f32.gmra.mxu0 %v298
        %v793 = vpop.f32.mrf.mxu0
        %v794 = vadd.f32 %v714, %v793
        %795 = vmatmul.f32.gmra.mxu0 %v299
        %v796 = vpop.f32.mrf.mxu0
        %v797 = vadd.f32 %v714, %v796
        %798 = vmatmul.f32.gmra.mxu0 %v300
        %v799 = vpop.f32.mrf.mxu0
        %v800 = vadd.f32 %v714, %v799
        %801 = vmatmul.f32.gmra.mxu0 %v301
        %v802 = vpop.f32.mrf.mxu0
        %v803 = vadd.f32 %v714, %v802
        %804 = vmatmul.f32.gmra.mxu0 %v302
        %v805 = vpop.f32.mrf.mxu0
        %v806 = vadd.f32 %v714, %v805
        %807 = vmatmul.f32.gmra.mxu0 %v303
        %v808 = vpop.f32.mrf.mxu0
        %v809 = vadd.f32 %v714, %v808
        %810 = vmatmul.f32.gmra.mxu0 %v304
        %v811 = vpop.f32.mrf.mxu0
        %v812 = vadd.f32 %v714, %v811
        %813 = vmatmul.f32.gmra.mxu0 %v305
        %v814 = vpop.f32.mrf.mxu0
        %v815 = vadd.f32 %v714, %v814
        %816 = vmatmul.f32.gmra.mxu0 %v306
        %v817 = vpop.f32.mrf.mxu0
        %v818 = vadd.f32 %v714, %v817
        %819 = vmatmul.f32.gmra.mxu0 %v307
        %v820 = vpop.f32.mrf.mxu0
        %v821 = vadd.f32 %v714, %v820
        %822 = vmatmul.f32.gmra.mxu0 %v308
        %v823 = vpop.f32.mrf.mxu0
        %v824 = vadd.f32 %v714, %v823
        %825 = vmatmul.f32.gmra.mxu0 %v309
        %v826 = vpop.f32.mrf.mxu0
        %v827 = vadd.f32 %v714, %v826
        %828 = vdwg.mxu0
        %829 = vmatpush.msra.mxu0 %v599
        %830 = vmatpush.msra.mxu0 %v598
        %831 = vmatpush.msra.mxu0 %v597
        %832 = vmatpush.msra.mxu0 %v596
        %833 = vmatpush.msra.mxu0 %v595
        %834 = vmatpush.msra.mxu0 %v594
        %835 = vmatpush.msra.mxu0 %v593
        %836 = vmatpush.msra.mxu0 %v592
        %837 = vmatpush.msra.mxu0 %v591
        %838 = vmatpush.msra.mxu0 %v590
        %839 = vmatpush.msra.mxu0 %v589
        %840 = vmatpush.msra.mxu0 %v588
        %841 = vmatpush.msra.mxu0 %v587
        %842 = vmatpush.msra.mxu0 %v586
        %843 = vmatpush.msra.mxu0 %v585
        %844 = vmatpush.msra.mxu0 %v584
        %845 = vmatmul.f32.gmra.mxu0 %v310
        %v846 = vpop.f32.mrf.mxu0
        %v847 = vadd.f32 %v734, %v846
        %848 = vmatmul.f32.gmra.mxu0 %v311
        %v849 = vpop.f32.mrf.mxu0
        %v850 = vadd.f32 %v737, %v849
        %851 = vmatmul.f32.gmra.mxu0 %v312
        %v852 = vpop.f32.mrf.mxu0
        %v853 = vadd.f32 %v740, %v852
        %854 = vmatmul.f32.gmra.mxu0 %v313
        %v855 = vpop.f32.mrf.mxu0
        %v856 = vadd.f32 %v743, %v855
        %857 = vmatmul.f32.gmra.mxu0 %v314
        %v858 = vpop.f32.mrf.mxu0
        %v859 = vadd.f32 %v746, %v858
        %860 = vmatmul.f32.gmra.mxu0 %v315
        %v861 = vpop.f32.mrf.mxu0
        %v862 = vadd.f32 %v749, %v861
        %863 = vmatmul.f32.gmra.mxu0 %v316
        %v864 = vpop.f32.mrf.mxu0
        %v865 = vadd.f32 %v752, %v864
        %866 = vmatmul.f32.gmra.mxu0 %v317
        %v867 = vpop.f32.mrf.mxu0
        %v868 = vadd.f32 %v755, %v867
        %869 = vmatmul.f32.gmra.mxu0 %v318
        %v870 = vpop.f32.mrf.mxu0
        %v871 = vadd.f32 %v758, %v870
        %872 = vmatmul.f32.gmra.mxu0 %v319
        %v873 = vpop.f32.mrf.mxu0
        %v874 = vadd.f32 %v761, %v873
        %875 = vmatmul.f32.gmra.mxu0 %v320
        %v876 = vpop.f32.mrf.mxu0
        %v877 = vadd.f32 %v764, %v876
        %878 = vmatmul.f32.gmra.mxu0 %v321
        %v879 = vpop.f32.mrf.mxu0
        %v880 = vadd.f32 %v767, %v879
        %881 = vmatmul.f32.gmra.mxu0 %v322
        %v882 = vpop.f32.mrf.mxu0
        %v883 = vadd.f32 %v770, %v882
        %884 = vmatmul.f32.gmra.mxu0 %v323
        %v885 = vpop.f32.mrf.mxu0
        %v886 = vadd.f32 %v773, %v885
        %887 = vmatmul.f32.gmra.mxu0 %v324
        %v888 = vpop.f32.mrf.mxu0
        %v889 = vadd.f32 %v776, %v888
        %890 = vmatmul.f32.gmra.mxu0 %v325
        %v891 = vpop.f32.mrf.mxu0
        %v892 = vadd.f32 %v779, %v891
        %893 = vmatmul.f32.gmra.mxu0 %v326
        %v894 = vpop.f32.mrf.mxu0
        %v895 = vadd.f32 %v782, %v894
        %896 = vmatmul.f32.gmra.mxu0 %v327
        %v897 = vpop.f32.mrf.mxu0
        %v898 = vadd.f32 %v785, %v897
        %899 = vmatmul.f32.gmra.mxu0 %v328
        %v900 = vpop.f32.mrf.mxu0
        %v901 = vadd.f32 %v788, %v900
        %902 = vmatmul.f32.gmra.mxu0 %v329
        %v903 = vpop.f32.mrf.mxu0
        %v904 = vadd.f32 %v791, %v903
        %905 = vmatmul.f32.gmra.mxu0 %v330
        %v906 = vpop.f32.mrf.mxu0
        %v907 = vadd.f32 %v794, %v906
        %908 = vmatmul.f32.gmra.mxu0 %v331
        %v909 = vpop.f32.mrf.mxu0
        %v910 = vadd.f32 %v797, %v909
        %911 = vmatmul.f32.gmra.mxu0 %v332
        %v912 = vpop.f32.mrf.mxu0
        %v913 = vadd.f32 %v800, %v912
        %914 = vmatmul.f32.gmra.mxu0 %v333
        %v915 = vpop.f32.mrf.mxu0
        %v916 = vadd.f32 %v803, %v915
        %917 = vmatmul.f32.gmra.mxu0 %v334
        %v918 = vpop.f32.mrf.mxu0
        %v919 = vadd.f32 %v806, %v918
        %920 = vmatmul.f32.gmra.mxu0 %v335
        %v921 = vpop.f32.mrf.mxu0
        %v922 = vadd.f32 %v809, %v921
        %923 = vmatmul.f32.gmra.mxu0 %v336
        %v924 = vpop.f32.mrf.mxu0
        %v925 = vadd.f32 %v812, %v924
        %926 = vmatmul.f32.gmra.mxu0 %v337
        %v927 = vpop.f32.mrf.mxu0
        %v928 = vadd.f32 %v815, %v927
        %929 = vmatmul.f32.gmra.mxu0 %v338
        %v930 = vpop.f32.mrf.mxu0
        %v931 = vadd.f32 %v818, %v930
        %932 = vmatmul.f32.gmra.mxu0 %v339
        %v933 = vpop.f32.mrf.mxu0
        %v934 = vadd.f32 %v821, %v933
        %935 = vmatmul.f32.gmra.mxu0 %v340
        %v936 = vpop.f32.mrf.mxu0
        %v937 = vadd.f32 %v824, %v936
        %938 = vmatmul.f32.gmra.mxu0 %v341
        %v939 = vpop.f32.mrf.mxu0
        %v940 = vadd.f32 %v827, %v939
        %941 = vdwg.mxu0
        %942 = vmatpush.msra.mxu0 %v615
        %943 = vmatpush.msra.mxu0 %v614
        %944 = vmatpush.msra.mxu0 %v613
        %945 = vmatpush.msra.mxu0 %v612
        %946 = vmatpush.msra.mxu0 %v611
        %947 = vmatpush.msra.mxu0 %v610
        %948 = vmatpush.msra.mxu0 %v609
        %949 = vmatpush.msra.mxu0 %v608
        %950 = vmatpush.msra.mxu0 %v607
        %951 = vmatpush.msra.mxu0 %v606
        %952 = vmatpush.msra.mxu0 %v605
        %953 = vmatpush.msra.mxu0 %v604
        %954 = vmatpush.msra.mxu0 %v603
        %955 = vmatpush.msra.mxu0 %v602
        %956 = vmatpush.msra.mxu0 %v601
        %957 = vmatpush.msra.mxu0 %v600
        %958 = vmatmul.f32.gmra.mxu0 %v342
        %v959 = vpop.f32.mrf.mxu0
        %v960 = vadd.f32 %v847, %v959
        %961 = vmatmul.f32.gmra.mxu0 %v343
        %v962 = vpop.f32.mrf.mxu0
        %v963 = vadd.f32 %v850, %v962
        %964 = vmatmul.f32.gmra.mxu0 %v344
        %v965 = vpop.f32.mrf.mxu0
        %v966 = vadd.f32 %v853, %v965
        %967 = vmatmul.f32.gmra.mxu0 %v345
        %v968 = vpop.f32.mrf.mxu0
        %v969 = vadd.f32 %v856, %v968
        %970 = vmatmul.f32.gmra.mxu0 %v346
        %v971 = vpop.f32.mrf.mxu0
        %v972 = vadd.f32 %v859, %v971
        %973 = vmatmul.f32.gmra.mxu0 %v347
        %v974 = vpop.f32.mrf.mxu0
        %v975 = vadd.f32 %v862, %v974
        %976 = vmatmul.f32.gmra.mxu0 %v348
        %v977 = vpop.f32.mrf.mxu0
        %v978 = vadd.f32 %v865, %v977
        %979 = vmatmul.f32.gmra.mxu0 %v349
        %v980 = vpop.f32.mrf.mxu0
        %v981 = vadd.f32 %v868, %v980
        %982 = vmatmul.f32.gmra.mxu0 %v350
        %v983 = vpop.f32.mrf.mxu0
        %v984 = vadd.f32 %v871, %v983
        %985 = vmatmul.f32.gmra.mxu0 %v351
        %v986 = vpop.f32.mrf.mxu0
        %v987 = vadd.f32 %v874, %v986
        %988 = vmatmul.f32.gmra.mxu0 %v352
        %v989 = vpop.f32.mrf.mxu0
        %v990 = vadd.f32 %v877, %v989
        %991 = vmatmul.f32.gmra.mxu0 %v353
        %v992 = vpop.f32.mrf.mxu0
        %v993 = vadd.f32 %v880, %v992
        %994 = vmatmul.f32.gmra.mxu0 %v354
        %v995 = vpop.f32.mrf.mxu0
        %v996 = vadd.f32 %v883, %v995
        %997 = vmatmul.f32.gmra.mxu0 %v355
        %v998 = vpop.f32.mrf.mxu0
        %v999 = vadd.f32 %v886, %v998
        %1000 = vmatmul.f32.gmra.mxu0 %v356
        %v1001 = vpop.f32.mrf.mxu0
        %v1002 = vadd.f32 %v889, %v1001
        %1003 = vmatmul.f32.gmra.mxu0 %v357
        %v1004 = vpop.f32.mrf.mxu0
        %v1005 = vadd.f32 %v892, %v1004
        %1006 = vmatmul.f32.gmra.mxu0 %v358
        %v1007 = vpop.f32.mrf.mxu0
        %v1008 = vadd.f32 %v895, %v1007
        %1009 = vmatmul.f32.gmra.mxu0 %v359
        %v1010 = vpop.f32.mrf.mxu0
        %v1011 = vadd.f32 %v898, %v1010
        %1012 = vmatmul.f32.gmra.mxu0 %v360
        %v1013 = vpop.f32.mrf.mxu0
        %v1014 = vadd.f32 %v901, %v1013
        %1015 = vmatmul.f32.gmra.mxu0 %v361
        %v1016 = vpop.f32.mrf.mxu0
        %v1017 = vadd.f32 %v904, %v1016
        %1018 = vmatmul.f32.gmra.mxu0 %v362
        %v1019 = vpop.f32.mrf.mxu0
        %v1020 = vadd.f32 %v907, %v1019
        %1021 = vmatmul.f32.gmra.mxu0 %v363
        %v1022 = vpop.f32.mrf.mxu0
        %v1023 = vadd.f32 %v910, %v1022
        %1024 = vmatmul.f32.gmra.mxu0 %v364
        %v1025 = vpop.f32.mrf.mxu0
        %v1026 = vadd.f32 %v913, %v1025
        %1027 = vmatmul.f32.gmra.mxu0 %v365
        %v1028 = vpop.f32.mrf.mxu0
        %v1029 = vadd.f32 %v916, %v1028
        %1030 = vmatmul.f32.gmra.mxu0 %v366
        %v1031 = vpop.f32.mrf.mxu0
        %v1032 = vadd.f32 %v919, %v1031
        %1033 = vmatmul.f32.gmra.mxu0 %v367
        %v1034 = vpop.f32.mrf.mxu0
        %v1035 = vadd.f32 %v922, %v1034
        %1036 = vmatmul.f32.gmra.mxu0 %v368
        %v1037 = vpop.f32.mrf.mxu0
        %v1038 = vadd.f32 %v925, %v1037
        %1039 = vmatmul.f32.gmra.mxu0 %v369
        %v1040 = vpop.f32.mrf.mxu0
        %v1041 = vadd.f32 %v928, %v1040
        %1042 = vmatmul.f32.gmra.mxu0 %v370
        %v1043 = vpop.f32.mrf.mxu0
        %v1044 = vadd.f32 %v931, %v1043
        %1045 = vmatmul.f32.gmra.mxu0 %v371
        %v1046 = vpop.f32.mrf.mxu0
        %v1047 = vadd.f32 %v934, %v1046
        %1048 = vmatmul.f32.gmra.mxu0 %v372
        %v1049 = vpop.f32.mrf.mxu0
        %v1050 = vadd.f32 %v937, %v1049
        %1051 = vmatmul.f32.gmra.mxu0 %v373
        %v1052 = vpop.f32.mrf.mxu0
        %v1053 = vadd.f32 %v940, %v1052
        %1054 = vdwg.mxu0
        %1055 = vmatpush.msra.mxu0 %v631
        %1056 = vmatpush.msra.mxu0 %v630
        %1057 = vmatpush.msra.mxu0 %v629
        %1058 = vmatpush.msra.mxu0 %v628
        %1059 = vmatpush.msra.mxu0 %v627
        %1060 = vmatpush.msra.mxu0 %v626
        %1061 = vmatpush.msra.mxu0 %v625
        %1062 = vmatpush.msra.mxu0 %v624
        %1063 = vmatpush.msra.mxu0 %v623
        %1064 = vmatpush.msra.mxu0 %v622
        %1065 = vmatpush.msra.mxu0 %v621
        %1066 = vmatpush.msra.mxu0 %v620
        %1067 = vmatpush.msra.mxu0 %v619
        %1068 = vmatpush.msra.mxu0 %v618
        %1069 = vmatpush.msra.mxu0 %v617
        %1070 = vmatpush.msra.mxu0 %v616
        %1071 = vmatmul.f32.gmra.mxu0 %v375
        %v1072 = vpop.f32.mrf.mxu0
        %v1073 = vadd.f32 %v960, %v1072
        %1074 = vmatmul.f32.gmra.mxu0 %v376
        %v1075 = vpop.f32.mrf.mxu0
        %v1076 = vadd.f32 %v963, %v1075
        %1077 = vmatmul.f32.gmra.mxu0 %v377
        %v1078 = vpop.f32.mrf.mxu0
        %v1079 = vadd.f32 %v966, %v1078
        %1080 = vmatmul.f32.gmra.mxu0 %v378
        %v1081 = vpop.f32.mrf.mxu0
        %v1082 = vadd.f32 %v969, %v1081
        %1083 = vmatmul.f32.gmra.mxu0 %v379
        %v1084 = vpop.f32.mrf.mxu0
        %v1085 = vadd.f32 %v972, %v1084
        %1086 = vmatmul.f32.gmra.mxu0 %v380
        %v1087 = vpop.f32.mrf.mxu0
        %v1088 = vadd.f32 %v975, %v1087
        %1089 = vmatmul.f32.gmra.mxu0 %v381
        %v1090 = vpop.f32.mrf.mxu0
        %v1091 = vadd.f32 %v978, %v1090
        %1092 = vmatmul.f32.gmra.mxu0 %v382
        %v1093 = vpop.f32.mrf.mxu0
        %v1094 = vadd.f32 %v981, %v1093
        %1095 = vmatmul.f32.gmra.mxu0 %v383
        %v1096 = vpop.f32.mrf.mxu0
        %v1097 = vadd.f32 %v984, %v1096
        %1098 = vmatmul.f32.gmra.mxu0 %v384
        %v1099 = vpop.f32.mrf.mxu0
        %v1100 = vadd.f32 %v987, %v1099
        %1101 = vmatmul.f32.gmra.mxu0 %v385
        %v1102 = vpop.f32.mrf.mxu0
        %v1103 = vadd.f32 %v990, %v1102
        %1104 = vmatmul.f32.gmra.mxu0 %v386
        %v1105 = vpop.f32.mrf.mxu0
        %v1106 = vadd.f32 %v993, %v1105
        %1107 = vmatmul.f32.gmra.mxu0 %v387
        %v1108 = vpop.f32.mrf.mxu0
        %v1109 = vadd.f32 %v996, %v1108
        %1110 = vmatmul.f32.gmra.mxu0 %v388
        %v1111 = vpop.f32.mrf.mxu0
        %v1112 = vadd.f32 %v999, %v1111
        %1113 = vmatmul.f32.gmra.mxu0 %v389
        %v1114 = vpop.f32.mrf.mxu0
        %v1115 = vadd.f32 %v1002, %v1114
        %1116 = vmatmul.f32.gmra.mxu0 %v390
        %v1117 = vpop.f32.mrf.mxu0
        %v1118 = vadd.f32 %v1005, %v1117
        %1119 = vmatmul.f32.gmra.mxu0 %v391
        %v1120 = vpop.f32.mrf.mxu0
        %v1121 = vadd.f32 %v1008, %v1120
        %1122 = vmatmul.f32.gmra.mxu0 %v392
        %v1123 = vpop.f32.mrf.mxu0
        %v1124 = vadd.f32 %v1011, %v1123
        %1125 = vmatmul.f32.gmra.mxu0 %v393
        %v1126 = vpop.f32.mrf.mxu0
        %v1127 = vadd.f32 %v1014, %v1126
        %1128 = vmatmul.f32.gmra.mxu0 %v394
        %v1129 = vpop.f32.mrf.mxu0
        %v1130 = vadd.f32 %v1017, %v1129
        %1131 = vmatmul.f32.gmra.mxu0 %v395
        %v1132 = vpop.f32.mrf.mxu0
        %v1133 = vadd.f32 %v1020, %v1132
        %1134 = vmatmul.f32.gmra.mxu0 %v396
        %v1135 = vpop.f32.mrf.mxu0
        %v1136 = vadd.f32 %v1023, %v1135
        %1137 = vmatmul.f32.gmra.mxu0 %v397
        %v1138 = vpop.f32.mrf.mxu0
        %v1139 = vadd.f32 %v1026, %v1138
        %1140 = vmatmul.f32.gmra.mxu0 %v398
        %v1141 = vpop.f32.mrf.mxu0
        %v1142 = vadd.f32 %v1029, %v1141
        %1143 = vmatmul.f32.gmra.mxu0 %v399
        %v1144 = vpop.f32.mrf.mxu0
        %v1145 = vadd.f32 %v1032, %v1144
        %1146 = vmatmul.f32.gmra.mxu0 %v400
        %v1147 = vpop.f32.mrf.mxu0
        %v1148 = vadd.f32 %v1035, %v1147
        %1149 = vmatmul.f32.gmra.mxu0 %v401
        %v1150 = vpop.f32.mrf.mxu0
        %v1151 = vadd.f32 %v1038, %v1150
        %1152 = vmatmul.f32.gmra.mxu0 %v402
        %v1153 = vpop.f32.mrf.mxu0
        %v1154 = vadd.f32 %v1041, %v1153
        %1155 = vmatmul.f32.gmra.mxu0 %v403
        %v1156 = vpop.f32.mrf.mxu0
        %v1157 = vadd.f32 %v1044, %v1156
        %1158 = vmatmul.f32.gmra.mxu0 %v404
        %v1159 = vpop.f32.mrf.mxu0
        %v1160 = vadd.f32 %v1047, %v1159
        %1161 = vmatmul.f32.gmra.mxu0 %v405
        %v1162 = vpop.f32.mrf.mxu0
        %v1163 = vadd.f32 %v1050, %v1162
        %1164 = vmatmul.f32.gmra.mxu0 %v406
        %v1165 = vpop.f32.mrf.mxu0
        %v1166 = vadd.f32 %v1053, %v1165
        %1167 = vdwg.mxu0
        %1168 = vmatpush.msra.mxu0 %v647
        %1169 = vmatpush.msra.mxu0 %v646
        %1170 = vmatpush.msra.mxu0 %v645
        %1171 = vmatpush.msra.mxu0 %v644
        %1172 = vmatpush.msra.mxu0 %v643
        %1173 = vmatpush.msra.mxu0 %v642
        %1174 = vmatpush.msra.mxu0 %v641
        %1175 = vmatpush.msra.mxu0 %v640
        %1176 = vmatpush.msra.mxu0 %v639
        %1177 = vmatpush.msra.mxu0 %v638
        %1178 = vmatpush.msra.mxu0 %v637
        %1179 = vmatpush.msra.mxu0 %v636
        %1180 = vmatpush.msra.mxu0 %v635
        %1181 = vmatpush.msra.mxu0 %v634
        %1182 = vmatpush.msra.mxu0 %v633
        %1183 = vmatpush.msra.mxu0 %v632
        %1184 = vmatmul.f32.gmra.mxu0 %v407
        %v1185 = vpop.f32.mrf.mxu0
        %v1186 = vadd.f32 %v1073, %v1185
        %1187 = vmatmul.f32.gmra.mxu0 %v408
        %v1188 = vpop.f32.mrf.mxu0
        %v1189 = vadd.f32 %v1076, %v1188
        %1190 = vmatmul.f32.gmra.mxu0 %v409
        %v1191 = vpop.f32.mrf.mxu0
        %v1192 = vadd.f32 %v1079, %v1191
        %1193 = vmatmul.f32.gmra.mxu0 %v410
        %v1194 = vpop.f32.mrf.mxu0
        %v1195 = vadd.f32 %v1082, %v1194
        %1196 = vmatmul.f32.gmra.mxu0 %v411
        %v1197 = vpop.f32.mrf.mxu0
        %v1198 = vadd.f32 %v1085, %v1197
        %1199 = vmatmul.f32.gmra.mxu0 %v412
        %v1200 = vpop.f32.mrf.mxu0
        %v1201 = vadd.f32 %v1088, %v1200
        %1202 = vmatmul.f32.gmra.mxu0 %v413
        %v1203 = vpop.f32.mrf.mxu0
        %v1204 = vadd.f32 %v1091, %v1203
        %1205 = vmatmul.f32.gmra.mxu0 %v414
        %v1206 = vpop.f32.mrf.mxu0
        %v1207 = vadd.f32 %v1094, %v1206
        %1208 = vmatmul.f32.gmra.mxu0 %v415
        %v1209 = vpop.f32.mrf.mxu0
        %v1210 = vadd.f32 %v1097, %v1209
        %1211 = vmatmul.f32.gmra.mxu0 %v416
        %v1212 = vpop.f32.mrf.mxu0
        %v1213 = vadd.f32 %v1100, %v1212
        %1214 = vmatmul.f32.gmra.mxu0 %v417
        %v1215 = vpop.f32.mrf.mxu0
        %v1216 = vadd.f32 %v1103, %v1215
        %1217 = vmatmul.f32.gmra.mxu0 %v418
        %v1218 = vpop.f32.mrf.mxu0
        %v1219 = vadd.f32 %v1106, %v1218
        %1220 = vmatmul.f32.gmra.mxu0 %v419
        %v1221 = vpop.f32.mrf.mxu0
        %v1222 = vadd.f32 %v1109, %v1221
        %1223 = vmatmul.f32.gmra.mxu0 %v420
        %v1224 = vpop.f32.mrf.mxu0
        %v1225 = vadd.f32 %v1112, %v1224
        %1226 = vmatmul.f32.gmra.mxu0 %v421
        %v1227 = vpop.f32.mrf.mxu0
        %v1228 = vadd.f32 %v1115, %v1227
        %1229 = vmatmul.f32.gmra.mxu0 %v422
        %v1230 = vpop.f32.mrf.mxu0
        %v1231 = vadd.f32 %v1118, %v1230
        %1232 = vmatmul.f32.gmra.mxu0 %v423
        %v1233 = vpop.f32.mrf.mxu0
        %v1234 = vadd.f32 %v1121, %v1233
        %1235 = vmatmul.f32.gmra.mxu0 %v424
        %v1236 = vpop.f32.mrf.mxu0
        %v1237 = vadd.f32 %v1124, %v1236
        %1238 = vmatmul.f32.gmra.mxu0 %v425
        %v1239 = vpop.f32.mrf.mxu0
        %v1240 = vadd.f32 %v1127, %v1239
        %1241 = vmatmul.f32.gmra.mxu0 %v426
        %v1242 = vpop.f32.mrf.mxu0
        %v1243 = vadd.f32 %v1130, %v1242
        %1244 = vmatmul.f32.gmra.mxu0 %v427
        %v1245 = vpop.f32.mrf.mxu0
        %v1246 = vadd.f32 %v1133, %v1245
        %1247 = vmatmul.f32.gmra.mxu0 %v428
        %v1248 = vpop.f32.mrf.mxu0
        %v1249 = vadd.f32 %v1136, %v1248
        %1250 = vmatmul.f32.gmra.mxu0 %v429
        %v1251 = vpop.f32.mrf.mxu0
        %v1252 = vadd.f32 %v1139, %v1251
        %1253 = vmatmul.f32.gmra.mxu0 %v430
        %v1254 = vpop.f32.mrf.mxu0
        %v1255 = vadd.f32 %v1142, %v1254
        %1256 = vmatmul.f32.gmra.mxu0 %v431
        %v1257 = vpop.f32.mrf.mxu0
        %v1258 = vadd.f32 %v1145, %v1257
        %1259 = vmatmul.f32.gmra.mxu0 %v432
        %v1260 = vpop.f32.mrf.mxu0
        %v1261 = vadd.f32 %v1148, %v1260
        %1262 = vmatmul.f32.gmra.mxu0 %v433
        %v1263 = vpop.f32.mrf.mxu0
        %v1264 = vadd.f32 %v1151, %v1263
        %1265 = vmatmul.f32.gmra.mxu0 %v434
        %v1266 = vpop.f32.mrf.mxu0
        %v1267 = vadd.f32 %v1154, %v1266
        %1268 = vmatmul.f32.gmra.mxu0 %v435
        %v1269 = vpop.f32.mrf.mxu0
        %v1270 = vadd.f32 %v1157, %v1269
        %1271 = vmatmul.f32.gmra.mxu0 %v436
        %v1272 = vpop.f32.mrf.mxu0
        %v1273 = vadd.f32 %v1160, %v1272
        %1274 = vmatmul.f32.gmra.mxu0 %v437
        %v1275 = vpop.f32.mrf.mxu0
        %v1276 = vadd.f32 %v1163, %v1275
        %1277 = vmatmul.f32.gmra.mxu0 %v438
        %v1278 = vpop.f32.mrf.mxu0
        %v1279 = vadd.f32 %v1166, %v1278
        %1280 = vdwg.mxu0
        %1281 = vmatpush.msra.mxu0 %v663
        %1282 = vmatpush.msra.mxu0 %v662
        %1283 = vmatpush.msra.mxu0 %v661
        %1284 = vmatpush.msra.mxu0 %v660
        %1285 = vmatpush.msra.mxu0 %v659
        %1286 = vmatpush.msra.mxu0 %v658
        %1287 = vmatpush.msra.mxu0 %v657
        %1288 = vmatpush.msra.mxu0 %v656
        %1289 = vmatpush.msra.mxu0 %v655
        %1290 = vmatpush.msra.mxu0 %v654
        %1291 = vmatpush.msra.mxu0 %v653
        %1292 = vmatpush.msra.mxu0 %v652
        %1293 = vmatpush.msra.mxu0 %v651
        %1294 = vmatpush.msra.mxu0 %v650
        %1295 = vmatpush.msra.mxu0 %v649
        %1296 = vmatpush.msra.mxu0 %v648
        %1297 = vmatmul.f32.gmra.mxu0 %v439
        %v1298 = vpop.f32.mrf.mxu0
        %v1299 = vadd.f32 %v1186, %v1298
        %1300 = vmatmul.f32.gmra.mxu0 %v440
        %v1301 = vpop.f32.mrf.mxu0
        %v1302 = vadd.f32 %v1189, %v1301
        %1303 = vmatmul.f32.gmra.mxu0 %v441
        %v1304 = vpop.f32.mrf.mxu0
        %v1305 = vadd.f32 %v1192, %v1304
        %1306 = vmatmul.f32.gmra.mxu0 %v442
        %v1307 = vpop.f32.mrf.mxu0
        %v1308 = vadd.f32 %v1195, %v1307
        %1309 = vmatmul.f32.gmra.mxu0 %v443
        %v1310 = vpop.f32.mrf.mxu0
        %v1311 = vadd.f32 %v1198, %v1310
        %1312 = vmatmul.f32.gmra.mxu0 %v444
        %v1313 = vpop.f32.mrf.mxu0
        %v1314 = vadd.f32 %v1201, %v1313
        %1315 = vmatmul.f32.gmra.mxu0 %v445
        %v1316 = vpop.f32.mrf.mxu0
        %v1317 = vadd.f32 %v1204, %v1316
        %1318 = vmatmul.f32.gmra.mxu0 %v446
        %v1319 = vpop.f32.mrf.mxu0
        %v1320 = vadd.f32 %v1207, %v1319
        %1321 = vmatmul.f32.gmra.mxu0 %v447
        %v1322 = vpop.f32.mrf.mxu0
        %v1323 = vadd.f32 %v1210, %v1322
        %1324 = vmatmul.f32.gmra.mxu0 %v448
        %v1325 = vpop.f32.mrf.mxu0
        %v1326 = vadd.f32 %v1213, %v1325
        %1327 = vmatmul.f32.gmra.mxu0 %v449
        %v1328 = vpop.f32.mrf.mxu0
        %v1329 = vadd.f32 %v1216, %v1328
        %1330 = vmatmul.f32.gmra.mxu0 %v450
        %v1331 = vpop.f32.mrf.mxu0
        %v1332 = vadd.f32 %v1219, %v1331
        %1333 = vmatmul.f32.gmra.mxu0 %v451
        %v1334 = vpop.f32.mrf.mxu0
        %v1335 = vadd.f32 %v1222, %v1334
        %1336 = vmatmul.f32.gmra.mxu0 %v452
        %v1337 = vpop.f32.mrf.mxu0
        %v1338 = vadd.f32 %v1225, %v1337
        %1339 = vmatmul.f32.gmra.mxu0 %v453
        %v1340 = vpop.f32.mrf.mxu0
        %v1341 = vadd.f32 %v1228, %v1340
        %1342 = vmatmul.f32.gmra.mxu0 %v454
        %v1343 = vpop.f32.mrf.mxu0
        %v1344 = vadd.f32 %v1231, %v1343
        %1345 = vmatmul.f32.gmra.mxu0 %v455
        %v1346 = vpop.f32.mrf.mxu0
        %v1347 = vadd.f32 %v1234, %v1346
        %1348 = vmatmul.f32.gmra.mxu0 %v456
        %v1349 = vpop.f32.mrf.mxu0
        %v1350 = vadd.f32 %v1237, %v1349
        %1351 = vmatmul.f32.gmra.mxu0 %v457
        %v1352 = vpop.f32.mrf.mxu0
        %v1353 = vadd.f32 %v1240, %v1352
        %1354 = vmatmul.f32.gmra.mxu0 %v458
        %v1355 = vpop.f32.mrf.mxu0
        %v1356 = vadd.f32 %v1243, %v1355
        %1357 = vmatmul.f32.gmra.mxu0 %v459
        %v1358 = vpop.f32.mrf.mxu0
        %v1359 = vadd.f32 %v1246, %v1358
        %1360 = vmatmul.f32.gmra.mxu0 %v460
        %v1361 = vpop.f32.mrf.mxu0
        %v1362 = vadd.f32 %v1249, %v1361
        %1363 = vmatmul.f32.gmra.mxu0 %v461
        %v1364 = vpop.f32.mrf.mxu0
        %v1365 = vadd.f32 %v1252, %v1364
        %1366 = vmatmul.f32.gmra.mxu0 %v462
        %v1367 = vpop.f32.mrf.mxu0
        %v1368 = vadd.f32 %v1255, %v1367
        %1369 = vmatmul.f32.gmra.mxu0 %v463
        %v1370 = vpop.f32.mrf.mxu0
        %v1371 = vadd.f32 %v1258, %v1370
        %1372 = vmatmul.f32.gmra.mxu0 %v464
        %v1373 = vpop.f32.mrf.mxu0
        %v1374 = vadd.f32 %v1261, %v1373
        %1375 = vmatmul.f32.gmra.mxu0 %v465
        %v1376 = vpop.f32.mrf.mxu0
        %v1377 = vadd.f32 %v1264, %v1376
        %1378 = vmatmul.f32.gmra.mxu0 %v466
        %v1379 = vpop.f32.mrf.mxu0
        %v1380 = vadd.f32 %v1267, %v1379
        %1381 = vmatmul.f32.gmra.mxu0 %v467
        %v1382 = vpop.f32.mrf.mxu0
        %v1383 = vadd.f32 %v1270, %v1382
        %1384 = vmatmul.f32.gmra.mxu0 %v468
        %v1385 = vpop.f32.mrf.mxu0
        %v1386 = vadd.f32 %v1273, %v1385
        %1387 = vmatmul.f32.gmra.mxu0 %v469
        %v1388 = vpop.f32.mrf.mxu0
        %v1389 = vadd.f32 %v1276, %v1388
        %1390 = vmatmul.f32.gmra.mxu0 %v470
        %v1391 = vpop.f32.mrf.mxu0
        %v1392 = vadd.f32 %v1279, %v1391
        %1393 = vdwg.mxu0
        %1394 = vmatpush.msra.mxu0 %v679
        %1395 = vmatpush.msra.mxu0 %v678
        %1396 = vmatpush.msra.mxu0 %v677
        %1397 = vmatpush.msra.mxu0 %v676
        %1398 = vmatpush.msra.mxu0 %v675
        %1399 = vmatpush.msra.mxu0 %v674
        %1400 = vmatpush.msra.mxu0 %v673
        %1401 = vmatpush.msra.mxu0 %v672
        %1402 = vmatpush.msra.mxu0 %v671
        %1403 = vmatpush.msra.mxu0 %v670
        %1404 = vmatpush.msra.mxu0 %v669
        %1405 = vmatpush.msra.mxu0 %v668
        %1406 = vmatpush.msra.mxu0 %v667
        %1407 = vmatpush.msra.mxu0 %v666
        %1408 = vmatpush.msra.mxu0 %v665
        %1409 = vmatpush.msra.mxu0 %v664
        %1410 = vmatmul.f32.gmra.mxu0 %v472
        %v1411 = vpop.f32.mrf.mxu0
        %v1412 = vadd.f32 %v1299, %v1411
        %1413 = vmatmul.f32.gmra.mxu0 %v473
        %v1414 = vpop.f32.mrf.mxu0
        %v1415 = vadd.f32 %v1302, %v1414
        %1416 = vmatmul.f32.gmra.mxu0 %v474
        %v1417 = vpop.f32.mrf.mxu0
        %v1418 = vadd.f32 %v1305, %v1417
        %1419 = vmatmul.f32.gmra.mxu0 %v475
        %v1420 = vpop.f32.mrf.mxu0
        %v1421 = vadd.f32 %v1308, %v1420
        %1422 = vmatmul.f32.gmra.mxu0 %v476
        %v1423 = vpop.f32.mrf.mxu0
        %v1424 = vadd.f32 %v1311, %v1423
        %1425 = vmatmul.f32.gmra.mxu0 %v477
        %v1426 = vpop.f32.mrf.mxu0
        %v1427 = vadd.f32 %v1314, %v1426
        %1428 = vmatmul.f32.gmra.mxu0 %v478
        %v1429 = vpop.f32.mrf.mxu0
        %v1430 = vadd.f32 %v1317, %v1429
        %1431 = vmatmul.f32.gmra.mxu0 %v479
        %v1432 = vpop.f32.mrf.mxu0
        %v1433 = vadd.f32 %v1320, %v1432
        %1434 = vmatmul.f32.gmra.mxu0 %v480
        %v1435 = vpop.f32.mrf.mxu0
        %v1436 = vadd.f32 %v1323, %v1435
        %1437 = vmatmul.f32.gmra.mxu0 %v481
        %v1438 = vpop.f32.mrf.mxu0
        %v1439 = vadd.f32 %v1326, %v1438
        %1440 = vmatmul.f32.gmra.mxu0 %v482
        %v1441 = vpop.f32.mrf.mxu0
        %v1442 = vadd.f32 %v1329, %v1441
        %1443 = vmatmul.f32.gmra.mxu0 %v483
        %v1444 = vpop.f32.mrf.mxu0
        %v1445 = vadd.f32 %v1332, %v1444
        %1446 = vmatmul.f32.gmra.mxu0 %v484
        %v1447 = vpop.f32.mrf.mxu0
        %v1448 = vadd.f32 %v1335, %v1447
        %1449 = vmatmul.f32.gmra.mxu0 %v485
        %v1450 = vpop.f32.mrf.mxu0
        %v1451 = vadd.f32 %v1338, %v1450
        %1452 = vmatmul.f32.gmra.mxu0 %v486
        %v1453 = vpop.f32.mrf.mxu0
        %v1454 = vadd.f32 %v1341, %v1453
        %1455 = vmatmul.f32.gmra.mxu0 %v487
        %v1456 = vpop.f32.mrf.mxu0
        %v1457 = vadd.f32 %v1344, %v1456
        %1458 = vmatmul.f32.gmra.mxu0 %v488
        %v1459 = vpop.f32.mrf.mxu0
        %v1460 = vadd.f32 %v1347, %v1459
        %1461 = vmatmul.f32.gmra.mxu0 %v489
        %v1462 = vpop.f32.mrf.mxu0
        %v1463 = vadd.f32 %v1350, %v1462
        %1464 = vmatmul.f32.gmra.mxu0 %v490
        %v1465 = vpop.f32.mrf.mxu0
        %v1466 = vadd.f32 %v1353, %v1465
        %1467 = vmatmul.f32.gmra.mxu0 %v491
        %v1468 = vpop.f32.mrf.mxu0
        %v1469 = vadd.f32 %v1356, %v1468
        %1470 = vmatmul.f32.gmra.mxu0 %v492
        %v1471 = vpop.f32.mrf.mxu0
        %v1472 = vadd.f32 %v1359, %v1471
        %1473 = vmatmul.f32.gmra.mxu0 %v493
        %v1474 = vpop.f32.mrf.mxu0
        %v1475 = vadd.f32 %v1362, %v1474
        %1476 = vmatmul.f32.gmra.mxu0 %v494
        %v1477 = vpop.f32.mrf.mxu0
        %v1478 = vadd.f32 %v1365, %v1477
        %1479 = vmatmul.f32.gmra.mxu0 %v495
        %v1480 = vpop.f32.mrf.mxu0
        %v1481 = vadd.f32 %v1368, %v1480
        %1482 = vmatmul.f32.gmra.mxu0 %v496
        %v1483 = vpop.f32.mrf.mxu0
        %v1484 = vadd.f32 %v1371, %v1483
        %1485 = vmatmul.f32.gmra.mxu0 %v497
        %v1486 = vpop.f32.mrf.mxu0
        %v1487 = vadd.f32 %v1374, %v1486
        %1488 = vmatmul.f32.gmra.mxu0 %v498
        %v1489 = vpop.f32.mrf.mxu0
        %v1490 = vadd.f32 %v1377, %v1489
        %1491 = vmatmul.f32.gmra.mxu0 %v499
        %v1492 = vpop.f32.mrf.mxu0
        %v1493 = vadd.f32 %v1380, %v1492
        %1494 = vmatmul.f32.gmra.mxu0 %v500
        %v1495 = vpop.f32.mrf.mxu0
        %v1496 = vadd.f32 %v1383, %v1495
        %1497 = vmatmul.f32.gmra.mxu0 %v501
        %v1498 = vpop.f32.mrf.mxu0
        %v1499 = vadd.f32 %v1386, %v1498
        %1500 = vmatmul.f32.gmra.mxu0 %v502
        %v1501 = vpop.f32.mrf.mxu0
        %v1502 = vadd.f32 %v1389, %v1501
        %1503 = vmatmul.f32.gmra.mxu0 %v503
        %v1504 = vpop.f32.mrf.mxu0
        %v1505 = vadd.f32 %v1392, %v1504
        %1506 = vdwg.mxu0
        %1507 = vmatpush.msra.mxu0 %v695
        %1508 = vmatpush.msra.mxu0 %v694
        %1509 = vmatpush.msra.mxu0 %v693
        %1510 = vmatpush.msra.mxu0 %v692
        %1511 = vmatpush.msra.mxu0 %v691
        %1512 = vmatpush.msra.mxu0 %v690
        %1513 = vmatpush.msra.mxu0 %v689
        %1514 = vmatpush.msra.mxu0 %v688
        %1515 = vmatpush.msra.mxu0 %v687
        %1516 = vmatpush.msra.mxu0 %v686
        %1517 = vmatpush.msra.mxu0 %v685
        %1518 = vmatpush.msra.mxu0 %v684
        %1519 = vmatpush.msra.mxu0 %v683
        %1520 = vmatpush.msra.mxu0 %v682
        %1521 = vmatpush.msra.mxu0 %v681
        %1522 = vmatpush.msra.mxu0 %v680
        %1523 = vmatmul.f32.gmra.mxu0 %v504
        %v1524 = vpop.f32.mrf.mxu0
        %v1525 = vadd.f32 %v1412, %v1524
        %1526 = vmatmul.f32.gmra.mxu0 %v505
        %v1527 = vpop.f32.mrf.mxu0
        %v1528 = vadd.f32 %v1415, %v1527
        %1529 = vmatmul.f32.gmra.mxu0 %v506
        %v1530 = vpop.f32.mrf.mxu0
        %v1531 = vadd.f32 %v1418, %v1530
        %1532 = vmatmul.f32.gmra.mxu0 %v507
        %v1533 = vpop.f32.mrf.mxu0
        %v1534 = vadd.f32 %v1421, %v1533
        %1535 = vmatmul.f32.gmra.mxu0 %v508
        %v1536 = vpop.f32.mrf.mxu0
        %v1537 = vadd.f32 %v1424, %v1536
        %1538 = vmatmul.f32.gmra.mxu0 %v509
        %v1539 = vpop.f32.mrf.mxu0
        %v1540 = vadd.f32 %v1427, %v1539
        %1541 = vmatmul.f32.gmra.mxu0 %v510
        %v1542 = vpop.f32.mrf.mxu0
        %v1543 = vadd.f32 %v1430, %v1542
        %1544 = vmatmul.f32.gmra.mxu0 %v511
        %v1545 = vpop.f32.mrf.mxu0
        %v1546 = vadd.f32 %v1433, %v1545
        %1547 = vmatmul.f32.gmra.mxu0 %v512
        %v1548 = vpop.f32.mrf.mxu0
        %v1549 = vadd.f32 %v1436, %v1548
        %1550 = vmatmul.f32.gmra.mxu0 %v513
        %v1551 = vpop.f32.mrf.mxu0
        %v1552 = vadd.f32 %v1439, %v1551
        %1553 = vmatmul.f32.gmra.mxu0 %v514
        %v1554 = vpop.f32.mrf.mxu0
        %v1555 = vadd.f32 %v1442, %v1554
        %1556 = vmatmul.f32.gmra.mxu0 %v515
        %v1557 = vpop.f32.mrf.mxu0
        %v1558 = vadd.f32 %v1445, %v1557
        %1559 = vmatmul.f32.gmra.mxu0 %v516
        %v1560 = vpop.f32.mrf.mxu0
        %v1561 = vadd.f32 %v1448, %v1560
        %1562 = vmatmul.f32.gmra.mxu0 %v517
        %v1563 = vpop.f32.mrf.mxu0
        %v1564 = vadd.f32 %v1451, %v1563
        %1565 = vmatmul.f32.gmra.mxu0 %v518
        %v1566 = vpop.f32.mrf.mxu0
        %v1567 = vadd.f32 %v1454, %v1566
        %1568 = vmatmul.f32.gmra.mxu0 %v519
        %v1569 = vpop.f32.mrf.mxu0
        %v1570 = vadd.f32 %v1457, %v1569
        %1571 = vmatmul.f32.gmra.mxu0 %v520
        %v1572 = vpop.f32.mrf.mxu0
        %v1573 = vadd.f32 %v1460, %v1572
        %1574 = vmatmul.f32.gmra.mxu0 %v521
        %v1575 = vpop.f32.mrf.mxu0
        %v1576 = vadd.f32 %v1463, %v1575
        %1577 = vmatmul.f32.gmra.mxu0 %v522
        %v1578 = vpop.f32.mrf.mxu0
        %v1579 = vadd.f32 %v1466, %v1578
        %1580 = vmatmul.f32.gmra.mxu0 %v523
        %v1581 = vpop.f32.mrf.mxu0
        %v1582 = vadd.f32 %v1469, %v1581
        %1583 = vmatmul.f32.gmra.mxu0 %v524
        %v1584 = vpop.f32.mrf.mxu0
        %v1585 = vadd.f32 %v1472, %v1584
        %1586 = vmatmul.f32.gmra.mxu0 %v525
        %v1587 = vpop.f32.mrf.mxu0
        %v1588 = vadd.f32 %v1475, %v1587
        %1589 = vmatmul.f32.gmra.mxu0 %v526
        %v1590 = vpop.f32.mrf.mxu0
        %v1591 = vadd.f32 %v1478, %v1590
        %1592 = vmatmul.f32.gmra.mxu0 %v527
        %v1593 = vpop.f32.mrf.mxu0
        %v1594 = vadd.f32 %v1481, %v1593
        %1595 = vmatmul.f32.gmra.mxu0 %v528
        %v1596 = vpop.f32.mrf.mxu0
        %v1597 = vadd.f32 %v1484, %v1596
        %1598 = vmatmul.f32.gmra.mxu0 %v529
        %v1599 = vpop.f32.mrf.mxu0
        %v1600 = vadd.f32 %v1487, %v1599
        %1601 = vmatmul.f32.gmra.mxu0 %v530
        %v1602 = vpop.f32.mrf.mxu0
        %v1603 = vadd.f32 %v1490, %v1602
        %1604 = vmatmul.f32.gmra.mxu0 %v531
        %v1605 = vpop.f32.mrf.mxu0
        %v1606 = vadd.f32 %v1493, %v1605
        %1607 = vmatmul.f32.gmra.mxu0 %v532
        %v1608 = vpop.f32.mrf.mxu0
        %v1609 = vadd.f32 %v1496, %v1608
        %1610 = vmatmul.f32.gmra.mxu0 %v533
        %v1611 = vpop.f32.mrf.mxu0
        %v1612 = vadd.f32 %v1499, %v1611
        %1613 = vmatmul.f32.gmra.mxu0 %v534
        %v1614 = vpop.f32.mrf.mxu0
        %v1615 = vadd.f32 %v1502, %v1614
        %1616 = vmatmul.f32.gmra.mxu0 %v535
        %v1617 = vpop.f32.mrf.mxu0
        %v1618 = vadd.f32 %v1505, %v1617
        %1619 = vdwg.mxu0
        %1620 = vmatpush.msra.mxu0 %v711
        %1621 = vmatpush.msra.mxu0 %v710
        %1622 = vmatpush.msra.mxu0 %v709
        %1623 = vmatpush.msra.mxu0 %v708
        %1624 = vmatpush.msra.mxu0 %v707
        %1625 = vmatpush.msra.mxu0 %v706
        %1626 = vmatpush.msra.mxu0 %v705
        %1627 = vmatpush.msra.mxu0 %v704
        %1628 = vmatpush.msra.mxu0 %v703
        %1629 = vmatpush.msra.mxu0 %v702
        %1630 = vmatpush.msra.mxu0 %v701
        %1631 = vmatpush.msra.mxu0 %v700
        %1632 = vmatpush.msra.mxu0 %v699
        %1633 = vmatpush.msra.mxu0 %v698
        %1634 = vmatpush.msra.mxu0 %v697
        %1635 = vmatpush.msra.mxu0 %v696
        %1636 = vmatmul.f32.gmra.mxu0 %v536
        %v1637 = vpop.f32.mrf.mxu0
        %v1638 = vadd.f32 %v1525, %v1637
        %1639 = vmatmul.f32.gmra.mxu0 %v537
        %v1640 = vpop.f32.mrf.mxu0
        %v1641 = vadd.f32 %v1528, %v1640
        %1642 = vmatmul.f32.gmra.mxu0 %v538
        %v1643 = vpop.f32.mrf.mxu0
        %v1644 = vadd.f32 %v1531, %v1643
        %1645 = vmatmul.f32.gmra.mxu0 %v539
        %v1646 = vpop.f32.mrf.mxu0
        %v1647 = vadd.f32 %v1534, %v1646
        %1648 = vmatmul.f32.gmra.mxu0 %v540
        %v1649 = vpop.f32.mrf.mxu0
        %v1650 = vadd.f32 %v1537, %v1649
        %1651 = vmatmul.f32.gmra.mxu0 %v541
        %v1652 = vpop.f32.mrf.mxu0
        %v1653 = vadd.f32 %v1540, %v1652
        %1654 = vmatmul.f32.gmra.mxu0 %v542
        %v1655 = vpop.f32.mrf.mxu0
        %v1656 = vadd.f32 %v1543, %v1655
        %1657 = vmatmul.f32.gmra.mxu0 %v543
        %v1658 = vpop.f32.mrf.mxu0
        %v1659 = vadd.f32 %v1546, %v1658
        %1660 = vmatmul.f32.gmra.mxu0 %v544
        %v1661 = vpop.f32.mrf.mxu0
        %v1662 = vadd.f32 %v1549, %v1661
        %1663 = vmatmul.f32.gmra.mxu0 %v545
        %v1664 = vpop.f32.mrf.mxu0
        %v1665 = vadd.f32 %v1552, %v1664
        %1666 = vmatmul.f32.gmra.mxu0 %v546
        %v1667 = vpop.f32.mrf.mxu0
        %v1668 = vadd.f32 %v1555, %v1667
        %1669 = vmatmul.f32.gmra.mxu0 %v547
        %v1670 = vpop.f32.mrf.mxu0
        %v1671 = vadd.f32 %v1558, %v1670
        %1672 = vmatmul.f32.gmra.mxu0 %v548
        %v1673 = vpop.f32.mrf.mxu0
        %v1674 = vadd.f32 %v1561, %v1673
        %1675 = vmatmul.f32.gmra.mxu0 %v549
        %v1676 = vpop.f32.mrf.mxu0
        %v1677 = vadd.f32 %v1564, %v1676
        %1678 = vmatmul.f32.gmra.mxu0 %v550
        %v1679 = vpop.f32.mrf.mxu0
        %v1680 = vadd.f32 %v1567, %v1679
        %1681 = vmatmul.f32.gmra.mxu0 %v551
        %v1682 = vpop.f32.mrf.mxu0
        %v1683 = vadd.f32 %v1570, %v1682
        %1684 = vmatmul.f32.gmra.mxu0 %v552
        %v1685 = vpop.f32.mrf.mxu0
        %v1686 = vadd.f32 %v1573, %v1685
        %1687 = vmatmul.f32.gmra.mxu0 %v553
        %v1688 = vpop.f32.mrf.mxu0
        %v1689 = vadd.f32 %v1576, %v1688
        %1690 = vmatmul.f32.gmra.mxu0 %v554
        %v1691 = vpop.f32.mrf.mxu0
        %v1692 = vadd.f32 %v1579, %v1691
        %1693 = vmatmul.f32.gmra.mxu0 %v555
        %v1694 = vpop.f32.mrf.mxu0
        %v1695 = vadd.f32 %v1582, %v1694
        %1696 = vmatmul.f32.gmra.mxu0 %v556
        %v1697 = vpop.f32.mrf.mxu0
        %v1698 = vadd.f32 %v1585, %v1697
        %1699 = vmatmul.f32.gmra.mxu0 %v557
        %v1700 = vpop.f32.mrf.mxu0
        %v1701 = vadd.f32 %v1588, %v1700
        %1702 = vmatmul.f32.gmra.mxu0 %v558
        %v1703 = vpop.f32.mrf.mxu0
        %v1704 = vadd.f32 %v1591, %v1703
        %1705 = vmatmul.f32.gmra.mxu0 %v559
        %v1706 = vpop.f32.mrf.mxu0
        %v1707 = vadd.f32 %v1594, %v1706
        %1708 = vmatmul.f32.gmra.mxu0 %v560
        %v1709 = vpop.f32.mrf.mxu0
        %v1710 = vadd.f32 %v1597, %v1709
        %1711 = vmatmul.f32.gmra.mxu0 %v561
        %v1712 = vpop.f32.mrf.mxu0
        %v1713 = vadd.f32 %v1600, %v1712
        %1714 = vmatmul.f32.gmra.mxu0 %v562
        %v1715 = vpop.f32.mrf.mxu0
        %v1716 = vadd.f32 %v1603, %v1715
        %1717 = vmatmul.f32.gmra.mxu0 %v563
        %v1718 = vpop.f32.mrf.mxu0
        %v1719 = vadd.f32 %v1606, %v1718
        %1720 = vmatmul.f32.gmra.mxu0 %v564
        %v1721 = vpop.f32.mrf.mxu0
        %v1722 = vadd.f32 %v1609, %v1721
        %1723 = vmatmul.f32.gmra.mxu0 %v565
        %v1724 = vpop.f32.mrf.mxu0
        %v1725 = vadd.f32 %v1612, %v1724
        %1726 = vmatmul.f32.gmra.mxu0 %v566
        %v1727 = vpop.f32.mrf.mxu0
        %v1728 = vadd.f32 %v1615, %v1727
        %1729 = vmatmul.f32.gmra.mxu0 %v567
        %v1730 = vpop.f32.mrf.mxu0
        %v1731 = vadd.f32 %v1618, %v1730
        %1732 = vdwg.mxu0
        %v1733 = vmax.f32 %v1638, 0.0
        %v1734 = vmax.f32 %v1641, 0.0
        %v1735 = vmax.f32 %v1644, 0.0
        %v1736 = vmax.f32 %v1647, 0.0
        %v1737 = vmax.f32 %v1650, 0.0
        %v1738 = vmax.f32 %v1653, 0.0
        %v1739 = vmax.f32 %v1656, 0.0
        %v1740 = vmax.f32 %v1659, 0.0
        %v1741 = vmax.f32 %v1662, 0.0
        %v1742 = vmax.f32 %v1665, 0.0
        %v1743 = vmax.f32 %v1668, 0.0
        %v1744 = vmax.f32 %v1671, 0.0
        %v1745 = vmax.f32 %v1674, 0.0
        %v1746 = vmax.f32 %v1677, 0.0
        %v1747 = vmax.f32 %v1680, 0.0
        %v1748 = vmax.f32 %v1683, 0.0
        %v1749 = vmax.f32 %v1686, 0.0
        %v1750 = vmax.f32 %v1689, 0.0
        %v1751 = vmax.f32 %v1692, 0.0
        %v1752 = vmax.f32 %v1695, 0.0
        %v1753 = vmax.f32 %v1698, 0.0
        %v1754 = vmax.f32 %v1701, 0.0
        %v1755 = vmax.f32 %v1704, 0.0
        %v1756 = vmax.f32 %v1707, 0.0
        %v1757 = vmax.f32 %v1710, 0.0
        %v1758 = vmax.f32 %v1713, 0.0
        %v1759 = vmax.f32 %v1716, 0.0
        %v1760 = vmax.f32 %v1719, 0.0
        %v1761 = vmax.f32 %v1722, 0.0
        %v1762 = vmax.f32 %v1725, 0.0
        %v1763 = vmax.f32 %v1728, 0.0
        %v1764 = vmax.f32 %v1731, 0.0
        %vm1797 = vcmask 1040384
        %v1798 = vrot.slane %v1733, 7
        %v1799 = vrot.slane %v1734, 7
        %v1800 = vsel %vm1797, %v1798, %v1799
        %v1801 = vrot.slane %v1735, 7
        %v1802 = vrot.slane %v1736, 7
        %v1803 = vsel %vm1797, %v1801, %v1802
        %v1804 = vrot.slane %v1737, 7
        %v1805 = vrot.slane %v1738, 7
        %v1806 = vsel %vm1797, %v1804, %v1805
        %v1807 = vrot.slane %v1739, 7
        %v1808 = vrot.slane %v1740, 7
        %v1809 = vsel %vm1797, %v1807, %v1808
        %v1810 = vrot.slane %v1741, 7
        %v1811 = vrot.slane %v1742, 7
        %v1812 = vsel %vm1797, %v1810, %v1811
        %v1813 = vrot.slane %v1743, 7
        %v1814 = vrot.slane %v1744, 7
        %v1815 = vsel %vm1797, %v1813, %v1814
        %v1816 = vrot.slane %v1745, 7
        %v1817 = vrot.slane %v1746, 7
        %v1818 = vsel %vm1797, %v1816, %v1817
        %v1819 = vrot.slane %v1747, 7
        %v1820 = vrot.slane %v1748, 7
        %v1821 = vsel %vm1797, %v1819, %v1820
        %v1822 = vrot.slane %v1749, 7
        %v1823 = vrot.slane %v1750, 7
        %v1824 = vsel %vm1797, %v1822, %v1823
        %v1825 = vrot.slane %v1751, 7
        %v1826 = vrot.slane %v1752, 7
        %v1827 = vsel %vm1797, %v1825, %v1826
        %v1828 = vrot.slane %v1753, 7
        %v1829 = vrot.slane %v1754, 7
        %v1830 = vsel %vm1797, %v1828, %v1829
        %v1831 = vrot.slane %v1755, 7
        %v1832 = vrot.slane %v1756, 7
        %v1833 = vsel %vm1797, %v1831, %v1832
        %v1834 = vrot.slane %v1757, 7
        %v1835 = vrot.slane %v1758, 7
        %v1836 = vsel %vm1797, %v1834, %v1835
        %v1837 = vrot.slane %v1759, 7
        %v1838 = vrot.slane %v1760, 7
        %v1839 = vsel %vm1797, %v1837, %v1838
        %v1840 = vrot.slane %v1761, 7
        %v1841 = vrot.slane %v1762, 7
        %v1842 = vsel %vm1797, %v1840, %v1841
        %v1843 = vrot.slane %v1763, 7
        %v1844 = vrot.slane %v1764, 7
        %v1845 = vsel %vm1797, %v1843, %v1844
        %v1894 = vsel %vm1797, 0.0, %v1798
        %v1895 = vsel %vm1797, 0.0, %v1801
        %v1896 = vsel %vm1797, 0.0, %v1804
        %v1897 = vsel %vm1797, 0.0, %v1807
        %v1898 = vsel %vm1797, 0.0, %v1810
        %v1899 = vsel %vm1797, 0.0, %v1813
        %v1900 = vsel %vm1797, 0.0, %v1816
        %v1901 = vsel %vm1797, 0.0, %v1819
        %v1902 = vsel %vm1797, 0.0, %v1822
        %v1903 = vsel %vm1797, 0.0, %v1825
        %v1904 = vsel %vm1797, 0.0, %v1828
        %v1905 = vsel %vm1797, 0.0, %v1831
        %v1906 = vsel %vm1797, 0.0, %v1834
        %v1907 = vsel %vm1797, 0.0, %v1837
        %v1908 = vsel %vm1797, 0.0, %v1840
        %v1909 = vsel %vm1797, 0.0, %v1843
        %v1910 = vsel %vm1797, %v1799, 0.0
        %v1911 = vsel %vm1797, %v1802, 0.0
        %v1912 = vsel %vm1797, %v1805, 0.0
        %v1913 = vsel %vm1797, %v1808, 0.0
        %v1914 = vsel %vm1797, %v1811, 0.0
        %v1915 = vsel %vm1797, %v1814, 0.0
        %v1916 = vsel %vm1797, %v1817, 0.0
        %v1917 = vsel %vm1797, %v1820, 0.0
        %v1918 = vsel %vm1797, %v1823, 0.0
        %v1919 = vsel %vm1797, %v1826, 0.0
        %v1920 = vsel %vm1797, %v1829, 0.0
        %v1921 = vsel %vm1797, %v1832, 0.0
        %v1922 = vsel %vm1797, %v1835, 0.0
        %v1923 = vsel %vm1797, %v1838, 0.0
        %v1924 = vsel %vm1797, %v1841, 0.0
        %v1925 = vsel %vm1797, %v1844, 0.0
        %vm1957 = vcmask 1046528
        %v1958 = vrot.slane 0.0, 1
        %v1959 = vsel %vm1957, %v1958, %v1958
        %v1960 = vrot.slane %v1894, 1
        %v1961 = vrot.slane %v1800, 1
        %v1962 = vsel %vm1957, %v1960, %v1961
        %v1963 = vrot.slane %v1910, 1
        %v1964 = vsel %vm1957, %v1961, %v1963
        %v1965 = vrot.slane %v1895, 1
        %v1966 = vrot.slane %v1803, 1
        %v1967 = vsel %vm1957, %v1965, %v1966
        %v1968 = vrot.slane %v1911, 1
        %v1969 = vsel %vm1957, %v1966, %v1968
        %v1970 = vrot.slane %v1896, 1
        %v1971 = vrot.slane %v1806, 1
        %v1972 = vsel %vm1957, %v1970, %v1971
        %v1973 = vrot.slane %v1912, 1
        %v1974 = vsel %vm1957, %v1971, %v1973
        %v1975 = vrot.slane %v1897, 1
        %v1976 = vrot.slane %v1809, 1
        %v1977 = vsel %vm1957, %v1975, %v1976
        %v1978 = vrot.slane %v1913, 1
        %v1979 = vsel %vm1957, %v1976, %v1978
        %v1980 = vrot.slane %v1898, 1
        %v1981 = vrot.slane %v1812, 1
        %v1982 = vsel %vm1957, %v1980, %v1981
        %v1983 = vrot.slane %v1914, 1
        %v1984 = vsel %vm1957, %v1981, %v1983
        %v1985 = vrot.slane %v1899, 1
        %v1986 = vrot.slane %v1815, 1
        %v1987 = vsel %vm1957, %v1985, %v1986
        %v1988 = vrot.slane %v1915, 1
        %v1989 = vsel %vm1957, %v1986, %v1988
        %v1990 = vrot.slane %v1900, 1
        %v1991 = vrot.slane %v1818, 1
        %v1992 = vsel %vm1957, %v1990, %v1991
        %v1993 = vrot.slane %v1916, 1
        %v1994 = vsel %vm1957, %v1991, %v1993
        %v1995 = vrot.slane %v1901, 1
        %v1996 = vrot.slane %v1821, 1
        %v1997 = vsel %vm1957, %v1995, %v1996
        %v1998 = vrot.slane %v1917, 1
        %v1999 = vsel %vm1957, %v1996, %v1998
        %v2000 = vrot.slane %v1902, 1
        %v2001 = vrot.slane %v1824, 1
        %v2002 = vsel %vm1957, %v2000, %v2001
        %v2003 = vrot.slane %v1918, 1
        %v2004 = vsel %vm1957, %v2001, %v2003
        %v2005 = vrot.slane %v1903, 1
        %v2006 = vrot.slane %v1827, 1
        %v2007 = vsel %vm1957, %v2005, %v2006
        %v2008 = vrot.slane %v1919, 1
        %v2009 = vsel %vm1957, %v2006, %v2008
        %v2010 = vrot.slane %v1904, 1
        %v2011 = vrot.slane %v1830, 1
        %v2012 = vsel %vm1957, %v2010, %v2011
        %v2013 = vrot.slane %v1920, 1
        %v2014 = vsel %vm1957, %v2011, %v2013
        %v2015 = vrot.slane %v1905, 1
        %v2016 = vrot.slane %v1833, 1
        %v2017 = vsel %vm1957, %v2015, %v2016
        %v2018 = vrot.slane %v1921, 1
        %v2019 = vsel %vm1957, %v2016, %v2018
        %v2020 = vrot.slane %v1906, 1
        %v2021 = vrot.slane %v1836, 1
        %v2022 = vsel %vm1957, %v2020, %v2021
        %v2023 = vrot.slane %v1922, 1
        %v2024 = vsel %vm1957, %v2021, %v2023
        %v2025 = vrot.slane %v1907, 1
        %v2026 = vrot.slane %v1839, 1
        %v2027 = vsel %vm1957, %v2025, %v2026
        %v2028 = vrot.slane %v1923, 1
        %v2029 = vsel %vm1957, %v2026, %v2028
        %v2030 = vrot.slane %v1908, 1
        %v2031 = vrot.slane %v1842, 1
        %v2032 = vsel %vm1957, %v2030, %v2031
        %v2033 = vrot.slane %v1924, 1
        %v2034 = vsel %vm1957, %v2031, %v2033
        %vm2066 = vcmask 1045504
        %v2067 = vrot.slane 0.0, 2
        %v2068 = vsel %vm2066, %v2067, %v2067
        %v2069 = vrot.slane %v1894, 2
        %v2070 = vrot.slane %v1800, 2
        %v2071 = vsel %vm2066, %v2069, %v2070
        %v2072 = vrot.slane %v1910, 2
        %v2073 = vsel %vm2066, %v2070, %v2072
        %v2074 = vrot.slane %v1895, 2
        %v2075 = vrot.slane %v1803, 2
        %v2076 = vsel %vm2066, %v2074, %v2075
        %v2077 = vrot.slane %v1911, 2
        %v2078 = vsel %vm2066, %v2075, %v2077
        %v2079 = vrot.slane %v1896, 2
        %v2080 = vrot.slane %v1806, 2
        %v2081 = vsel %vm2066, %v2079, %v2080
        %v2082 = vrot.slane %v1912, 2
        %v2083 = vsel %vm2066, %v2080, %v2082
        %v2084 = vrot.slane %v1897, 2
        %v2085 = vrot.slane %v1809, 2
        %v2086 = vsel %vm2066, %v2084, %v2085
        %v2087 = vrot.slane %v1913, 2
        %v2088 = vsel %vm2066, %v2085, %v2087
        %v2089 = vrot.slane %v1898, 2
        %v2090 = vrot.slane %v1812, 2
        %v2091 = vsel %vm2066, %v2089, %v2090
        %v2092 = vrot.slane %v1914, 2
        %v2093 = vsel %vm2066, %v2090, %v2092
        %v2094 = vrot.slane %v1899, 2
        %v2095 = vrot.slane %v1815, 2
        %v2096 = vsel %vm2066, %v2094, %v2095
        %v2097 = vrot.slane %v1915, 2
        %v2098 = vsel %vm2066, %v2095, %v2097
        %v2099 = vrot.slane %v1900, 2
        %v2100 = vrot.slane %v1818, 2
        %v2101 = vsel %vm2066, %v2099, %v2100
        %v2102 = vrot.slane %v1916, 2
        %v2103 = vsel %vm2066, %v2100, %v2102
        %v2104 = vrot.slane %v1901, 2
        %v2105 = vrot.slane %v1821, 2
        %v2106 = vsel %vm2066, %v2104, %v2105
        %v2107 = vrot.slane %v1917, 2
        %v2108 = vsel %vm2066, %v2105, %v2107
        %v2109 = vrot.slane %v1902, 2
        %v2110 = vrot.slane %v1824, 2
        %v2111 = vsel %vm2066, %v2109, %v2110
        %v2112 = vrot.slane %v1918, 2
        %v2113 = vsel %vm2066, %v2110, %v2112
        %v2114 = vrot.slane %v1903, 2
        %v2115 = vrot.slane %v1827, 2
        %v2116 = vsel %vm2066, %v2114, %v2115
        %v2117 = vrot.slane %v1919, 2
        %v2118 = vsel %vm2066, %v2115, %v2117
        %v2119 = vrot.slane %v1904, 2
        %v2120 = vrot.slane %v1830, 2
        %v2121 = vsel %vm2066, %v2119, %v2120
        %v2122 = vrot.slane %v1920, 2
        %v2123 = vsel %vm2066, %v2120, %v2122
        %v2124 = vrot.slane %v1905, 2
        %v2125 = vrot.slane %v1833, 2
        %v2126 = vsel %vm2066, %v2124, %v2125
        %v2127 = vrot.slane %v1921, 2
        %v2128 = vsel %vm2066, %v2125, %v2127
        %v2129 = vrot.slane %v1906, 2
        %v2130 = vrot.slane %v1836, 2
        %v2131 = vsel %vm2066, %v2129, %v2130
        %v2132 = vrot.slane %v1922, 2
        %v2133 = vsel %vm2066, %v2130, %v2132
        %v2134 = vrot.slane %v1907, 2
        %v2135 = vrot.slane %v1839, 2
        %v2136 = vsel %vm2066, %v2134, %v2135
        %v2137 = vrot.slane %v1923, 2
        %v2138 = vsel %vm2066, %v2135, %v2137
        %v2139 = vrot.slane %v1908, 2
        %v2140 = vrot.slane %v1842, 2
        %v2141 = vsel %vm2066, %v2139, %v2140
        %v2142 = vrot.slane %v1924, 2
        %v2143 = vsel %vm2066, %v2140, %v2142
        %v2177 = vrot.slane %v1909, 1
        %v2178 = vrot.slane %v1845, 1
        %v2179 = vsel %vm1957, %v2177, %v2178
        %v2180 = vrot.slane %v1925, 1
        %v2181 = vsel %vm1957, %v2178, %v2180
        %v2184 = vrot.slane %v1909, 2
        %v2185 = vrot.slane %v1845, 2
        %v2186 = vsel %vm2066, %v2184, %v2185
        %v2187 = vrot.slane %v1925, 2
        %v2188 = vsel %vm2066, %v2185, %v2187
        %v2191 = vld [vmem:[#allocation2] sm:$0xff]
        %v2192 = vld [vmem:[#allocation2 + $0x8] sm:$0xff]
        %v2193 = vld [vmem:[#allocation2 + $0x10] sm:$0xff]
        %v2194 = vld [vmem:[#allocation2 + $0x18] sm:$0xff]
        %v2195 = vld [vmem:[#allocation2 + $0x20] sm:$0xff]
        %v2196 = vld [vmem:[#allocation2 + $0x28] sm:$0xff]
        %v2197 = vld [vmem:[#allocation2 + $0x30] sm:$0xff]
        %v2198 = vld [vmem:[#allocation2 + $0x38] sm:$0xff]
        %v2199 = vld [vmem:[#allocation2 + $0x40] sm:$0xff]
        %v2200 = vld [vmem:[#allocation2 + $0x48] sm:$0xff]
        %v2201 = vld [vmem:[#allocation2 + $0x50] sm:$0xff]
        %v2202 = vld [vmem:[#allocation2 + $0x58] sm:$0xff]
        %v2203 = vld [vmem:[#allocation2 + $0x60] sm:$0xff]
        %v2204 = vld [vmem:[#allocation2 + $0x68] sm:$0xff]
        %v2205 = vld [vmem:[#allocation2 + $0x70] sm:$0xff]
        %v2206 = vld [vmem:[#allocation2 + $0x78] sm:$0xff]
        %v2207 = vld [vmem:[#allocation2 + $0x80] sm:$0xff]
        %v2208 = vld [vmem:[#allocation2 + $0x88] sm:$0xff]
        %v2209 = vld [vmem:[#allocation2 + $0x90] sm:$0xff]
        %v2210 = vld [vmem:[#allocation2 + $0x98] sm:$0xff]
        %v2211 = vld [vmem:[#allocation2 + $0xa0] sm:$0xff]
        %v2212 = vld [vmem:[#allocation2 + $0xa8] sm:$0xff]
        %v2213 = vld [vmem:[#allocation2 + $0xb0] sm:$0xff]
        %v2214 = vld [vmem:[#allocation2 + $0xb8] sm:$0xff]
        %v2215 = vld [vmem:[#allocation2 + $0xc0] sm:$0xff]
        %v2216 = vld [vmem:[#allocation2 + $0xc8] sm:$0xff]
        %v2217 = vld [vmem:[#allocation2 + $0xd0] sm:$0xff]
        %v2218 = vld [vmem:[#allocation2 + $0xd8] sm:$0xff]
        %v2219 = vld [vmem:[#allocation2 + $0xe0] sm:$0xff]
        %v2220 = vld [vmem:[#allocation2 + $0xe8] sm:$0xff]
        %v2221 = vld [vmem:[#allocation2 + $0xf0] sm:$0xff]
        %v2222 = vld [vmem:[#allocation2 + $0xf8] sm:$0xff]
        %v2223 = vld [vmem:[#allocation2 + $0x100] sm:$0xff]
        %v2224 = vld [vmem:[#allocation2 + $0x108] sm:$0xff]
        %v2225 = vld [vmem:[#allocation2 + $0x110] sm:$0xff]
        %v2226 = vld [vmem:[#allocation2 + $0x118] sm:$0xff]
        %v2227 = vld [vmem:[#allocation2 + $0x120] sm:$0xff]
        %v2228 = vld [vmem:[#allocation2 + $0x128] sm:$0xff]
        %v2229 = vld [vmem:[#allocation2 + $0x130] sm:$0xff]
        %v2230 = vld [vmem:[#allocation2 + $0x138] sm:$0xff]
        %v2231 = vld [vmem:[#allocation2 + $0x140] sm:$0xff]
        %v2232 = vld [vmem:[#allocation2 + $0x148] sm:$0xff]
        %v2233 = vld [vmem:[#allocation2 + $0x150] sm:$0xff]
        %v2234 = vld [vmem:[#allocation2 + $0x158] sm:$0xff]
        %v2235 = vld [vmem:[#allocation2 + $0x160] sm:$0xff]
        %v2236 = vld [vmem:[#allocation2 + $0x168] sm:$0xff]
        %v2237 = vld [vmem:[#allocation2 + $0x170] sm:$0xff]
        %v2238 = vld [vmem:[#allocation2 + $0x178] sm:$0xff]
        %v2239 = vld [vmem:[#allocation2 + $0x180] sm:$0xff]
        %v2240 = vld [vmem:[#allocation2 + $0x188] sm:$0xff]
        %v2241 = vld [vmem:[#allocation2 + $0x190] sm:$0xff]
        %v2242 = vld [vmem:[#allocation2 + $0x198] sm:$0xff]
        %v2243 = vld [vmem:[#allocation2 + $0x1a0] sm:$0xff]
        %v2244 = vld [vmem:[#allocation2 + $0x1a8] sm:$0xff]
        %v2245 = vld [vmem:[#allocation2 + $0x1b0] sm:$0xff]
        %v2246 = vld [vmem:[#allocation2 + $0x1b8] sm:$0xff]
        %v2247 = vld [vmem:[#allocation2 + $0x1c0] sm:$0xff]
        %v2248 = vld [vmem:[#allocation2 + $0x1c8] sm:$0xff]
        %v2249 = vld [vmem:[#allocation2 + $0x1d0] sm:$0xff]
        %v2250 = vld [vmem:[#allocation2 + $0x1d8] sm:$0xff]
        %v2251 = vld [vmem:[#allocation2 + $0x1e0] sm:$0xff]
        %v2252 = vld [vmem:[#allocation2 + $0x1e8] sm:$0xff]
        %v2253 = vld [vmem:[#allocation2 + $0x1f0] sm:$0xff]
        %v2254 = vld [vmem:[#allocation2 + $0x1f8] sm:$0xff]
        %v2255 = vld [vmem:[#allocation2 + $0x200] sm:$0xff]
        %v2256 = vld [vmem:[#allocation2 + $0x208] sm:$0xff]
        %v2257 = vld [vmem:[#allocation2 + $0x210] sm:$0xff]
        %v2258 = vld [vmem:[#allocation2 + $0x218] sm:$0xff]
        %v2259 = vld [vmem:[#allocation2 + $0x220] sm:$0xff]
        %v2260 = vld [vmem:[#allocation2 + $0x228] sm:$0xff]
        %v2261 = vld [vmem:[#allocation2 + $0x230] sm:$0xff]
        %v2262 = vld [vmem:[#allocation2 + $0x238] sm:$0xff]
        %v2263 = vld [vmem:[#allocation2 + $0x240] sm:$0xff]
        %v2264 = vld [vmem:[#allocation2 + $0x248] sm:$0xff]
        %v2265 = vld [vmem:[#allocation2 + $0x250] sm:$0xff]
        %v2266 = vld [vmem:[#allocation2 + $0x258] sm:$0xff]
        %v2267 = vld [vmem:[#allocation2 + $0x260] sm:$0xff]
        %v2268 = vld [vmem:[#allocation2 + $0x268] sm:$0xff]
        %v2269 = vld [vmem:[#allocation2 + $0x270] sm:$0xff]
        %v2270 = vld [vmem:[#allocation2 + $0x278] sm:$0xff]
        %v2271 = vld [vmem:[#allocation2 + $0x280] sm:$0xff]
        %v2272 = vld [vmem:[#allocation2 + $0x288] sm:$0xff]
        %v2273 = vld [vmem:[#allocation2 + $0x290] sm:$0xff]
        %v2274 = vld [vmem:[#allocation2 + $0x298] sm:$0xff]
        %v2275 = vld [vmem:[#allocation2 + $0x2a0] sm:$0xff]
        %v2276 = vld [vmem:[#allocation2 + $0x2a8] sm:$0xff]
        %v2277 = vld [vmem:[#allocation2 + $0x2b0] sm:$0xff]
        %v2278 = vld [vmem:[#allocation2 + $0x2b8] sm:$0xff]
        %v2279 = vld [vmem:[#allocation2 + $0x2c0] sm:$0xff]
        %v2280 = vld [vmem:[#allocation2 + $0x2c8] sm:$0xff]
        %v2281 = vld [vmem:[#allocation2 + $0x2d0] sm:$0xff]
        %v2282 = vld [vmem:[#allocation2 + $0x2d8] sm:$0xff]
        %v2283 = vld [vmem:[#allocation2 + $0x2e0] sm:$0xff]
        %v2284 = vld [vmem:[#allocation2 + $0x2e8] sm:$0xff]
        %v2285 = vld [vmem:[#allocation2 + $0x2f0] sm:$0xff]
        %v2286 = vld [vmem:[#allocation2 + $0x2f8] sm:$0xff]
        %v2287 = vld [vmem:[#allocation2 + $0x300] sm:$0xff]
        %v2288 = vld [vmem:[#allocation2 + $0x308] sm:$0xff]
        %v2289 = vld [vmem:[#allocation2 + $0x310] sm:$0xff]
        %v2290 = vld [vmem:[#allocation2 + $0x318] sm:$0xff]
        %v2291 = vld [vmem:[#allocation2 + $0x320] sm:$0xff]
        %v2292 = vld [vmem:[#allocation2 + $0x328] sm:$0xff]
        %v2293 = vld [vmem:[#allocation2 + $0x330] sm:$0xff]
        %v2294 = vld [vmem:[#allocation2 + $0x338] sm:$0xff]
        %v2295 = vld [vmem:[#allocation2 + $0x340] sm:$0xff]
        %v2296 = vld [vmem:[#allocation2 + $0x348] sm:$0xff]
        %v2297 = vld [vmem:[#allocation2 + $0x350] sm:$0xff]
        %v2298 = vld [vmem:[#allocation2 + $0x358] sm:$0xff]
        %v2299 = vld [vmem:[#allocation2 + $0x360] sm:$0xff]
        %v2300 = vld [vmem:[#allocation2 + $0x368] sm:$0xff]
        %v2301 = vld [vmem:[#allocation2 + $0x370] sm:$0xff]
        %v2302 = vld [vmem:[#allocation2 + $0x378] sm:$0xff]
        %v2303 = vld [vmem:[#allocation2 + $0x380] sm:$0xff]
        %v2304 = vld [vmem:[#allocation2 + $0x388] sm:$0xff]
        %v2305 = vld [vmem:[#allocation2 + $0x390] sm:$0xff]
        %v2306 = vld [vmem:[#allocation2 + $0x398] sm:$0xff]
        %v2307 = vld [vmem:[#allocation2 + $0x3a0] sm:$0xff]
        %v2308 = vld [vmem:[#allocation2 + $0x3a8] sm:$0xff]
        %v2309 = vld [vmem:[#allocation2 + $0x3b0] sm:$0xff]
        %v2310 = vld [vmem:[#allocation2 + $0x3b8] sm:$0xff]
        %v2311 = vld [vmem:[#allocation2 + $0x3c0] sm:$0xff]
        %v2312 = vld [vmem:[#allocation2 + $0x3c8] sm:$0xff]
        %v2313 = vld [vmem:[#allocation2 + $0x3d0] sm:$0xff]
        %v2314 = vld [vmem:[#allocation2 + $0x3d8] sm:$0xff]
        %v2315 = vld [vmem:[#allocation2 + $0x3e0] sm:$0xff]
        %v2316 = vld [vmem:[#allocation2 + $0x3e8] sm:$0xff]
        %v2317 = vld [vmem:[#allocation2 + $0x3f0] sm:$0xff]
        %v2318 = vld [vmem:[#allocation2 + $0x3f8] sm:$0xff]
        %v2319 = vld [vmem:[#allocation2 + $0x400] sm:$0xff]
        %v2320 = vld [vmem:[#allocation2 + $0x408] sm:$0xff]
        %v2321 = vld [vmem:[#allocation2 + $0x410] sm:$0xff]
        %v2322 = vld [vmem:[#allocation2 + $0x418] sm:$0xff]
        %v2323 = vld [vmem:[#allocation2 + $0x420] sm:$0xff]
        %v2324 = vld [vmem:[#allocation2 + $0x428] sm:$0xff]
        %v2325 = vld [vmem:[#allocation2 + $0x430] sm:$0xff]
        %v2326 = vld [vmem:[#allocation2 + $0x438] sm:$0xff]
        %v2327 = vld [vmem:[#allocation2 + $0x440] sm:$0xff]
        %v2328 = vld [vmem:[#allocation2 + $0x448] sm:$0xff]
        %v2329 = vld [vmem:[#allocation2 + $0x450] sm:$0xff]
        %v2330 = vld [vmem:[#allocation2 + $0x458] sm:$0xff]
        %v2331 = vld [vmem:[#allocation2 + $0x460] sm:$0xff]
        %v2332 = vld [vmem:[#allocation2 + $0x468] sm:$0xff]
        %v2333 = vld [vmem:[#allocation2 + $0x470] sm:$0xff]
        %v2334 = vld [vmem:[#allocation2 + $0x478] sm:$0xff]
        %v2335 = vld [vmem:[%s4] sm:$0x1]
        %v2337 = vperm.slane %v2335, 0
        %2339 = vmatpush.msra.mxu0 %v2206
        %2340 = vmatpush.msra.mxu0 %v2205
        %2341 = vmatpush.msra.mxu0 %v2204
        %2342 = vmatpush.msra.mxu0 %v2203
        %2343 = vmatpush.msra.mxu0 %v2202
        %2344 = vmatpush.msra.mxu0 %v2201
        %2345 = vmatpush.msra.mxu0 %v2200
        %2346 = vmatpush.msra.mxu0 %v2199
        %2347 = vmatpush.msra.mxu0 %v2198
        %2348 = vmatpush.msra.mxu0 %v2197
        %2349 = vmatpush.msra.mxu0 %v2196
        %2350 = vmatpush.msra.mxu0 %v2195
        %2351 = vmatpush.msra.mxu0 %v2194
        %2352 = vmatpush.msra.mxu0 %v2193
        %2353 = vmatpush.msra.mxu0 %v2192
        %2354 = vmatpush.msra.mxu0 %v2191
        %2355 = vmatmul.f32.gmra.mxu0 0.0
        %v2356 = vpop.f32.mrf.mxu0
        %v2357 = vadd.f32 %v2337, %v2356
        %2358 = vmatmul.f32.gmra.mxu0 0.0
        %v2359 = vpop.f32.mrf.mxu0
        %v2360 = vadd.f32 %v2337, %v2359
        %2361 = vmatmul.f32.gmra.mxu0 %v1894
        %v2362 = vpop.f32.mrf.mxu0
        %v2363 = vadd.f32 %v2337, %v2362
        %2364 = vmatmul.f32.gmra.mxu0 %v1800
        %v2365 = vpop.f32.mrf.mxu0
        %v2366 = vadd.f32 %v2337, %v2365
        %2367 = vmatmul.f32.gmra.mxu0 %v1895
        %v2368 = vpop.f32.mrf.mxu0
        %v2369 = vadd.f32 %v2337, %v2368
        %2370 = vmatmul.f32.gmra.mxu0 %v1803
        %v2371 = vpop.f32.mrf.mxu0
        %v2372 = vadd.f32 %v2337, %v2371
        %2373 = vmatmul.f32.gmra.mxu0 %v1896
        %v2374 = vpop.f32.mrf.mxu0
        %v2375 = vadd.f32 %v2337, %v2374
        %2376 = vmatmul.f32.gmra.mxu0 %v1806
        %v2377 = vpop.f32.mrf.mxu0
        %v2378 = vadd.f32 %v2337, %v2377
        %2379 = vmatmul.f32.gmra.mxu0 %v1897
        %v2380 = vpop.f32.mrf.mxu0
        %v2381 = vadd.f32 %v2337, %v2380
        %2382 = vmatmul.f32.gmra.mxu0 %v1809
        %v2383 = vpop.f32.mrf.mxu0
        %v2384 = vadd.f32 %v2337, %v2383
        %2385 = vmatmul.f32.gmra.mxu0 %v1898
        %v2386 = vpop.f32.mrf.mxu0
        %v2387 = vadd.f32 %v2337, %v2386
        %2388 = vmatmul.f32.gmra.mxu0 %v1812
        %v2389 = vpop.f32.mrf.mxu0
        %v2390 = vadd.f32 %v2337, %v2389
        %2391 = vmatmul.f32.gmra.mxu0 %v1899
        %v2392 = vpop.f32.mrf.mxu0
        %v2393 = vadd.f32 %v2337, %v2392
        %2394 = vmatmul.f32.gmra.mxu0 %v1815
        %v2395 = vpop.f32.mrf.mxu0
        %v2396 = vadd.f32 %v2337, %v2395
        %2397 = vmatmul.f32.gmra.mxu0 %v1900
        %v2398 = vpop.f32.mrf.mxu0
        %v2399 = vadd.f32 %v2337, %v2398
        %2400 = vmatmul.f32.gmra.mxu0 %v1818
        %v2401 = vpop.f32.mrf.mxu0
        %v2402 = vadd.f32 %v2337, %v2401
        %2403 = vmatmul.f32.gmra.mxu0 %v1901
        %v2404 = vpop.f32.mrf.mxu0
        %v2405 = vadd.f32 %v2337, %v2404
        %2406 = vmatmul.f32.gmra.mxu0 %v1821
        %v2407 = vpop.f32.mrf.mxu0
        %v2408 = vadd.f32 %v2337, %v2407
        %2409 = vmatmul.f32.gmra.mxu0 %v1902
        %v2410 = vpop.f32.mrf.mxu0
        %v2411 = vadd.f32 %v2337, %v2410
        %2412 = vmatmul.f32.gmra.mxu0 %v1824
        %v2413 = vpop.f32.mrf.mxu0
        %v2414 = vadd.f32 %v2337, %v2413
        %2415 = vmatmul.f32.gmra.mxu0 %v1903
        %v2416 = vpop.f32.mrf.mxu0
        %v2417 = vadd.f32 %v2337, %v2416
        %2418 = vmatmul.f32.gmra.mxu0 %v1827
        %v2419 = vpop.f32.mrf.mxu0
        %v2420 = vadd.f32 %v2337, %v2419
        %2421 = vmatmul.f32.gmra.mxu0 %v1904
        %v2422 = vpop.f32.mrf.mxu0
        %v2423 = vadd.f32 %v2337, %v2422
        %2424 = vmatmul.f32.gmra.mxu0 %v1830
        %v2425 = vpop.f32.mrf.mxu0
        %v2426 = vadd.f32 %v2337, %v2425
        %2427 = vmatmul.f32.gmra.mxu0 %v1905
        %v2428 = vpop.f32.mrf.mxu0
        %v2429 = vadd.f32 %v2337, %v2428
        %2430 = vmatmul.f32.gmra.mxu0 %v1833
        %v2431 = vpop.f32.mrf.mxu0
        %v2432 = vadd.f32 %v2337, %v2431
        %2433 = vmatmul.f32.gmra.mxu0 %v1906
        %v2434 = vpop.f32.mrf.mxu0
        %v2435 = vadd.f32 %v2337, %v2434
        %2436 = vmatmul.f32.gmra.mxu0 %v1836
        %v2437 = vpop.f32.mrf.mxu0
        %v2438 = vadd.f32 %v2337, %v2437
        %2439 = vmatmul.f32.gmra.mxu0 %v1907
        %v2440 = vpop.f32.mrf.mxu0
        %v2441 = vadd.f32 %v2337, %v2440
        %2442 = vmatmul.f32.gmra.mxu0 %v1839
        %v2443 = vpop.f32.mrf.mxu0
        %v2444 = vadd.f32 %v2337, %v2443
        %2445 = vmatmul.f32.gmra.mxu0 %v1908
        %v2446 = vpop.f32.mrf.mxu0
        %v2447 = vadd.f32 %v2337, %v2446
        %2448 = vmatmul.f32.gmra.mxu0 %v1842
        %v2449 = vpop.f32.mrf.mxu0
        %v2450 = vadd.f32 %v2337, %v2449
        %2451 = vdwg.mxu0
        %2452 = vmatpush.msra.mxu0 %v2222
        %2453 = vmatpush.msra.mxu0 %v2221
        %2454 = vmatpush.msra.mxu0 %v2220
        %2455 = vmatpush.msra.mxu0 %v2219
        %2456 = vmatpush.msra.mxu0 %v2218
        %2457 = vmatpush.msra.mxu0 %v2217
        %2458 = vmatpush.msra.mxu0 %v2216
        %2459 = vmatpush.msra.mxu0 %v2215
        %2460 = vmatpush.msra.mxu0 %v2214
        %2461 = vmatpush.msra.mxu0 %v2213
        %2462 = vmatpush.msra.mxu0 %v2212
        %2463 = vmatpush.msra.mxu0 %v2211
        %2464 = vmatpush.msra.mxu0 %v2210
        %2465 = vmatpush.msra.mxu0 %v2209
        %2466 = vmatpush.msra.mxu0 %v2208
        %2467 = vmatpush.msra.mxu0 %v2207
        %2468 = vmatmul.f32.gmra.mxu0 %v1959
        %v2469 = vpop.f32.mrf.mxu0
        %v2470 = vadd.f32 %v2357, %v2469
        %2471 = vmatmul.f32.gmra.mxu0 %v1959
        %v2472 = vpop.f32.mrf.mxu0
        %v2473 = vadd.f32 %v2360, %v2472
        %2474 = vmatmul.f32.gmra.mxu0 %v1962
        %v2475 = vpop.f32.mrf.mxu0
        %v2476 = vadd.f32 %v2363, %v2475
        %2477 = vmatmul.f32.gmra.mxu0 %v1964
        %v2478 = vpop.f32.mrf.mxu0
        %v2479 = vadd.f32 %v2366, %v2478
        %2480 = vmatmul.f32.gmra.mxu0 %v1967
        %v2481 = vpop.f32.mrf.mxu0
        %v2482 = vadd.f32 %v2369, %v2481
        %2483 = vmatmul.f32.gmra.mxu0 %v1969
        %v2484 = vpop.f32.mrf.mxu0
        %v2485 = vadd.f32 %v2372, %v2484
        %2486 = vmatmul.f32.gmra.mxu0 %v1972
        %v2487 = vpop.f32.mrf.mxu0
        %v2488 = vadd.f32 %v2375, %v2487
        %2489 = vmatmul.f32.gmra.mxu0 %v1974
        %v2490 = vpop.f32.mrf.mxu0
        %v2491 = vadd.f32 %v2378, %v2490
        %2492 = vmatmul.f32.gmra.mxu0 %v1977
        %v2493 = vpop.f32.mrf.mxu0
        %v2494 = vadd.f32 %v2381, %v2493
        %2495 = vmatmul.f32.gmra.mxu0 %v1979
        %v2496 = vpop.f32.mrf.mxu0
        %v2497 = vadd.f32 %v2384, %v2496
        %2498 = vmatmul.f32.gmra.mxu0 %v1982
        %v2499 = vpop.f32.mrf.mxu0
        %v2500 = vadd.f32 %v2387, %v2499
        %2501 = vmatmul.f32.gmra.mxu0 %v1984
        %v2502 = vpop.f32.mrf.mxu0
        %v2503 = vadd.f32 %v2390, %v2502
        %2504 = vmatmul.f32.gmra.mxu0 %v1987
        %v2505 = vpop.f32.mrf.mxu0
        %v2506 = vadd.f32 %v2393, %v2505
        %2507 = vmatmul.f32.gmra.mxu0 %v1989
        %v2508 = vpop.f32.mrf.mxu0
        %v2509 = vadd.f32 %v2396, %v2508
        %2510 = vmatmul.f32.gmra.mxu0 %v1992
        %v2511 = vpop.f32.mrf.mxu0
        %v2512 = vadd.f32 %v2399, %v2511
        %2513 = vmatmul.f32.gmra.mxu0 %v1994
        %v2514 = vpop.f32.mrf.mxu0
        %v2515 = vadd.f32 %v2402, %v2514
        %2516 = vmatmul.f32.gmra.mxu0 %v1997
        %v2517 = vpop.f32.mrf.mxu0
        %v2518 = vadd.f32 %v2405, %v2517
        %2519 = vmatmul.f32.gmra.mxu0 %v1999
        %v2520 = vpop.f32.mrf.mxu0
        %v2521 = vadd.f32 %v2408, %v2520
        %2522 = vmatmul.f32.gmra.mxu0 %v2002
        %v2523 = vpop.f32.mrf.mxu0
        %v2524 = vadd.f32 %v2411, %v2523
        %2525 = vmatmul.f32.gmra.mxu0 %v2004
        %v2526 = vpop.f32.mrf.mxu0
        %v2527 = vadd.f32 %v2414, %v2526
        %2528 = vmatmul.f32.gmra.mxu0 %v2007
        %v2529 = vpop.f32.mrf.mxu0
        %v2530 = vadd.f32 %v2417, %v2529
        %2531 = vmatmul.f32.gmra.mxu0 %v2009
        %v2532 = vpop.f32.mrf.mxu0
        %v2533 = vadd.f32 %v2420, %v2532
        %2534 = vmatmul.f32.gmra.mxu0 %v2012
        %v2535 = vpop.f32.mrf.mxu0
        %v2536 = vadd.f32 %v2423, %v2535
        %2537 = vmatmul.f32.gmra.mxu0 %v2014
        %v2538 = vpop.f32.mrf.mxu0
        %v2539 = vadd.f32 %v2426, %v2538
        %2540 = vmatmul.f32.gmra.mxu0 %v2017
        %v2541 = vpop.f32.mrf.mxu0
        %v2542 = vadd.f32 %v2429, %v2541
        %2543 = vmatmul.f32.gmra.mxu0 %v2019
        %v2544 = vpop.f32.mrf.mxu0
        %v2545 = vadd.f32 %v2432, %v2544
        %2546 = vmatmul.f32.gmra.mxu0 %v2022
        %v2547 = vpop.f32.mrf.mxu0
        %v2548 = vadd.f32 %v2435, %v2547
        %2549 = vmatmul.f32.gmra.mxu0 %v2024
        %v2550 = vpop.f32.mrf.mxu0
        %v2551 = vadd.f32 %v2438, %v2550
        %2552 = vmatmul.f32.gmra.mxu0 %v2027
        %v2553 = vpop.f32.mrf.mxu0
        %v2554 = vadd.f32 %v2441, %v2553
        %2555 = vmatmul.f32.gmra.mxu0 %v2029
        %v2556 = vpop.f32.mrf.mxu0
        %v2557 = vadd.f32 %v2444, %v2556
        %2558 = vmatmul.f32.gmra.mxu0 %v2032
        %v2559 = vpop.f32.mrf.mxu0
        %v2560 = vadd.f32 %v2447, %v2559
        %2561 = vmatmul.f32.gmra.mxu0 %v2034
        %v2562 = vpop.f32.mrf.mxu0
        %v2563 = vadd.f32 %v2450, %v2562
        %2564 = vdwg.mxu0
        %2565 = vmatpush.msra.mxu0 %v2238
        %2566 = vmatpush.msra.mxu0 %v2237
        %2567 = vmatpush.msra.mxu0 %v2236
        %2568 = vmatpush.msra.mxu0 %v2235
        %2569 = vmatpush.msra.mxu0 %v2234
        %2570 = vmatpush.msra.mxu0 %v2233
        %2571 = vmatpush.msra.mxu0 %v2232
        %2572 = vmatpush.msra.mxu0 %v2231
        %2573 = vmatpush.msra.mxu0 %v2230
        %2574 = vmatpush.msra.mxu0 %v2229
        %2575 = vmatpush.msra.mxu0 %v2228
        %2576 = vmatpush.msra.mxu0 %v2227
        %2577 = vmatpush.msra.mxu0 %v2226
        %2578 = vmatpush.msra.mxu0 %v2225
        %2579 = vmatpush.msra.mxu0 %v2224
        %2580 = vmatpush.msra.mxu0 %v2223
        %2581 = vmatmul.f32.gmra.mxu0 %v2068
        %v2582 = vpop.f32.mrf.mxu0
        %v2583 = vadd.f32 %v2470, %v2582
        %2584 = vmatmul.f32.gmra.mxu0 %v2068
        %v2585 = vpop.f32.mrf.mxu0
        %v2586 = vadd.f32 %v2473, %v2585
        %2587 = vmatmul.f32.gmra.mxu0 %v2071
        %v2588 = vpop.f32.mrf.mxu0
        %v2589 = vadd.f32 %v2476, %v2588
        %2590 = vmatmul.f32.gmra.mxu0 %v2073
        %v2591 = vpop.f32.mrf.mxu0
        %v2592 = vadd.f32 %v2479, %v2591
        %2593 = vmatmul.f32.gmra.mxu0 %v2076
        %v2594 = vpop.f32.mrf.mxu0
        %v2595 = vadd.f32 %v2482, %v2594
        %2596 = vmatmul.f32.gmra.mxu0 %v2078
        %v2597 = vpop.f32.mrf.mxu0
        %v2598 = vadd.f32 %v2485, %v2597
        %2599 = vmatmul.f32.gmra.mxu0 %v2081
        %v2600 = vpop.f32.mrf.mxu0
        %v2601 = vadd.f32 %v2488, %v2600
        %2602 = vmatmul.f32.gmra.mxu0 %v2083
        %v2603 = vpop.f32.mrf.mxu0
        %v2604 = vadd.f32 %v2491, %v2603
        %2605 = vmatmul.f32.gmra.mxu0 %v2086
        %v2606 = vpop.f32.mrf.mxu0
        %v2607 = vadd.f32 %v2494, %v2606
        %2608 = vmatmul.f32.gmra.mxu0 %v2088
        %v2609 = vpop.f32.mrf.mxu0
        %v2610 = vadd.f32 %v2497, %v2609
        %2611 = vmatmul.f32.gmra.mxu0 %v2091
        %v2612 = vpop.f32.mrf.mxu0
        %v2613 = vadd.f32 %v2500, %v2612
        %2614 = vmatmul.f32.gmra.mxu0 %v2093
        %v2615 = vpop.f32.mrf.mxu0
        %v2616 = vadd.f32 %v2503, %v2615
        %2617 = vmatmul.f32.gmra.mxu0 %v2096
        %v2618 = vpop.f32.mrf.mxu0
        %v2619 = vadd.f32 %v2506, %v2618
        %2620 = vmatmul.f32.gmra.mxu0 %v2098
        %v2621 = vpop.f32.mrf.mxu0
        %v2622 = vadd.f32 %v2509, %v2621
        %2623 = vmatmul.f32.gmra.mxu0 %v2101
        %v2624 = vpop.f32.mrf.mxu0
        %v2625 = vadd.f32 %v2512, %v2624
        %2626 = vmatmul.f32.gmra.mxu0 %v2103
        %v2627 = vpop.f32.mrf.mxu0
        %v2628 = vadd.f32 %v2515, %v2627
        %2629 = vmatmul.f32.gmra.mxu0 %v2106
        %v2630 = vpop.f32.mrf.mxu0
        %v2631 = vadd.f32 %v2518, %v2630
        %2632 = vmatmul.f32.gmra.mxu0 %v2108
        %v2633 = vpop.f32.mrf.mxu0
        %v2634 = vadd.f32 %v2521, %v2633
        %2635 = vmatmul.f32.gmra.mxu0 %v2111
        %v2636 = vpop.f32.mrf.mxu0
        %v2637 = vadd.f32 %v2524, %v2636
        %2638 = vmatmul.f32.gmra.mxu0 %v2113
        %v2639 = vpop.f32.mrf.mxu0
        %v2640 = vadd.f32 %v2527, %v2639
        %2641 = vmatmul.f32.gmra.mxu0 %v2116
        %v2642 = vpop.f32.mrf.mxu0
        %v2643 = vadd.f32 %v2530, %v2642
        %2644 = vmatmul.f32.gmra.mxu0 %v2118
        %v2645 = vpop.f32.mrf.mxu0
        %v2646 = vadd.f32 %v2533, %v2645
        %2647 = vmatmul.f32.gmra.mxu0 %v2121
        %v2648 = vpop.f32.mrf.mxu0
        %v2649 = vadd.f32 %v2536, %v2648
        %2650 = vmatmul.f32.gmra.mxu0 %v2123
        %v2651 = vpop.f32.mrf.mxu0
        %v2652 = vadd.f32 %v2539, %v2651
        %2653 = vmatmul.f32.gmra.mxu0 %v2126
        %v2654 = vpop.f32.mrf.mxu0
        %v2655 = vadd.f32 %v2542, %v2654
        %2656 = vmatmul.f32.gmra.mxu0 %v2128
        %v2657 = vpop.f32.mrf.mxu0
        %v2658 = vadd.f32 %v2545, %v2657
        %2659 = vmatmul.f32.gmra.mxu0 %v2131
        %v2660 = vpop.f32.mrf.mxu0
        %v2661 = vadd.f32 %v2548, %v2660
        %2662 = vmatmul.f32.gmra.mxu0 %v2133
        %v2663 = vpop.f32.mrf.mxu0
        %v2664 = vadd.f32 %v2551, %v2663
        %2665 = vmatmul.f32.gmra.mxu0 %v2136
        %v2666 = vpop.f32.mrf.mxu0
        %v2667 = vadd.f32 %v2554, %v2666
        %2668 = vmatmul.f32.gmra.mxu0 %v2138
        %v2669 = vpop.f32.mrf.mxu0
        %v2670 = vadd.f32 %v2557, %v2669
        %2671 = vmatmul.f32.gmra.mxu0 %v2141
        %v2672 = vpop.f32.mrf.mxu0
        %v2673 = vadd.f32 %v2560, %v2672
        %2674 = vmatmul.f32.gmra.mxu0 %v2143
        %v2675 = vpop.f32.mrf.mxu0
        %v2676 = vadd.f32 %v2563, %v2675
        %2677 = vdwg.mxu0
        %2678 = vmatpush.msra.mxu0 %v2254
        %2679 = vmatpush.msra.mxu0 %v2253
        %2680 = vmatpush.msra.mxu0 %v2252
        %2681 = vmatpush.msra.mxu0 %v2251
        %2682 = vmatpush.msra.mxu0 %v2250
        %2683 = vmatpush.msra.mxu0 %v2249
        %2684 = vmatpush.msra.mxu0 %v2248
        %2685 = vmatpush.msra.mxu0 %v2247
        %2686 = vmatpush.msra.mxu0 %v2246
        %2687 = vmatpush.msra.mxu0 %v2245
        %2688 = vmatpush.msra.mxu0 %v2244
        %2689 = vmatpush.msra.mxu0 %v2243
        %2690 = vmatpush.msra.mxu0 %v2242
        %2691 = vmatpush.msra.mxu0 %v2241
        %2692 = vmatpush.msra.mxu0 %v2240
        %2693 = vmatpush.msra.mxu0 %v2239
        %2694 = vmatmul.f32.gmra.mxu0 %v1894
        %v2695 = vpop.f32.mrf.mxu0
        %v2696 = vadd.f32 %v2583, %v2695
        %2697 = vmatmul.f32.gmra.mxu0 %v1800
        %v2698 = vpop.f32.mrf.mxu0
        %v2699 = vadd.f32 %v2586, %v2698
        %2700 = vmatmul.f32.gmra.mxu0 %v1895
        %v2701 = vpop.f32.mrf.mxu0
        %v2702 = vadd.f32 %v2589, %v2701
        %2703 = vmatmul.f32.gmra.mxu0 %v1803
        %v2704 = vpop.f32.mrf.mxu0
        %v2705 = vadd.f32 %v2592, %v2704
        %2706 = vmatmul.f32.gmra.mxu0 %v1896
        %v2707 = vpop.f32.mrf.mxu0
        %v2708 = vadd.f32 %v2595, %v2707
        %2709 = vmatmul.f32.gmra.mxu0 %v1806
        %v2710 = vpop.f32.mrf.mxu0
        %v2711 = vadd.f32 %v2598, %v2710
        %2712 = vmatmul.f32.gmra.mxu0 %v1897
        %v2713 = vpop.f32.mrf.mxu0
        %v2714 = vadd.f32 %v2601, %v2713
        %2715 = vmatmul.f32.gmra.mxu0 %v1809
        %v2716 = vpop.f32.mrf.mxu0
        %v2717 = vadd.f32 %v2604, %v2716
        %2718 = vmatmul.f32.gmra.mxu0 %v1898
        %v2719 = vpop.f32.mrf.mxu0
        %v2720 = vadd.f32 %v2607, %v2719
        %2721 = vmatmul.f32.gmra.mxu0 %v1812
        %v2722 = vpop.f32.mrf.mxu0
        %v2723 = vadd.f32 %v2610, %v2722
        %2724 = vmatmul.f32.gmra.mxu0 %v1899
        %v2725 = vpop.f32.mrf.mxu0
        %v2726 = vadd.f32 %v2613, %v2725
        %2727 = vmatmul.f32.gmra.mxu0 %v1815
        %v2728 = vpop.f32.mrf.mxu0
        %v2729 = vadd.f32 %v2616, %v2728
        %2730 = vmatmul.f32.gmra.mxu0 %v1900
        %v2731 = vpop.f32.mrf.mxu0
        %v2732 = vadd.f32 %v2619, %v2731
        %2733 = vmatmul.f32.gmra.mxu0 %v1818
        %v2734 = vpop.f32.mrf.mxu0
        %v2735 = vadd.f32 %v2622, %v2734
        %2736 = vmatmul.f32.gmra.mxu0 %v1901
        %v2737 = vpop.f32.mrf.mxu0
        %v2738 = vadd.f32 %v2625, %v2737
        %2739 = vmatmul.f32.gmra.mxu0 %v1821
        %v2740 = vpop.f32.mrf.mxu0
        %v2741 = vadd.f32 %v2628, %v2740
        %2742 = vmatmul.f32.gmra.mxu0 %v1902
        %v2743 = vpop.f32.mrf.mxu0
        %v2744 = vadd.f32 %v2631, %v2743
        %2745 = vmatmul.f32.gmra.mxu0 %v1824
        %v2746 = vpop.f32.mrf.mxu0
        %v2747 = vadd.f32 %v2634, %v2746
        %2748 = vmatmul.f32.gmra.mxu0 %v1903
        %v2749 = vpop.f32.mrf.mxu0
        %v2750 = vadd.f32 %v2637, %v2749
        %2751 = vmatmul.f32.gmra.mxu0 %v1827
        %v2752 = vpop.f32.mrf.mxu0
        %v2753 = vadd.f32 %v2640, %v2752
        %2754 = vmatmul.f32.gmra.mxu0 %v1904
        %v2755 = vpop.f32.mrf.mxu0
        %v2756 = vadd.f32 %v2643, %v2755
        %2757 = vmatmul.f32.gmra.mxu0 %v1830
        %v2758 = vpop.f32.mrf.mxu0
        %v2759 = vadd.f32 %v2646, %v2758
        %2760 = vmatmul.f32.gmra.mxu0 %v1905
        %v2761 = vpop.f32.mrf.mxu0
        %v2762 = vadd.f32 %v2649, %v2761
        %2763 = vmatmul.f32.gmra.mxu0 %v1833
        %v2764 = vpop.f32.mrf.mxu0
        %v2765 = vadd.f32 %v2652, %v2764
        %2766 = vmatmul.f32.gmra.mxu0 %v1906
        %v2767 = vpop.f32.mrf.mxu0
        %v2768 = vadd.f32 %v2655, %v2767
        %2769 = vmatmul.f32.gmra.mxu0 %v1836
        %v2770 = vpop.f32.mrf.mxu0
        %v2771 = vadd.f32 %v2658, %v2770
        %2772 = vmatmul.f32.gmra.mxu0 %v1907
        %v2773 = vpop.f32.mrf.mxu0
        %v2774 = vadd.f32 %v2661, %v2773
        %2775 = vmatmul.f32.gmra.mxu0 %v1839
        %v2776 = vpop.f32.mrf.mxu0
        %v2777 = vadd.f32 %v2664, %v2776
        %2778 = vmatmul.f32.gmra.mxu0 %v1908
        %v2779 = vpop.f32.mrf.mxu0
        %v2780 = vadd.f32 %v2667, %v2779
        %2781 = vmatmul.f32.gmra.mxu0 %v1842
        %v2782 = vpop.f32.mrf.mxu0
        %v2783 = vadd.f32 %v2670, %v2782
        %2784 = vmatmul.f32.gmra.mxu0 %v1909
        %v2785 = vpop.f32.mrf.mxu0
        %v2786 = vadd.f32 %v2673, %v2785
        %2787 = vmatmul.f32.gmra.mxu0 %v1845
        %v2788 = vpop.f32.mrf.mxu0
        %v2789 = vadd.f32 %v2676, %v2788
        %2790 = vdwg.mxu0
        %2791 = vmatpush.msra.mxu0 %v2270
        %2792 = vmatpush.msra.mxu0 %v2269
        %2793 = vmatpush.msra.mxu0 %v2268
        %2794 = vmatpush.msra.mxu0 %v2267
        %2795 = vmatpush.msra.mxu0 %v2266
        %2796 = vmatpush.msra.mxu0 %v2265
        %2797 = vmatpush.msra.mxu0 %v2264
        %2798 = vmatpush.msra.mxu0 %v2263
        %2799 = vmatpush.msra.mxu0 %v2262
        %2800 = vmatpush.msra.mxu0 %v2261
        %2801 = vmatpush.msra.mxu0 %v2260
        %2802 = vmatpush.msra.mxu0 %v2259
        %2803 = vmatpush.msra.mxu0 %v2258
        %2804 = vmatpush.msra.mxu0 %v2257
        %2805 = vmatpush.msra.mxu0 %v2256
        %2806 = vmatpush.msra.mxu0 %v2255
        %2807 = vmatmul.f32.gmra.mxu0 %v1962
        %v2808 = vpop.f32.mrf.mxu0
        %v2809 = vadd.f32 %v2696, %v2808
        %2810 = vmatmul.f32.gmra.mxu0 %v1964
        %v2811 = vpop.f32.mrf.mxu0
        %v2812 = vadd.f32 %v2699, %v2811
        %2813 = vmatmul.f32.gmra.mxu0 %v1967
        %v2814 = vpop.f32.mrf.mxu0
        %v2815 = vadd.f32 %v2702, %v2814
        %2816 = vmatmul.f32.gmra.mxu0 %v1969
        %v2817 = vpop.f32.mrf.mxu0
        %v2818 = vadd.f32 %v2705, %v2817
        %2819 = vmatmul.f32.gmra.mxu0 %v1972
        %v2820 = vpop.f32.mrf.mxu0
        %v2821 = vadd.f32 %v2708, %v2820
        %2822 = vmatmul.f32.gmra.mxu0 %v1974
        %v2823 = vpop.f32.mrf.mxu0
        %v2824 = vadd.f32 %v2711, %v2823
        %2825 = vmatmul.f32.gmra.mxu0 %v1977
        %v2826 = vpop.f32.mrf.mxu0
        %v2827 = vadd.f32 %v2714, %v2826
        %2828 = vmatmul.f32.gmra.mxu0 %v1979
        %v2829 = vpop.f32.mrf.mxu0
        %v2830 = vadd.f32 %v2717, %v2829
        %2831 = vmatmul.f32.gmra.mxu0 %v1982
        %v2832 = vpop.f32.mrf.mxu0
        %v2833 = vadd.f32 %v2720, %v2832
        %2834 = vmatmul.f32.gmra.mxu0 %v1984
        %v2835 = vpop.f32.mrf.mxu0
        %v2836 = vadd.f32 %v2723, %v2835
        %2837 = vmatmul.f32.gmra.mxu0 %v1987
        %v2838 = vpop.f32.mrf.mxu0
        %v2839 = vadd.f32 %v2726, %v2838
        %2840 = vmatmul.f32.gmra.mxu0 %v1989
        %v2841 = vpop.f32.mrf.mxu0
        %v2842 = vadd.f32 %v2729, %v2841
        %2843 = vmatmul.f32.gmra.mxu0 %v1992
        %v2844 = vpop.f32.mrf.mxu0
        %v2845 = vadd.f32 %v2732, %v2844
        %2846 = vmatmul.f32.gmra.mxu0 %v1994
        %v2847 = vpop.f32.mrf.mxu0
        %v2848 = vadd.f32 %v2735, %v2847
        %2849 = vmatmul.f32.gmra.mxu0 %v1997
        %v2850 = vpop.f32.mrf.mxu0
        %v2851 = vadd.f32 %v2738, %v2850
        %2852 = vmatmul.f32.gmra.mxu0 %v1999
        %v2853 = vpop.f32.mrf.mxu0
        %v2854 = vadd.f32 %v2741, %v2853
        %2855 = vmatmul.f32.gmra.mxu0 %v2002
        %v2856 = vpop.f32.mrf.mxu0
        %v2857 = vadd.f32 %v2744, %v2856
        %2858 = vmatmul.f32.gmra.mxu0 %v2004
        %v2859 = vpop.f32.mrf.mxu0
        %v2860 = vadd.f32 %v2747, %v2859
        %2861 = vmatmul.f32.gmra.mxu0 %v2007
        %v2862 = vpop.f32.mrf.mxu0
        %v2863 = vadd.f32 %v2750, %v2862
        %2864 = vmatmul.f32.gmra.mxu0 %v2009
        %v2865 = vpop.f32.mrf.mxu0
        %v2866 = vadd.f32 %v2753, %v2865
        %2867 = vmatmul.f32.gmra.mxu0 %v2012
        %v2868 = vpop.f32.mrf.mxu0
        %v2869 = vadd.f32 %v2756, %v2868
        %2870 = vmatmul.f32.gmra.mxu0 %v2014
        %v2871 = vpop.f32.mrf.mxu0
        %v2872 = vadd.f32 %v2759, %v2871
        %2873 = vmatmul.f32.gmra.mxu0 %v2017
        %v2874 = vpop.f32.mrf.mxu0
        %v2875 = vadd.f32 %v2762, %v2874
        %2876 = vmatmul.f32.gmra.mxu0 %v2019
        %v2877 = vpop.f32.mrf.mxu0
        %v2878 = vadd.f32 %v2765, %v2877
        %2879 = vmatmul.f32.gmra.mxu0 %v2022
        %v2880 = vpop.f32.mrf.mxu0
        %v2881 = vadd.f32 %v2768, %v2880
        %2882 = vmatmul.f32.gmra.mxu0 %v2024
        %v2883 = vpop.f32.mrf.mxu0
        %v2884 = vadd.f32 %v2771, %v2883
        %2885 = vmatmul.f32.gmra.mxu0 %v2027
        %v2886 = vpop.f32.mrf.mxu0
        %v2887 = vadd.f32 %v2774, %v2886
        %2888 = vmatmul.f32.gmra.mxu0 %v2029
        %v2889 = vpop.f32.mrf.mxu0
        %v2890 = vadd.f32 %v2777, %v2889
        %2891 = vmatmul.f32.gmra.mxu0 %v2032
        %v2892 = vpop.f32.mrf.mxu0
        %v2893 = vadd.f32 %v2780, %v2892
        %2894 = vmatmul.f32.gmra.mxu0 %v2034
        %v2895 = vpop.f32.mrf.mxu0
        %v2896 = vadd.f32 %v2783, %v2895
        %2897 = vmatmul.f32.gmra.mxu0 %v2179
        %v2898 = vpop.f32.mrf.mxu0
        %v2899 = vadd.f32 %v2786, %v2898
        %2900 = vmatmul.f32.gmra.mxu0 %v2181
        %v2901 = vpop.f32.mrf.mxu0
        %v2902 = vadd.f32 %v2789, %v2901
        %2903 = vdwg.mxu0
        %2904 = vmatpush.msra.mxu0 %v2286
        %2905 = vmatpush.msra.mxu0 %v2285
        %2906 = vmatpush.msra.mxu0 %v2284
        %2907 = vmatpush.msra.mxu0 %v2283
        %2908 = vmatpush.msra.mxu0 %v2282
        %2909 = vmatpush.msra.mxu0 %v2281
        %2910 = vmatpush.msra.mxu0 %v2280
        %2911 = vmatpush.msra.mxu0 %v2279
        %2912 = vmatpush.msra.mxu0 %v2278
        %2913 = vmatpush.msra.mxu0 %v2277
        %2914 = vmatpush.msra.mxu0 %v2276
        %2915 = vmatpush.msra.mxu0 %v2275
        %2916 = vmatpush.msra.mxu0 %v2274
        %2917 = vmatpush.msra.mxu0 %v2273
        %2918 = vmatpush.msra.mxu0 %v2272
        %2919 = vmatpush.msra.mxu0 %v2271
        %2920 = vmatmul.f32.gmra.mxu0 %v2071
        %v2921 = vpop.f32.mrf.mxu0
        %v2922 = vadd.f32 %v2809, %v2921
        %2923 = vmatmul.f32.gmra.mxu0 %v2073
        %v2924 = vpop.f32.mrf.mxu0
        %v2925 = vadd.f32 %v2812, %v2924
        %2926 = vmatmul.f32.gmra.mxu0 %v2076
        %v2927 = vpop.f32.mrf.mxu0
        %v2928 = vadd.f32 %v2815, %v2927
        %2929 = vmatmul.f32.gmra.mxu0 %v2078
        %v2930 = vpop.f32.mrf.mxu0
        %v2931 = vadd.f32 %v2818, %v2930
        %2932 = vmatmul.f32.gmra.mxu0 %v2081
        %v2933 = vpop.f32.mrf.mxu0
        %v2934 = vadd.f32 %v2821, %v2933
        %2935 = vmatmul.f32.gmra.mxu0 %v2083
        %v2936 = vpop.f32.mrf.mxu0
        %v2937 = vadd.f32 %v2824, %v2936
        %2938 = vmatmul.f32.gmra.mxu0 %v2086
        %v2939 = vpop.f32.mrf.mxu0
        %v2940 = vadd.f32 %v2827, %v2939
        %2941 = vmatmul.f32.gmra.mxu0 %v2088
        %v2942 = vpop.f32.mrf.mxu0
        %v2943 = vadd.f32 %v2830, %v2942
        %2944 = vmatmul.f32.gmra.mxu0 %v2091
        %v2945 = vpop.f32.mrf.mxu0
        %v2946 = vadd.f32 %v2833, %v2945
        %2947 = vmatmul.f32.gmra.mxu0 %v2093
        %v2948 = vpop.f32.mrf.mxu0
        %v2949 = vadd.f32 %v2836, %v2948
        %2950 = vmatmul.f32.gmra.mxu0 %v2096
        %v2951 = vpop.f32.mrf.mxu0
        %v2952 = vadd.f32 %v2839, %v2951
        %2953 = vmatmul.f32.gmra.mxu0 %v2098
        %v2954 = vpop.f32.mrf.mxu0
        %v2955 = vadd.f32 %v2842, %v2954
        %2956 = vmatmul.f32.gmra.mxu0 %v2101
        %v2957 = vpop.f32.mrf.mxu0
        %v2958 = vadd.f32 %v2845, %v2957
        %2959 = vmatmul.f32.gmra.mxu0 %v2103
        %v2960 = vpop.f32.mrf.mxu0
        %v2961 = vadd.f32 %v2848, %v2960
        %2962 = vmatmul.f32.gmra.mxu0 %v2106
        %v2963 = vpop.f32.mrf.mxu0
        %v2964 = vadd.f32 %v2851, %v2963
        %2965 = vmatmul.f32.gmra.mxu0 %v2108
        %v2966 = vpop.f32.mrf.mxu0
        %v2967 = vadd.f32 %v2854, %v2966
        %2968 = vmatmul.f32.gmra.mxu0 %v2111
        %v2969 = vpop.f32.mrf.mxu0
        %v2970 = vadd.f32 %v2857, %v2969
        %2971 = vmatmul.f32.gmra.mxu0 %v2113
        %v2972 = vpop.f32.mrf.mxu0
        %v2973 = vadd.f32 %v2860, %v2972
        %2974 = vmatmul.f32.gmra.mxu0 %v2116
        %v2975 = vpop.f32.mrf.mxu0
        %v2976 = vadd.f32 %v2863, %v2975
        %2977 = vmatmul.f32.gmra.mxu0 %v2118
        %v2978 = vpop.f32.mrf.mxu0
        %v2979 = vadd.f32 %v2866, %v2978
        %2980 = vmatmul.f32.gmra.mxu0 %v2121
        %v2981 = vpop.f32.mrf.mxu0
        %v2982 = vadd.f32 %v2869, %v2981
        %2983 = vmatmul.f32.gmra.mxu0 %v2123
        %v2984 = vpop.f32.mrf.mxu0
        %v2985 = vadd.f32 %v2872, %v2984
        %2986 = vmatmul.f32.gmra.mxu0 %v2126
        %v2987 = vpop.f32.mrf.mxu0
        %v2988 = vadd.f32 %v2875, %v2987
        %2989 = vmatmul.f32.gmra.mxu0 %v2128
        %v2990 = vpop.f32.mrf.mxu0
        %v2991 = vadd.f32 %v2878, %v2990
        %2992 = vmatmul.f32.gmra.mxu0 %v2131
        %v2993 = vpop.f32.mrf.mxu0
        %v2994 = vadd.f32 %v2881, %v2993
        %2995 = vmatmul.f32.gmra.mxu0 %v2133
        %v2996 = vpop.f32.mrf.mxu0
        %v2997 = vadd.f32 %v2884, %v2996
        %2998 = vmatmul.f32.gmra.mxu0 %v2136
        %v2999 = vpop.f32.mrf.mxu0
        %v3000 = vadd.f32 %v2887, %v2999
        %3001 = vmatmul.f32.gmra.mxu0 %v2138
        %v3002 = vpop.f32.mrf.mxu0
        %v3003 = vadd.f32 %v2890, %v3002
        %3004 = vmatmul.f32.gmra.mxu0 %v2141
        %v3005 = vpop.f32.mrf.mxu0
        %v3006 = vadd.f32 %v2893, %v3005
        %3007 = vmatmul.f32.gmra.mxu0 %v2143
        %v3008 = vpop.f32.mrf.mxu0
        %v3009 = vadd.f32 %v2896, %v3008
        %3010 = vmatmul.f32.gmra.mxu0 %v2186
        %v3011 = vpop.f32.mrf.mxu0
        %v3012 = vadd.f32 %v2899, %v3011
        %3013 = vmatmul.f32.gmra.mxu0 %v2188
        %v3014 = vpop.f32.mrf.mxu0
        %v3015 = vadd.f32 %v2902, %v3014
        %3016 = vdwg.mxu0
        %3017 = vmatpush.msra.mxu0 %v2302
        %3018 = vmatpush.msra.mxu0 %v2301
        %3019 = vmatpush.msra.mxu0 %v2300
        %3020 = vmatpush.msra.mxu0 %v2299
        %3021 = vmatpush.msra.mxu0 %v2298
        %3022 = vmatpush.msra.mxu0 %v2297
        %3023 = vmatpush.msra.mxu0 %v2296
        %3024 = vmatpush.msra.mxu0 %v2295
        %3025 = vmatpush.msra.mxu0 %v2294
        %3026 = vmatpush.msra.mxu0 %v2293
        %3027 = vmatpush.msra.mxu0 %v2292
        %3028 = vmatpush.msra.mxu0 %v2291
        %3029 = vmatpush.msra.mxu0 %v2290
        %3030 = vmatpush.msra.mxu0 %v2289
        %3031 = vmatpush.msra.mxu0 %v2288
        %3032 = vmatpush.msra.mxu0 %v2287
        %3033 = vmatmul.f32.gmra.mxu0 %v1895
        %v3034 = vpop.f32.mrf.mxu0
        %v3035 = vadd.f32 %v2922, %v3034
        %3036 = vmatmul.f32.gmra.mxu0 %v1803
        %v3037 = vpop.f32.mrf.mxu0
        %v3038 = vadd.f32 %v2925, %v3037
        %3039 = vmatmul.f32.gmra.mxu0 %v1896
        %v3040 = vpop.f32.mrf.mxu0
        %v3041 = vadd.f32 %v2928, %v3040
        %3042 = vmatmul.f32.gmra.mxu0 %v1806
        %v3043 = vpop.f32.mrf.mxu0
        %v3044 = vadd.f32 %v2931, %v3043
        %3045 = vmatmul.f32.gmra.mxu0 %v1897
        %v3046 = vpop.f32.mrf.mxu0
        %v3047 = vadd.f32 %v2934, %v3046
        %3048 = vmatmul.f32.gmra.mxu0 %v1809
        %v3049 = vpop.f32.mrf.mxu0
        %v3050 = vadd.f32 %v2937, %v3049
        %3051 = vmatmul.f32.gmra.mxu0 %v1898
        %v3052 = vpop.f32.mrf.mxu0
        %v3053 = vadd.f32 %v2940, %v3052
        %3054 = vmatmul.f32.gmra.mxu0 %v1812
        %v3055 = vpop.f32.mrf.mxu0
        %v3056 = vadd.f32 %v2943, %v3055
        %3057 = vmatmul.f32.gmra.mxu0 %v1899
        %v3058 = vpop.f32.mrf.mxu0
        %v3059 = vadd.f32 %v2946, %v3058
        %3060 = vmatmul.f32.gmra.mxu0 %v1815
        %v3061 = vpop.f32.mrf.mxu0
        %v3062 = vadd.f32 %v2949, %v3061
        %3063 = vmatmul.f32.gmra.mxu0 %v1900
        %v3064 = vpop.f32.mrf.mxu0
        %v3065 = vadd.f32 %v2952, %v3064
        %3066 = vmatmul.f32.gmra.mxu0 %v1818
        %v3067 = vpop.f32.mrf.mxu0
        %v3068 = vadd.f32 %v2955, %v3067
        %3069 = vmatmul.f32.gmra.mxu0 %v1901
        %v3070 = vpop.f32.mrf.mxu0
        %v3071 = vadd.f32 %v2958, %v3070
        %3072 = vmatmul.f32.gmra.mxu0 %v1821
        %v3073 = vpop.f32.mrf.mxu0
        %v3074 = vadd.f32 %v2961, %v3073
        %3075 = vmatmul.f32.gmra.mxu0 %v1902
        %v3076 = vpop.f32.mrf.mxu0
        %v3077 = vadd.f32 %v2964, %v3076
        %3078 = vmatmul.f32.gmra.mxu0 %v1824
        %v3079 = vpop.f32.mrf.mxu0
        %v3080 = vadd.f32 %v2967, %v3079
        %3081 = vmatmul.f32.gmra.mxu0 %v1903
        %v3082 = vpop.f32.mrf.mxu0
        %v3083 = vadd.f32 %v2970, %v3082
        %3084 = vmatmul.f32.gmra.mxu0 %v1827
        %v3085 = vpop.f32.mrf.mxu0
        %v3086 = vadd.f32 %v2973, %v3085
        %3087 = vmatmul.f32.gmra.mxu0 %v1904
        %v3088 = vpop.f32.mrf.mxu0
        %v3089 = vadd.f32 %v2976, %v3088
        %3090 = vmatmul.f32.gmra.mxu0 %v1830
        %v3091 = vpop.f32.mrf.mxu0
        %v3092 = vadd.f32 %v2979, %v3091
        %3093 = vmatmul.f32.gmra.mxu0 %v1905
        %v3094 = vpop.f32.mrf.mxu0
        %v3095 = vadd.f32 %v2982, %v3094
        %3096 = vmatmul.f32.gmra.mxu0 %v1833
        %v3097 = vpop.f32.mrf.mxu0
        %v3098 = vadd.f32 %v2985, %v3097
        %3099 = vmatmul.f32.gmra.mxu0 %v1906
        %v3100 = vpop.f32.mrf.mxu0
        %v3101 = vadd.f32 %v2988, %v3100
        %3102 = vmatmul.f32.gmra.mxu0 %v1836
        %v3103 = vpop.f32.mrf.mxu0
        %v3104 = vadd.f32 %v2991, %v3103
        %3105 = vmatmul.f32.gmra.mxu0 %v1907
        %v3106 = vpop.f32.mrf.mxu0
        %v3107 = vadd.f32 %v2994, %v3106
        %3108 = vmatmul.f32.gmra.mxu0 %v1839
        %v3109 = vpop.f32.mrf.mxu0
        %v3110 = vadd.f32 %v2997, %v3109
        %3111 = vmatmul.f32.gmra.mxu0 %v1908
        %v3112 = vpop.f32.mrf.mxu0
        %v3113 = vadd.f32 %v3000, %v3112
        %3114 = vmatmul.f32.gmra.mxu0 %v1842
        %v3115 = vpop.f32.mrf.mxu0
        %v3116 = vadd.f32 %v3003, %v3115
        %3117 = vmatmul.f32.gmra.mxu0 %v1909
        %v3118 = vpop.f32.mrf.mxu0
        %v3119 = vadd.f32 %v3006, %v3118
        %3120 = vmatmul.f32.gmra.mxu0 %v1845
        %v3121 = vpop.f32.mrf.mxu0
        %v3122 = vadd.f32 %v3009, %v3121
        %3123 = vmatmul.f32.gmra.mxu0 0.0
        %v3124 = vpop.f32.mrf.mxu0
        %v3125 = vadd.f32 %v3012, %v3124
        %3126 = vmatmul.f32.gmra.mxu0 0.0
        %v3127 = vpop.f32.mrf.mxu0
        %v3128 = vadd.f32 %v3015, %v3127
        %3129 = vdwg.mxu0
        %3130 = vmatpush.msra.mxu0 %v2318
        %3131 = vmatpush.msra.mxu0 %v2317
        %3132 = vmatpush.msra.mxu0 %v2316
        %3133 = vmatpush.msra.mxu0 %v2315
        %3134 = vmatpush.msra.mxu0 %v2314
        %3135 = vmatpush.msra.mxu0 %v2313
        %3136 = vmatpush.msra.mxu0 %v2312
        %3137 = vmatpush.msra.mxu0 %v2311
        %3138 = vmatpush.msra.mxu0 %v2310
        %3139 = vmatpush.msra.mxu0 %v2309
        %3140 = vmatpush.msra.mxu0 %v2308
        %3141 = vmatpush.msra.mxu0 %v2307
        %3142 = vmatpush.msra.mxu0 %v2306
        %3143 = vmatpush.msra.mxu0 %v2305
        %3144 = vmatpush.msra.mxu0 %v2304
        %3145 = vmatpush.msra.mxu0 %v2303
        %3146 = vmatmul.f32.gmra.mxu0 %v1967
        %v3147 = vpop.f32.mrf.mxu0
        %v3148 = vadd.f32 %v3035, %v3147
        %3149 = vmatmul.f32.gmra.mxu0 %v1969
        %v3150 = vpop.f32.mrf.mxu0
        %v3151 = vadd.f32 %v3038, %v3150
        %3152 = vmatmul.f32.gmra.mxu0 %v1972
        %v3153 = vpop.f32.mrf.mxu0
        %v3154 = vadd.f32 %v3041, %v3153
        %3155 = vmatmul.f32.gmra.mxu0 %v1974
        %v3156 = vpop.f32.mrf.mxu0
        %v3157 = vadd.f32 %v3044, %v3156
        %3158 = vmatmul.f32.gmra.mxu0 %v1977
        %v3159 = vpop.f32.mrf.mxu0
        %v3160 = vadd.f32 %v3047, %v3159
        %3161 = vmatmul.f32.gmra.mxu0 %v1979
        %v3162 = vpop.f32.mrf.mxu0
        %v3163 = vadd.f32 %v3050, %v3162
        %3164 = vmatmul.f32.gmra.mxu0 %v1982
        %v3165 = vpop.f32.mrf.mxu0
        %v3166 = vadd.f32 %v3053, %v3165
        %3167 = vmatmul.f32.gmra.mxu0 %v1984
        %v3168 = vpop.f32.mrf.mxu0
        %v3169 = vadd.f32 %v3056, %v3168
        %3170 = vmatmul.f32.gmra.mxu0 %v1987
        %v3171 = vpop.f32.mrf.mxu0
        %v3172 = vadd.f32 %v3059, %v3171
        %3173 = vmatmul.f32.gmra.mxu0 %v1989
        %v3174 = vpop.f32.mrf.mxu0
        %v3175 = vadd.f32 %v3062, %v3174
        %3176 = vmatmul.f32.gmra.mxu0 %v1992
        %v3177 = vpop.f32.mrf.mxu0
        %v3178 = vadd.f32 %v3065, %v3177
        %3179 = vmatmul.f32.gmra.mxu0 %v1994
        %v3180 = vpop.f32.mrf.mxu0
        %v3181 = vadd.f32 %v3068, %v3180
        %3182 = vmatmul.f32.gmra.mxu0 %v1997
        %v3183 = vpop.f32.mrf.mxu0
        %v3184 = vadd.f32 %v3071, %v3183
        %3185 = vmatmul.f32.gmra.mxu0 %v1999
        %v3186 = vpop.f32.mrf.mxu0
        %v3187 = vadd.f32 %v3074, %v3186
        %3188 = vmatmul.f32.gmra.mxu0 %v2002
        %v3189 = vpop.f32.mrf.mxu0
        %v3190 = vadd.f32 %v3077, %v3189
        %3191 = vmatmul.f32.gmra.mxu0 %v2004
        %v3192 = vpop.f32.mrf.mxu0
        %v3193 = vadd.f32 %v3080, %v3192
        %3194 = vmatmul.f32.gmra.mxu0 %v2007
        %v3195 = vpop.f32.mrf.mxu0
        %v3196 = vadd.f32 %v3083, %v3195
        %3197 = vmatmul.f32.gmra.mxu0 %v2009
        %v3198 = vpop.f32.mrf.mxu0
        %v3199 = vadd.f32 %v3086, %v3198
        %3200 = vmatmul.f32.gmra.mxu0 %v2012
        %v3201 = vpop.f32.mrf.mxu0
        %v3202 = vadd.f32 %v3089, %v3201
        %3203 = vmatmul.f32.gmra.mxu0 %v2014
        %v3204 = vpop.f32.mrf.mxu0
        %v3205 = vadd.f32 %v3092, %v3204
        %3206 = vmatmul.f32.gmra.mxu0 %v2017
        %v3207 = vpop.f32.mrf.mxu0
        %v3208 = vadd.f32 %v3095, %v3207
        %3209 = vmatmul.f32.gmra.mxu0 %v2019
        %v3210 = vpop.f32.mrf.mxu0
        %v3211 = vadd.f32 %v3098, %v3210
        %3212 = vmatmul.f32.gmra.mxu0 %v2022
        %v3213 = vpop.f32.mrf.mxu0
        %v3214 = vadd.f32 %v3101, %v3213
        %3215 = vmatmul.f32.gmra.mxu0 %v2024
        %v3216 = vpop.f32.mrf.mxu0
        %v3217 = vadd.f32 %v3104, %v3216
        %3218 = vmatmul.f32.gmra.mxu0 %v2027
        %v3219 = vpop.f32.mrf.mxu0
        %v3220 = vadd.f32 %v3107, %v3219
        %3221 = vmatmul.f32.gmra.mxu0 %v2029
        %v3222 = vpop.f32.mrf.mxu0
        %v3223 = vadd.f32 %v3110, %v3222
        %3224 = vmatmul.f32.gmra.mxu0 %v2032
        %v3225 = vpop.f32.mrf.mxu0
        %v3226 = vadd.f32 %v3113, %v3225
        %3227 = vmatmul.f32.gmra.mxu0 %v2034
        %v3228 = vpop.f32.mrf.mxu0
        %v3229 = vadd.f32 %v3116, %v3228
        %3230 = vmatmul.f32.gmra.mxu0 %v2179
        %v3231 = vpop.f32.mrf.mxu0
        %v3232 = vadd.f32 %v3119, %v3231
        %3233 = vmatmul.f32.gmra.mxu0 %v2181
        %v3234 = vpop.f32.mrf.mxu0
        %v3235 = vadd.f32 %v3122, %v3234
        %3236 = vmatmul.f32.gmra.mxu0 %v1959
        %v3237 = vpop.f32.mrf.mxu0
        %v3238 = vadd.f32 %v3125, %v3237
        %3239 = vmatmul.f32.gmra.mxu0 %v1959
        %v3240 = vpop.f32.mrf.mxu0
        %v3241 = vadd.f32 %v3128, %v3240
        %3242 = vdwg.mxu0
        %3243 = vmatpush.msra.mxu0 %v2334
        %3244 = vmatpush.msra.mxu0 %v2333
        %3245 = vmatpush.msra.mxu0 %v2332
        %3246 = vmatpush.msra.mxu0 %v2331
        %3247 = vmatpush.msra.mxu0 %v2330
        %3248 = vmatpush.msra.mxu0 %v2329
        %3249 = vmatpush.msra.mxu0 %v2328
        %3250 = vmatpush.msra.mxu0 %v2327
        %3251 = vmatpush.msra.mxu0 %v2326
        %3252 = vmatpush.msra.mxu0 %v2325
        %3253 = vmatpush.msra.mxu0 %v2324
        %3254 = vmatpush.msra.mxu0 %v2323
        %3255 = vmatpush.msra.mxu0 %v2322
        %3256 = vmatpush.msra.mxu0 %v2321
        %3257 = vmatpush.msra.mxu0 %v2320
        %3258 = vmatpush.msra.mxu0 %v2319
        %3259 = vmatmul.f32.gmra.mxu0 %v2076
        %v3260 = vpop.f32.mrf.mxu0
        %v3261 = vadd.f32 %v3148, %v3260
        %3262 = vmatmul.f32.gmra.mxu0 %v2078
        %v3263 = vpop.f32.mrf.mxu0
        %v3264 = vadd.f32 %v3151, %v3263
        %3265 = vmatmul.f32.gmra.mxu0 %v2081
        %v3266 = vpop.f32.mrf.mxu0
        %v3267 = vadd.f32 %v3154, %v3266
        %3268 = vmatmul.f32.gmra.mxu0 %v2083
        %v3269 = vpop.f32.mrf.mxu0
        %v3270 = vadd.f32 %v3157, %v3269
        %3271 = vmatmul.f32.gmra.mxu0 %v2086
        %v3272 = vpop.f32.mrf.mxu0
        %v3273 = vadd.f32 %v3160, %v3272
        %3274 = vmatmul.f32.gmra.mxu0 %v2088
        %v3275 = vpop.f32.mrf.mxu0
        %v3276 = vadd.f32 %v3163, %v3275
        %3277 = vmatmul.f32.gmra.mxu0 %v2091
        %v3278 = vpop.f32.mrf.mxu0
        %v3279 = vadd.f32 %v3166, %v3278
        %3280 = vmatmul.f32.gmra.mxu0 %v2093
        %v3281 = vpop.f32.mrf.mxu0
        %v3282 = vadd.f32 %v3169, %v3281
        %3283 = vmatmul.f32.gmra.mxu0 %v2096
        %v3284 = vpop.f32.mrf.mxu0
        %v3285 = vadd.f32 %v3172, %v3284
        %3286 = vmatmul.f32.gmra.mxu0 %v2098
        %v3287 = vpop.f32.mrf.mxu0
        %v3288 = vadd.f32 %v3175, %v3287
        %3289 = vmatmul.f32.gmra.mxu0 %v2101
        %v3290 = vpop.f32.mrf.mxu0
        %v3291 = vadd.f32 %v3178, %v3290
        %3292 = vmatmul.f32.gmra.mxu0 %v2103
        %v3293 = vpop.f32.mrf.mxu0
        %v3294 = vadd.f32 %v3181, %v3293
        %3295 = vmatmul.f32.gmra.mxu0 %v2106
        %v3296 = vpop.f32.mrf.mxu0
        %v3297 = vadd.f32 %v3184, %v3296
        %3298 = vmatmul.f32.gmra.mxu0 %v2108
        %v3299 = vpop.f32.mrf.mxu0
        %v3300 = vadd.f32 %v3187, %v3299
        %3301 = vmatmul.f32.gmra.mxu0 %v2111
        %v3302 = vpop.f32.mrf.mxu0
        %v3303 = vadd.f32 %v3190, %v3302
        %3304 = vmatmul.f32.gmra.mxu0 %v2113
        %v3305 = vpop.f32.mrf.mxu0
        %v3306 = vadd.f32 %v3193, %v3305
        %3307 = vmatmul.f32.gmra.mxu0 %v2116
        %v3308 = vpop.f32.mrf.mxu0
        %v3309 = vadd.f32 %v3196, %v3308
        %3310 = vmatmul.f32.gmra.mxu0 %v2118
        %v3311 = vpop.f32.mrf.mxu0
        %v3312 = vadd.f32 %v3199, %v3311
        %3313 = vmatmul.f32.gmra.mxu0 %v2121
        %v3314 = vpop.f32.mrf.mxu0
        %v3315 = vadd.f32 %v3202, %v3314
        %3316 = vmatmul.f32.gmra.mxu0 %v2123
        %v3317 = vpop.f32.mrf.mxu0
        %v3318 = vadd.f32 %v3205, %v3317
        %3319 = vmatmul.f32.gmra.mxu0 %v2126
        %v3320 = vpop.f32.mrf.mxu0
        %v3321 = vadd.f32 %v3208, %v3320
        %3322 = vmatmul.f32.gmra.mxu0 %v2128
        %v3323 = vpop.f32.mrf.mxu0
        %v3324 = vadd.f32 %v3211, %v3323
        %3325 = vmatmul.f32.gmra.mxu0 %v2131
        %v3326 = vpop.f32.mrf.mxu0
        %v3327 = vadd.f32 %v3214, %v3326
        %3328 = vmatmul.f32.gmra.mxu0 %v2133
        %v3329 = vpop.f32.mrf.mxu0
        %v3330 = vadd.f32 %v3217, %v3329
        %3331 = vmatmul.f32.gmra.mxu0 %v2136
        %v3332 = vpop.f32.mrf.mxu0
        %v3333 = vadd.f32 %v3220, %v3332
        %3334 = vmatmul.f32.gmra.mxu0 %v2138
        %v3335 = vpop.f32.mrf.mxu0
        %v3336 = vadd.f32 %v3223, %v3335
        %3337 = vmatmul.f32.gmra.mxu0 %v2141
        %v3338 = vpop.f32.mrf.mxu0
        %v3339 = vadd.f32 %v3226, %v3338
        %3340 = vmatmul.f32.gmra.mxu0 %v2143
        %v3341 = vpop.f32.mrf.mxu0
        %v3342 = vadd.f32 %v3229, %v3341
        %3343 = vmatmul.f32.gmra.mxu0 %v2186
        %v3344 = vpop.f32.mrf.mxu0
        %v3345 = vadd.f32 %v3232, %v3344
        %3346 = vmatmul.f32.gmra.mxu0 %v2188
        %v3347 = vpop.f32.mrf.mxu0
        %v3348 = vadd.f32 %v3235, %v3347
        %3349 = vmatmul.f32.gmra.mxu0 %v2068
        %v3350 = vpop.f32.mrf.mxu0
        %v3351 = vadd.f32 %v3238, %v3350
        %3352 = vmatmul.f32.gmra.mxu0 %v2068
        %v3353 = vpop.f32.mrf.mxu0
        %v3354 = vadd.f32 %v3241, %v3353
        %3355 = vdwg.mxu0
        %v3356 = vmax.f32 %v3261, 0.0
        %v3357 = vmax.f32 %v3264, 0.0
        %v3358 = vmax.f32 %v3267, 0.0
        %v3359 = vmax.f32 %v3270, 0.0
        %v3360 = vmax.f32 %v3273, 0.0
        %v3361 = vmax.f32 %v3276, 0.0
        %v3362 = vmax.f32 %v3279, 0.0
        %v3363 = vmax.f32 %v3282, 0.0
        %v3364 = vmax.f32 %v3285, 0.0
        %v3365 = vmax.f32 %v3288, 0.0
        %v3366 = vmax.f32 %v3291, 0.0
        %v3367 = vmax.f32 %v3294, 0.0
        %v3368 = vmax.f32 %v3297, 0.0
        %v3369 = vmax.f32 %v3300, 0.0
        %v3370 = vmax.f32 %v3303, 0.0
        %v3371 = vmax.f32 %v3306, 0.0
        %v3372 = vmax.f32 %v3309, 0.0
        %v3373 = vmax.f32 %v3312, 0.0
        %v3374 = vmax.f32 %v3315, 0.0
        %v3375 = vmax.f32 %v3318, 0.0
        %v3376 = vmax.f32 %v3321, 0.0
        %v3377 = vmax.f32 %v3324, 0.0
        %v3378 = vmax.f32 %v3327, 0.0
        %v3379 = vmax.f32 %v3330, 0.0
        %v3380 = vmax.f32 %v3333, 0.0
        %v3381 = vmax.f32 %v3336, 0.0
        %v3382 = vmax.f32 %v3339, 0.0
        %v3383 = vmax.f32 %v3342, 0.0
        %v3384 = vmax.f32 %v3345, 0.0
        %v3385 = vmax.f32 %v3348, 0.0
        %v3386 = vmax.f32 %v3351, 0.0
        %v3387 = vmax.f32 %v3354, 0.0
        %3388 = vst [vmem:[%s265] sm:$0xff] %v3356
        %3389 = vst [vmem:[%s265 + $0x8] sm:$0xff] %v3357
        %3390 = vst [vmem:[%s265 + $0x10] sm:$0xff] %v3358
        %3391 = vst [vmem:[%s265 + $0x18] sm:$0xff] %v3359
        %3392 = vst [vmem:[%s265 + $0x20] sm:$0xff] %v3360
        %3393 = vst [vmem:[%s265 + $0x28] sm:$0xff] %v3361
        %3394 = vst [vmem:[%s265 + $0x30] sm:$0xff] %v3362
        %3395 = vst [vmem:[%s265 + $0x38] sm:$0xff] %v3363
        %3396 = vst [vmem:[%s265 + $0x40] sm:$0xff] %v3364
        %3397 = vst [vmem:[%s265 + $0x48] sm:$0xff] %v3365
        %3398 = vst [vmem:[%s265 + $0x50] sm:$0xff] %v3366
        %3399 = vst [vmem:[%s265 + $0x58] sm:$0xff] %v3367
        %3400 = vst [vmem:[%s265 + $0x60] sm:$0xff] %v3368
        %3401 = vst [vmem:[%s265 + $0x68] sm:$0xff] %v3369
        %3402 = vst [vmem:[%s265 + $0x70] sm:$0xff] %v3370
        %3403 = vst [vmem:[%s265 + $0x78] sm:$0xff] %v3371
        %3404 = vst [vmem:[%s265 + $0x80] sm:$0xff] %v3372
        %3405 = vst [vmem:[%s265 + $0x88] sm:$0xff] %v3373
        %3406 = vst [vmem:[%s265 + $0x90] sm:$0xff] %v3374
        %3407 = vst [vmem:[%s265 + $0x98] sm:$0xff] %v3375
        %3408 = vst [vmem:[%s265 + $0xa0] sm:$0xff] %v3376
        %3409 = vst [vmem:[%s265 + $0xa8] sm:$0xff] %v3377
        %3410 = vst [vmem:[%s265 + $0xb0] sm:$0xff] %v3378
        %3411 = vst [vmem:[%s265 + $0xb8] sm:$0xff] %v3379
        %3412 = vst [vmem:[%s265 + $0xc0] sm:$0xff] %v3380
        %3413 = vst [vmem:[%s265 + $0xc8] sm:$0xff] %v3381
        %3414 = vst [vmem:[%s265 + $0xd0] sm:$0xff] %v3382
        %3415 = vst [vmem:[%s265 + $0xd8] sm:$0xff] %v3383
        %3416 = vst [vmem:[%s265 + $0xe0] sm:$0xff] %v3384
        %3417 = vst [vmem:[%s265 + $0xe8] sm:$0xff] %v3385
        %3418 = vst [vmem:[%s265 + $0xf0] sm:$0xff] %v3386
        %3419 = vst [vmem:[%s265 + $0xf8] sm:$0xff] %v3387
        %v3420 = vmax.f32 %v3356, %v3358
        %v3421 = vmax.f32 %v3357, %v3359
        %v3422 = vmax.f32 %v3360, %v3362
        %v3423 = vmax.f32 %v3361, %v3363
        %v3424 = vmax.f32 %v3364, %v3366
        %v3425 = vmax.f32 %v3365, %v3367
        %v3426 = vmax.f32 %v3368, %v3370
        %v3427 = vmax.f32 %v3369, %v3371
        %v3428 = vmax.f32 %v3372, %v3374
        %v3429 = vmax.f32 %v3373, %v3375
        %v3430 = vmax.f32 %v3376, %v3378
        %v3431 = vmax.f32 %v3377, %v3379
        %v3432 = vmax.f32 %v3380, %v3382
        %v3433 = vmax.f32 %v3381, %v3383
        %v3434 = vmax.f32 %v3384, %v3386
        %v3435 = vmax.f32 %v3385, %v3387
        %vm3436 = vcmask 1041408
        %v3437 = vsel %vm3436, %v3420, -inf
        %v3438 = vrot.slane %v3437, 4
        %v3439 = vmax.f32 %v3437, %v3438
        %v3440 = vrot.slane %v3439, 2
        %v3441 = vmax.f32 %v3439, %v3440
        %v3442 = vrot.slane %v3441, 1
        %v3443 = vmax.f32 %v3441, %v3442
        %v3444 = vsel %vm3436, %v3422, -inf
        %v3445 = vrot.slane %v3444, 4
        %v3446 = vmax.f32 %v3444, %v3445
        %v3447 = vrot.slane %v3446, 2
        %v3448 = vmax.f32 %v3446, %v3447
        %v3449 = vrot.slane %v3448, 1
        %v3450 = vmax.f32 %v3448, %v3449
        %v3451 = vsel %vm3436, %v3424, -inf
        %v3452 = vrot.slane %v3451, 4
        %v3453 = vmax.f32 %v3451, %v3452
        %v3454 = vrot.slane %v3453, 2
        %v3455 = vmax.f32 %v3453, %v3454
        %v3456 = vrot.slane %v3455, 1
        %v3457 = vmax.f32 %v3455, %v3456
        %v3458 = vsel %vm3436, %v3426, -inf
        %v3459 = vrot.slane %v3458, 4
        %v3460 = vmax.f32 %v3458, %v3459
        %v3461 = vrot.slane %v3460, 2
        %v3462 = vmax.f32 %v3460, %v3461
        %v3463 = vrot.slane %v3462, 1
        %v3464 = vmax.f32 %v3462, %v3463
        %v3465 = vsel %vm3436, %v3428, -inf
        %v3466 = vrot.slane %v3465, 4
        %v3467 = vmax.f32 %v3465, %v3466
        %v3468 = vrot.slane %v3467, 2
        %v3469 = vmax.f32 %v3467, %v3468
        %v3470 = vrot.slane %v3469, 1
        %v3471 = vmax.f32 %v3469, %v3470
        %v3472 = vsel %vm3436, %v3430, -inf
        %v3473 = vrot.slane %v3472, 4
        %v3474 = vmax.f32 %v3472, %v3473
        %v3475 = vrot.slane %v3474, 2
        %v3476 = vmax.f32 %v3474, %v3475
        %v3477 = vrot.slane %v3476, 1
        %v3478 = vmax.f32 %v3476, %v3477
        %v3479 = vsel %vm3436, %v3432, -inf
        %v3480 = vrot.slane %v3479, 4
        %v3481 = vmax.f32 %v3479, %v3480
        %v3482 = vrot.slane %v3481, 2
        %v3483 = vmax.f32 %v3481, %v3482
        %v3484 = vrot.slane %v3483, 1
        %v3485 = vmax.f32 %v3483, %v3484
        %v3486 = vsel %vm3436, %v3434, -inf
        %v3487 = vrot.slane %v3486, 4
        %v3488 = vmax.f32 %v3486, %v3487
        %v3489 = vrot.slane %v3488, 2
        %v3490 = vmax.f32 %v3488, %v3489
        %v3491 = vrot.slane %v3490, 1
        %v3492 = vmax.f32 %v3490, %v3491
        %vm3493 = vcmask 1043458
        %v3494 = vsel %vm3493, %v3420, -inf
        %v3495 = vrot.slane %v3494, 4
        %v3496 = vmax.f32 %v3494, %v3495
        %v3497 = vrot.slane %v3496, 2
        %v3498 = vmax.f32 %v3496, %v3497
        %v3499 = vrot.slane %v3498, 1
        %v3500 = vmax.f32 %v3498, %v3499
        %v3501 = vsel %vm3493, %v3422, -inf
        %v3502 = vrot.slane %v3501, 4
        %v3503 = vmax.f32 %v3501, %v3502
        %v3504 = vrot.slane %v3503, 2
        %v3505 = vmax.f32 %v3503, %v3504
        %v3506 = vrot.slane %v3505, 1
        %v3507 = vmax.f32 %v3505, %v3506
        %v3508 = vsel %vm3493, %v3424, -inf
        %v3509 = vrot.slane %v3508, 4
        %v3510 = vmax.f32 %v3508, %v3509
        %v3511 = vrot.slane %v3510, 2
        %v3512 = vmax.f32 %v3510, %v3511
        %v3513 = vrot.slane %v3512, 1
        %v3514 = vmax.f32 %v3512, %v3513
        %v3515 = vsel %vm3493, %v3426, -inf
        %v3516 = vrot.slane %v3515, 4
        %v3517 = vmax.f32 %v3515, %v3516
        %v3518 = vrot.slane %v3517, 2
        %v3519 = vmax.f32 %v3517, %v3518
        %v3520 = vrot.slane %v3519, 1
        %v3521 = vmax.f32 %v3519, %v3520
        %v3522 = vsel %vm3493, %v3428, -inf
        %v3523 = vrot.slane %v3522, 4
        %v3524 = vmax.f32 %v3522, %v3523
        %v3525 = vrot.slane %v3524, 2
        %v3526 = vmax.f32 %v3524, %v3525
        %v3527 = vrot.slane %v3526, 1
        %v3528 = vmax.f32 %v3526, %v3527
        %v3529 = vsel %vm3493, %v3430, -inf
        %v3530 = vrot.slane %v3529, 4
        %v3531 = vmax.f32 %v3529, %v3530
        %v3532 = vrot.slane %v3531, 2
        %v3533 = vmax.f32 %v3531, %v3532
        %v3534 = vrot.slane %v3533, 1
        %v3535 = vmax.f32 %v3533, %v3534
        %v3536 = vsel %vm3493, %v3432, -inf
        %v3537 = vrot.slane %v3536, 4
        %v3538 = vmax.f32 %v3536, %v3537
        %v3539 = vrot.slane %v3538, 2
        %v3540 = vmax.f32 %v3538, %v3539
        %v3541 = vrot.slane %v3540, 1
        %v3542 = vmax.f32 %v3540, %v3541
        %v3543 = vsel %vm3493, %v3434, -inf
        %v3544 = vrot.slane %v3543, 4
        %v3545 = vmax.f32 %v3543, %v3544
        %v3546 = vrot.slane %v3545, 2
        %v3547 = vmax.f32 %v3545, %v3546
        %v3548 = vrot.slane %v3547, 1
        %v3549 = vmax.f32 %v3547, %v3548
        %vm3550 = vcmask 1045508
        %v3551 = vsel %vm3550, %v3420, -inf
        %v3552 = vrot.slane %v3551, 4
        %v3553 = vmax.f32 %v3551, %v3552
        %v3554 = vrot.slane %v3553, 2
        %v3555 = vmax.f32 %v3553, %v3554
        %v3556 = vrot.slane %v3555, 1
        %v3557 = vmax.f32 %v3555, %v3556
        %v3558 = vsel %vm3550, %v3422, -inf
        %v3559 = vrot.slane %v3558, 4
        %v3560 = vmax.f32 %v3558, %v3559
        %v3561 = vrot.slane %v3560, 2
        %v3562 = vmax.f32 %v3560, %v3561
        %v3563 = vrot.slane %v3562, 1
        %v3564 = vmax.f32 %v3562, %v3563
        %v3565 = vsel %vm3550, %v3424, -inf
        %v3566 = vrot.slane %v3565, 4
        %v3567 = vmax.f32 %v3565, %v3566
        %v3568 = vrot.slane %v3567, 2
        %v3569 = vmax.f32 %v3567, %v3568
        %v3570 = vrot.slane %v3569, 1
        %v3571 = vmax.f32 %v3569, %v3570
        %v3572 = vsel %vm3550, %v3426, -inf
        %v3573 = vrot.slane %v3572, 4
        %v3574 = vmax.f32 %v3572, %v3573
        %v3575 = vrot.slane %v3574, 2
        %v3576 = vmax.f32 %v3574, %v3575
        %v3577 = vrot.slane %v3576, 1
        %v3578 = vmax.f32 %v3576, %v3577
        %v3579 = vsel %vm3550, %v3428, -inf
        %v3580 = vrot.slane %v3579, 4
        %v3581 = vmax.f32 %v3579, %v3580
        %v3582 = vrot.slane %v3581, 2
        %v3583 = vmax.f32 %v3581, %v3582
        %v3584 = vrot.slane %v3583, 1
        %v3585 = vmax.f32 %v3583, %v3584
        %v3586 = vsel %vm3550, %v3430, -inf
        %v3587 = vrot.slane %v3586, 4
        %v3588 = vmax.f32 %v3586, %v3587
        %v3589 = vrot.slane %v3588, 2
        %v3590 = vmax.f32 %v3588, %v3589
        %v3591 = vrot.slane %v3590, 1
        %v3592 = vmax.f32 %v3590, %v3591
        %v3593 = vsel %vm3550, %v3432, -inf
        %v3594 = vrot.slane %v3593, 4
        %v3595 = vmax.f32 %v3593, %v3594
        %v3596 = vrot.slane %v3595, 2
        %v3597 = vmax.f32 %v3595, %v3596
        %v3598 = vrot.slane %v3597, 1
        %v3599 = vmax.f32 %v3597, %v3598
        %v3600 = vsel %vm3550, %v3434, -inf
        %v3601 = vrot.slane %v3600, 4
        %v3602 = vmax.f32 %v3600, %v3601
        %v3603 = vrot.slane %v3602, 2
        %v3604 = vmax.f32 %v3602, %v3603
        %v3605 = vrot.slane %v3604, 1
        %v3606 = vmax.f32 %v3604, %v3605
        %vm3607 = vcmask 1047558
        %v3608 = vsel %vm3607, %v3420, -inf
        %v3609 = vrot.slane %v3608, 4
        %v3610 = vmax.f32 %v3608, %v3609
        %v3611 = vrot.slane %v3610, 2
        %v3612 = vmax.f32 %v3610, %v3611
        %v3613 = vrot.slane %v3612, 1
        %v3614 = vmax.f32 %v3612, %v3613
        %v3615 = vsel %vm3607, %v3422, -inf
        %v3616 = vrot.slane %v3615, 4
        %v3617 = vmax.f32 %v3615, %v3616
        %v3618 = vrot.slane %v3617, 2
        %v3619 = vmax.f32 %v3617, %v3618
        %v3620 = vrot.slane %v3619, 1
        %v3621 = vmax.f32 %v3619, %v3620
        %v3622 = vsel %vm3607, %v3424, -inf
        %v3623 = vrot.slane %v3622, 4
        %v3624 = vmax.f32 %v3622, %v3623
        %v3625 = vrot.slane %v3624, 2
        %v3626 = vmax.f32 %v3624, %v3625
        %v3627 = vrot.slane %v3626, 1
        %v3628 = vmax.f32 %v3626, %v3627
        %v3629 = vsel %vm3607, %v3426, -inf
        %v3630 = vrot.slane %v3629, 4
        %v3631 = vmax.f32 %v3629, %v3630
        %v3632 = vrot.slane %v3631, 2
        %v3633 = vmax.f32 %v3631, %v3632
        %v3634 = vrot.slane %v3633, 1
        %v3635 = vmax.f32 %v3633, %v3634
        %v3636 = vsel %vm3607, %v3428, -inf
        %v3637 = vrot.slane %v3636, 4
        %v3638 = vmax.f32 %v3636, %v3637
        %v3639 = vrot.slane %v3638, 2
        %v3640 = vmax.f32 %v3638, %v3639
        %v3641 = vrot.slane %v3640, 1
        %v3642 = vmax.f32 %v3640, %v3641
        %v3643 = vsel %vm3607, %v3430, -inf
        %v3644 = vrot.slane %v3643, 4
        %v3645 = vmax.f32 %v3643, %v3644
        %v3646 = vrot.slane %v3645, 2
        %v3647 = vmax.f32 %v3645, %v3646
        %v3648 = vrot.slane %v3647, 1
        %v3649 = vmax.f32 %v3647, %v3648
        %v3650 = vsel %vm3607, %v3432, -inf
        %v3651 = vrot.slane %v3650, 4
        %v3652 = vmax.f32 %v3650, %v3651
        %v3653 = vrot.slane %v3652, 2
        %v3654 = vmax.f32 %v3652, %v3653
        %v3655 = vrot.slane %v3654, 1
        %v3656 = vmax.f32 %v3654, %v3655
        %v3657 = vsel %vm3607, %v3434, -inf
        %v3658 = vrot.slane %v3657, 4
        %v3659 = vmax.f32 %v3657, %v3658
        %v3660 = vrot.slane %v3659, 2
        %v3661 = vmax.f32 %v3659, %v3660
        %v3662 = vrot.slane %v3661, 1
        %v3663 = vmax.f32 %v3661, %v3662
        %v3664 = vsel %vm3436, %v3421, -inf
        %v3665 = vrot.slane %v3664, 4
        %v3666 = vmax.f32 %v3664, %v3665
        %v3667 = vrot.slane %v3666, 2
        %v3668 = vmax.f32 %v3666, %v3667
        %v3669 = vrot.slane %v3668, 1
        %v3670 = vmax.f32 %v3668, %v3669
        %v3671 = vsel %vm3436, %v3423, -inf
        %v3672 = vrot.slane %v3671, 4
        %v3673 = vmax.f32 %v3671, %v3672
        %v3674 = vrot.slane %v3673, 2
        %v3675 = vmax.f32 %v3673, %v3674
        %v3676 = vrot.slane %v3675, 1
        %v3677 = vmax.f32 %v3675, %v3676
        %v3678 = vsel %vm3436, %v3425, -inf
        %v3679 = vrot.slane %v3678, 4
        %v3680 = vmax.f32 %v3678, %v3679
        %v3681 = vrot.slane %v3680, 2
        %v3682 = vmax.f32 %v3680, %v3681
        %v3683 = vrot.slane %v3682, 1
        %v3684 = vmax.f32 %v3682, %v3683
        %v3685 = vsel %vm3436, %v3427, -inf
        %v3686 = vrot.slane %v3685, 4
        %v3687 = vmax.f32 %v3685, %v3686
        %v3688 = vrot.slane %v3687, 2
        %v3689 = vmax.f32 %v3687, %v3688
        %v3690 = vrot.slane %v3689, 1
        %v3691 = vmax.f32 %v3689, %v3690
        %v3692 = vsel %vm3436, %v3429, -inf
        %v3693 = vrot.slane %v3692, 4
        %v3694 = vmax.f32 %v3692, %v3693
        %v3695 = vrot.slane %v3694, 2
        %v3696 = vmax.f32 %v3694, %v3695
        %v3697 = vrot.slane %v3696, 1
        %v3698 = vmax.f32 %v3696, %v3697
        %v3699 = vsel %vm3436, %v3431, -inf
        %v3700 = vrot.slane %v3699, 4
        %v3701 = vmax.f32 %v3699, %v3700
        %v3702 = vrot.slane %v3701, 2
        %v3703 = vmax.f32 %v3701, %v3702
        %v3704 = vrot.slane %v3703, 1
        %v3705 = vmax.f32 %v3703, %v3704
        %v3706 = vsel %vm3436, %v3433, -inf
        %v3707 = vrot.slane %v3706, 4
        %v3708 = vmax.f32 %v3706, %v3707
        %v3709 = vrot.slane %v3708, 2
        %v3710 = vmax.f32 %v3708, %v3709
        %v3711 = vrot.slane %v3710, 1
        %v3712 = vmax.f32 %v3710, %v3711
        %v3713 = vsel %vm3436, %v3435, -inf
        %v3714 = vrot.slane %v3713, 4
        %v3715 = vmax.f32 %v3713, %v3714
        %v3716 = vrot.slane %v3715, 2
        %v3717 = vmax.f32 %v3715, %v3716
        %v3718 = vrot.slane %v3717, 1
        %v3719 = vmax.f32 %v3717, %v3718
        %v3720 = vsel %vm3493, %v3421, -inf
        %v3721 = vrot.slane %v3720, 4
        %v3722 = vmax.f32 %v3720, %v3721
        %v3723 = vrot.slane %v3722, 2
        %v3724 = vmax.f32 %v3722, %v3723
        %v3725 = vrot.slane %v3724, 1
        %v3726 = vmax.f32 %v3724, %v3725
        %v3727 = vsel %vm3493, %v3423, -inf
        %v3728 = vrot.slane %v3727, 4
        %v3729 = vmax.f32 %v3727, %v3728
        %v3730 = vrot.slane %v3729, 2
        %v3731 = vmax.f32 %v3729, %v3730
        %v3732 = vrot.slane %v3731, 1
        %v3733 = vmax.f32 %v3731, %v3732
        %v3734 = vsel %vm3493, %v3425, -inf
        %v3735 = vrot.slane %v3734, 4
        %v3736 = vmax.f32 %v3734, %v3735
        %v3737 = vrot.slane %v3736, 2
        %v3738 = vmax.f32 %v3736, %v3737
        %v3739 = vrot.slane %v3738, 1
        %v3740 = vmax.f32 %v3738, %v3739
        %v3741 = vsel %vm3493, %v3427, -inf
        %v3742 = vrot.slane %v3741, 4
        %v3743 = vmax.f32 %v3741, %v3742
        %v3744 = vrot.slane %v3743, 2
        %v3745 = vmax.f32 %v3743, %v3744
        %v3746 = vrot.slane %v3745, 1
        %v3747 = vmax.f32 %v3745, %v3746
        %v3748 = vsel %vm3493, %v3429, -inf
        %v3749 = vrot.slane %v3748, 4
        %v3750 = vmax.f32 %v3748, %v3749
        %v3751 = vrot.slane %v3750, 2
        %v3752 = vmax.f32 %v3750, %v3751
        %v3753 = vrot.slane %v3752, 1
        %v3754 = vmax.f32 %v3752, %v3753
        %v3755 = vsel %vm3493, %v3431, -inf
        %v3756 = vrot.slane %v3755, 4
        %v3757 = vmax.f32 %v3755, %v3756
        %v3758 = vrot.slane %v3757, 2
        %v3759 = vmax.f32 %v3757, %v3758
        %v3760 = vrot.slane %v3759, 1
        %v3761 = vmax.f32 %v3759, %v3760
        %v3762 = vsel %vm3493, %v3433, -inf
        %v3763 = vrot.slane %v3762, 4
        %v3764 = vmax.f32 %v3762, %v3763
        %v3765 = vrot.slane %v3764, 2
        %v3766 = vmax.f32 %v3764, %v3765
        %v3767 = vrot.slane %v3766, 1
        %v3768 = vmax.f32 %v3766, %v3767
        %v3769 = vsel %vm3493, %v3435, -inf
        %v3770 = vrot.slane %v3769, 4
        %v3771 = vmax.f32 %v3769, %v3770
        %v3772 = vrot.slane %v3771, 2
        %v3773 = vmax.f32 %v3771, %v3772
        %v3774 = vrot.slane %v3773, 1
        %v3775 = vmax.f32 %v3773, %v3774
        %v3776 = vsel %vm3550, %v3421, -inf
        %v3777 = vrot.slane %v3776, 4
        %v3778 = vmax.f32 %v3776, %v3777
        %v3779 = vrot.slane %v3778, 2
        %v3780 = vmax.f32 %v3778, %v3779
        %v3781 = vrot.slane %v3780, 1
        %v3782 = vmax.f32 %v3780, %v3781
        %v3783 = vsel %vm3550, %v3423, -inf
        %v3784 = vrot.slane %v3783, 4
        %v3785 = vmax.f32 %v3783, %v3784
        %v3786 = vrot.slane %v3785, 2
        %v3787 = vmax.f32 %v3785, %v3786
        %v3788 = vrot.slane %v3787, 1
        %v3789 = vmax.f32 %v3787, %v3788
        %v3790 = vsel %vm3550, %v3425, -inf
        %v3791 = vrot.slane %v3790, 4
        %v3792 = vmax.f32 %v3790, %v3791
        %v3793 = vrot.slane %v3792, 2
        %v3794 = vmax.f32 %v3792, %v3793
        %v3795 = vrot.slane %v3794, 1
        %v3796 = vmax.f32 %v3794, %v3795
        %v3797 = vsel %vm3550, %v3427, -inf
        %v3798 = vrot.slane %v3797, 4
        %v3799 = vmax.f32 %v3797, %v3798
        %v3800 = vrot.slane %v3799, 2
        %v3801 = vmax.f32 %v3799, %v3800
        %v3802 = vrot.slane %v3801, 1
        %v3803 = vmax.f32 %v3801, %v3802
        %v3804 = vsel %vm3550, %v3429, -inf
        %v3805 = vrot.slane %v3804, 4
        %v3806 = vmax.f32 %v3804, %v3805
        %v3807 = vrot.slane %v3806, 2
        %v3808 = vmax.f32 %v3806, %v3807
        %v3809 = vrot.slane %v3808, 1
        %v3810 = vmax.f32 %v3808, %v3809
        %v3811 = vsel %vm3550, %v3431, -inf
        %v3812 = vrot.slane %v3811, 4
        %v3813 = vmax.f32 %v3811, %v3812
        %v3814 = vrot.slane %v3813, 2
        %v3815 = vmax.f32 %v3813, %v3814
        %v3816 = vrot.slane %v3815, 1
        %v3817 = vmax.f32 %v3815, %v3816
        %v3818 = vsel %vm3550, %v3433, -inf
        %v3819 = vrot.slane %v3818, 4
        %v3820 = vmax.f32 %v3818, %v3819
        %v3821 = vrot.slane %v3820, 2
        %v3822 = vmax.f32 %v3820, %v3821
        %v3823 = vrot.slane %v3822, 1
        %v3824 = vmax.f32 %v3822, %v3823
        %v3825 = vsel %vm3550, %v3435, -inf
        %v3826 = vrot.slane %v3825, 4
        %v3827 = vmax.f32 %v3825, %v3826
        %v3828 = vrot.slane %v3827, 2
        %v3829 = vmax.f32 %v3827, %v3828
        %v3830 = vrot.slane %v3829, 1
        %v3831 = vmax.f32 %v3829, %v3830
        %v3832 = vsel %vm3607, %v3421, -inf
        %v3833 = vrot.slane %v3832, 4
        %v3834 = vmax.f32 %v3832, %v3833
        %v3835 = vrot.slane %v3834, 2
        %v3836 = vmax.f32 %v3834, %v3835
        %v3837 = vrot.slane %v3836, 1
        %v3838 = vmax.f32 %v3836, %v3837
        %v3839 = vsel %vm3607, %v3423, -inf
        %v3840 = vrot.slane %v3839, 4
        %v3841 = vmax.f32 %v3839, %v3840
        %v3842 = vrot.slane %v3841, 2
        %v3843 = vmax.f32 %v3841, %v3842
        %v3844 = vrot.slane %v3843, 1
        %v3845 = vmax.f32 %v3843, %v3844
        %v3846 = vsel %vm3607, %v3425, -inf
        %v3847 = vrot.slane %v3846, 4
        %v3848 = vmax.f32 %v3846, %v3847
        %v3849 = vrot.slane %v3848, 2
        %v3850 = vmax.f32 %v3848, %v3849
        %v3851 = vrot.slane %v3850, 1
        %v3852 = vmax.f32 %v3850, %v3851
        %v3853 = vsel %vm3607, %v3427, -inf
        %v3854 = vrot.slane %v3853, 4
        %v3855 = vmax.f32 %v3853, %v3854
        %v3856 = vrot.slane %v3855, 2
        %v3857 = vmax.f32 %v3855, %v3856
        %v3858 = vrot.slane %v3857, 1
        %v3859 = vmax.f32 %v3857, %v3858
        %v3860 = vsel %vm3607, %v3429, -inf
        %v3861 = vrot.slane %v3860, 4
        %v3862 = vmax.f32 %v3860, %v3861
        %v3863 = vrot.slane %v3862, 2
        %v3864 = vmax.f32 %v3862, %v3863
        %v3865 = vrot.slane %v3864, 1
        %v3866 = vmax.f32 %v3864, %v3865
        %v3867 = vsel %vm3607, %v3431, -inf
        %v3868 = vrot.slane %v3867, 4
        %v3869 = vmax.f32 %v3867, %v3868
        %v3870 = vrot.slane %v3869, 2
        %v3871 = vmax.f32 %v3869, %v3870
        %v3872 = vrot.slane %v3871, 1
        %v3873 = vmax.f32 %v3871, %v3872
        %v3874 = vsel %vm3607, %v3433, -inf
        %v3875 = vrot.slane %v3874, 4
        %v3876 = vmax.f32 %v3874, %v3875
        %v3877 = vrot.slane %v3876, 2
        %v3878 = vmax.f32 %v3876, %v3877
        %v3879 = vrot.slane %v3878, 1
        %v3880 = vmax.f32 %v3878, %v3879
        %v3881 = vsel %vm3607, %v3435, -inf
        %v3882 = vrot.slane %v3881, 4
        %v3883 = vmax.f32 %v3881, %v3882
        %v3884 = vrot.slane %v3883, 2
        %v3885 = vmax.f32 %v3883, %v3884
        %v3886 = vrot.slane %v3885, 1
        %v3887 = vmax.f32 %v3885, %v3886
        %v3888 = vsel %vm1797, %v3443, %v3500
        %v3889 = vsel %vm1797, %v3450, %v3507
        %v3890 = vsel %vm1797, %v3457, %v3514
        %v3891 = vsel %vm1797, %v3464, %v3521
        %v3892 = vsel %vm1797, %v3471, %v3528
        %v3893 = vsel %vm1797, %v3478, %v3535
        %v3894 = vsel %vm1797, %v3485, %v3542
        %v3895 = vsel %vm1797, %v3492, %v3549
        %v3896 = vsel %vm3436, %v3888, %v3557
        %v3897 = vsel %vm3436, %v3889, %v3564
        %v3898 = vsel %vm3436, %v3890, %v3571
        %v3899 = vsel %vm3436, %v3891, %v3578
        %v3900 = vsel %vm3436, %v3892, %v3585
        %v3901 = vsel %vm3436, %v3893, %v3592
        %v3902 = vsel %vm3436, %v3894, %v3599
        %v3903 = vsel %vm3436, %v3895, %v3606
        %vm3904 = vcmask 1042432
        %v3905 = vsel %vm3904, %v3896, %v3614
        %v3906 = vsel %vm3904, %v3897, %v3621
        %v3907 = vsel %vm3904, %v3898, %v3628
        %v3908 = vsel %vm3904, %v3899, %v3635
        %v3909 = vsel %vm3904, %v3900, %v3642
        %v3910 = vsel %vm3904, %v3901, %v3649
        %v3911 = vsel %vm3904, %v3902, %v3656
        %v3912 = vsel %vm3904, %v3903, %v3663
        %vm3913 = vcmask 1043456
        %v3914 = vsel %vm3913, %v3905, %v3670
        %v3915 = vsel %vm3913, %v3906, %v3677
        %v3916 = vsel %vm3913, %v3907, %v3684
        %v3917 = vsel %vm3913, %v3908, %v3691
        %v3918 = vsel %vm3913, %v3909, %v3698
        %v3919 = vsel %vm3913, %v3910, %v3705
        %v3920 = vsel %vm3913, %v3911, %v3712
        %v3921 = vsel %vm3913, %v3912, %v3719
        %vm3922 = vcmask 1044480
        %v3923 = vsel %vm3922, %v3914, %v3726
        %v3924 = vsel %vm3922, %v3915, %v3733
        %v3925 = vsel %vm3922, %v3916, %v3740
        %v3926 = vsel %vm3922, %v3917, %v3747
        %v3927 = vsel %vm3922, %v3918, %v3754
        %v3928 = vsel %vm3922, %v3919, %v3761
        %v3929 = vsel %vm3922, %v3920, %v3768
        %v3930 = vsel %vm3922, %v3921, %v3775
        %v3931 = vsel %vm2066, %v3923, %v3782
        %v3932 = vsel %vm2066, %v3924, %v3789
        %v3933 = vsel %vm2066, %v3925, %v3796
        %v3934 = vsel %vm2066, %v3926, %v3803
        %v3935 = vsel %vm2066, %v3927, %v3810
        %v3936 = vsel %vm2066, %v3928, %v3817
        %v3937 = vsel %vm2066, %v3929, %v3824
        %v3938 = vsel %vm2066, %v3930, %v3831
        %v3939 = vsel %vm1957, %v3931, %v3838
        %v3940 = vsel %vm1957, %v3932, %v3845
        %v3941 = vsel %vm1957, %v3933, %v3852
        %v3942 = vsel %vm1957, %v3934, %v3859
        %v3943 = vsel %vm1957, %v3935, %v3866
        %v3944 = vsel %vm1957, %v3936, %v3873
        %v3945 = vsel %vm1957, %v3937, %v3880
        %v3946 = vsel %vm1957, %v3938, %v3887
        %3947 = vst [vmem:[%s272] sm:$0xff] %v3939
        %3948 = vst [vmem:[%s272 + $0x8] sm:$0xff] %v3940
        %3949 = vst [vmem:[%s272 + $0x10] sm:$0xff] %v3941
        %3950 = vst [vmem:[%s272 + $0x18] sm:$0xff] %v3942
        %3951 = vst [vmem:[%s272 + $0x20] sm:$0xff] %v3943
        %3952 = vst [vmem:[%s272 + $0x28] sm:$0xff] %v3944
        %3953 = vst [vmem:[%s272 + $0x30] sm:$0xff] %v3945
        %3954 = vst [vmem:[%s272 + $0x38] sm:$0xff] %v3946
        %s3955 = sand.u32 %s143, 1
        %s3956 = scalar_lea.sflag [#allocation4], %s3955
        %s3957 = sand.u32 %s143, 1
        %s3958 = smul.addr %s3957, 256
        %s3959 = scalar_lea.vmem [#allocation5], %s3958
        %s3960 = sand.u32 %s169, 1
        %s3961 = scalar_lea.sflag [#allocation7], %s3960
        %s3962 = sand.u32 %s169, 1
        %s3963 = smul.addr %s3962, 64
        %s3964 = scalar_lea.vmem [#allocation6], %s3963
        // Predicated region
        $region45: #{tpu_custom_call.1} parent=39 // pred_check
          %p3965 = pneg %p153
        $region46: #{tpu_custom_call.1} parent=39 // pred_check_branch
          %3967 = sbr.rel (%p3965) target = $region48
        $region47: #{tpu_custom_call.1} parent=39 // pred_region
          %3969 = vsyncadd %s3956, 0
          %s3970 = smul.addr %s25, 32
          %s3971 = smul.addr %s3970, 8
          %s3972 = scalar_lea.hbm %s5, %s3971
          %s3973 = sshll.u32 %s3959, 4
          %s3974 = int_to_ptr.vmem [resolvable:$true] %s3973
          %s3975 = sshll.u32 %s3972, 4
          %s3976 = int_to_ptr.hbm [resolvable:$true] %s3975
          %3981 = dma.vmem_to_hbm [thread:$0]  %s3974, 4096, %s3976, %s3956, 128, 128, 8
        $region48: #{tpu_custom_call.1} parent=39 // pred_fallthru
          _
        // Predicated region
        $region49: #{tpu_custom_call.1} parent=39 // pred_check
          %p3982 = pneg %p179
        $region50: #{tpu_custom_call.1} parent=39 // pred_check_branch
          %3984 = sbr.rel (%p3982) target = $region52
        $region51: #{tpu_custom_call.1} parent=39 // pred_region
          %3986 = vsyncadd %s3961, 0
          %s3987 = smul.addr %s25, 8
          %s3988 = smul.addr %s3987, 8
          %s3989 = scalar_lea.hbm %s6, %s3988
          %s3990 = sshll.u32 %s3964, 4
          %s3991 = int_to_ptr.vmem [resolvable:$true] %s3990
          %s3992 = sshll.u32 %s3989, 4
          %s3993 = int_to_ptr.hbm [resolvable:$true] %s3992
          %3998 = dma.vmem_to_hbm [thread:$0]  %s3991, 1024, %s3993, %s3961, 128, 128, 8
        $region52: #{tpu_custom_call.1} parent=39 // pred_fallthru
          _
      $region40: #{tpu_custom_call.1} parent=5 // pred_fallthru
        _
      %p3999 = scmp.le.s32.totalorder 2, %s20
      // Predicated region
      $region53: #{tpu_custom_call.1} parent=5 // pred_check
        %p4000 = pneg %p3999
      $region54: #{tpu_custom_call.1} parent=5 // pred_check_branch
        %4002 = sbr.rel (%p4000) target = $region56
      $region55: #{tpu_custom_call.1} parent=5 // pred_region
        %s4003 = ssub.s32 %s20, 2
        // Predicated region
        $region57: #{tpu_custom_call.1} parent=55 // pred_check
          %p4004 = pneg %p159
        $region58: #{tpu_custom_call.1} parent=55 // pred_check_branch
          %4006 = sbr.rel (%p4004) target = $region60
        $region59: #{tpu_custom_call.1} parent=55 // pred_region
          %s4007 = sand.u32 %s144, 1
          %s4008 = scalar_lea.sflag [#allocation4], %s4007
          %s4009 = sand.u32 %s144, 1
          %s4010 = smul.addr %s4009, 256
          %s4011 = scalar_lea.vmem [#allocation5], %s4010
          %4013 = dma.done %s4008, 4096
        $region60: #{tpu_custom_call.1} parent=55 // pred_fallthru
          _
        // Predicated region
        $region61: #{tpu_custom_call.1} parent=55 // pred_check
          %p4014 = pneg %p185
        $region62: #{tpu_custom_call.1} parent=55 // pred_check_branch
          %4016 = sbr.rel (%p4014) target = $region64
        $region63: #{tpu_custom_call.1} parent=55 // pred_region
          %s4017 = sand.u32 %s170, 1
          %s4018 = scalar_lea.sflag [#allocation7], %s4017
          %s4019 = sand.u32 %s170, 1
          %s4020 = smul.addr %s4019, 64
          %s4021 = scalar_lea.vmem [#allocation6], %s4020
          %4023 = dma.done %s4018, 1024
        $region64: #{tpu_custom_call.1} parent=55 // pred_fallthru
          _
      $region56: #{tpu_custom_call.1} parent=5 // pred_fallthru
        _
    $region6: #{tpu_custom_call.1} parent=1 // loop_footer
      %s24 = sadd.s32 1, %s20
    $region7: #{tpu_custom_call.1} parent=1 // loop_footer_branch
      %19 = sbr.rel target = $region3
    $region8: #{tpu_custom_call.1} parent=1 // loop_exit
      _
    %4024 = vsyncpa [#allocation3], 1
    %s4025 = scalar_lea.sflag [#allocation3], 1
    %4026 = vsyncpa %s4025, 1
    %4027 = vsyncpa [#allocation4], 1
    %s4028 = scalar_lea.sflag [#allocation4], 1
    %4029 = vsyncpa %s4028, 1
    %4030 = vsyncpa [#allocation7], 1
    %s4031 = scalar_lea.sflag [#allocation7], 1
    %4032 = vsyncpa %s4031, 1

</llo_original>
